<compile_context>
chip_gen: v7x
topology: tpu7x:2x2x1
jax: 0.10.0
libtpu: 0.0.40
codegen_flags: <defaults>
</compile_context>

<pallas_src>
import math

import jax
import jax.numpy as jnp
from jax import lax
from jax.experimental import pallas as pl
from jax.experimental.pallas import tpu as pltpu


# ----------------------------- kernel ---------------------------------------


def _layernorm(x, g, b, eps=1e-5):
    mu = jnp.mean(x, axis=-1, keepdims=True)
    var = jnp.mean((x - mu) ** 2, axis=-1, keepdims=True)
    return (x - mu) * lax.rsqrt(var + eps) * g + b


def transformer_dc_kernel(
    xcon_ref, idx_ref, emb_ref,
    wcon_ref, bcon_ref,
    wqkv_ref, bqkv_ref, wo_ref, bo_ref,
    ln1g_ref, ln1b_ref, ln2g_ref, ln2b_ref,
    w1_ref, b1_ref, w2_ref, b2_ref,
    wfc_ref, bfc_ref,
    out_ref,
):
    TB = xcon_ref.shape[0]          # batch tile
    V, D = emb_ref.shape            # embedding table (n_cat * vocab, D)
    TBS = idx_ref.shape[0]          # TB * S
    S = TBS // TB
    scale = 1.0 / math.sqrt(D)

    # ---- continuous-feature token: (TB, n_con) @ (n_con, D) -> (TB, D) ----
    con_tok = (
        jnp.dot(xcon_ref[...], wcon_ref[...], preferred_element_type=jnp.float32)
        + bcon_ref[...]
    )

    # ---- categorical embedding lookup in-kernel as a one-hot matmul ----
    # idx_ref holds one table index per (sample, seq-pos); the continuous-token
    # slot carries a -1 sentinel, so its one-hot row (and embedding) is zero.
    iota = lax.broadcasted_iota(jnp.int32, (TBS, V), 1)
    onehot = (iota == idx_ref[...]).astype(jnp.float32)              # (TB*S, V)
    emb_tok = jnp.dot(onehot, emb_ref[...],
                      preferred_element_type=jnp.float32)            # (TB*S, D)

    # ---- assemble token sequence without a concat: elementwise select ----
    pos = lax.broadcasted_iota(jnp.int32, (TB, S, D), 1)
    tokens3 = jnp.where(pos == 0, con_tok[:, None, :], emb_tok.reshape(TB, S, D))
    tokens = tokens3.reshape(TBS, D)                                 # flat (TB*S, D)

    # ---- qkv projection: one flat 2-D matmul on the MXU ----
    qkv = (
        jnp.dot(tokens, wqkv_ref[...], preferred_element_type=jnp.float32)
        + bqkv_ref[...]
    )                                                                # (TB*S, 3D)
    q = qkv[:, :D].reshape(TB, S, D)
    k = qkv[:, D:2 * D].reshape(TB, S, D)
    v = qkv[:, 2 * D:].reshape(TB, S, D)

    # ---- single-head attention on the VPU (S=8, D=16: far too small for MXU) ----
    scores = jnp.sum(q[:, :, None, :] * k[:, None, :, :], axis=-1) * scale  # (TB,S,S)
    scores = scores - jnp.max(scores, axis=-1, keepdims=True)
    p = jnp.exp(scores)
    p = p * pl.reciprocal(jnp.sum(p, axis=-1, keepdims=True), approx=True)
    ctx = jnp.sum(p[:, :, :, None] * v[:, None, :, :], axis=2)              # (TB,S,D)

    attn = (
        jnp.dot(ctx.reshape(TBS, D), wo_ref[...],
                preferred_element_type=jnp.float32)
        + bo_ref[...]
    )

    x = _layernorm(tokens + attn, ln1g_ref[...], ln1b_ref[...])

    # ---- feed-forward: flat 2-D matmuls ----
    h = jnp.maximum(
        jnp.dot(x, w1_ref[...], preferred_element_type=jnp.float32) + b1_ref[...],
        0.0,
    )
    ff = jnp.dot(h, w2_ref[...], preferred_element_type=jnp.float32) + b2_ref[...]
    x = _layernorm(x + ff, ln2g_ref[...], ln2b_ref[...])

    # ---- mean pool over S (constant multiply) + fc head -> (TB, num_classes) ----
    pooled = jnp.sum(x.reshape(TB, S, D), axis=1) * (1.0 / S)
    out_ref[...] = (
        jnp.dot(pooled, wfc_ref[...], preferred_element_type=jnp.float32)
        + bfc_ref[...]
    )


# ----------------------------- wrapper ---------------------------------------


def make_params(key, *, n_con, n_cat, vocab, d, h, num_classes):
    ks = jax.random.split(key, 10)
    s = 0.1
    return {
        "emb_table": s * jax.random.normal(ks[0], (n_cat * vocab, d), jnp.float32),
        "cat_offsets": (jnp.arange(n_cat, dtype=jnp.int32) * vocab),
        "wcon": s * jax.random.normal(ks[1], (n_con, d), jnp.float32),
        "bcon": jnp.zeros((1, d), jnp.float32),
        "wqkv": s * jax.random.normal(ks[2], (d, 3 * d), jnp.float32),
        "bqkv": jnp.zeros((1, 3 * d), jnp.float32),
        "wo": s * jax.random.normal(ks[3], (d, d), jnp.float32),
        "bo": jnp.zeros((1, d), jnp.float32),
        "ln1g": jnp.ones((1, d), jnp.float32),
        "ln1b": jnp.zeros((1, d), jnp.float32),
        "ln2g": jnp.ones((1, d), jnp.float32),
        "ln2b": jnp.zeros((1, d), jnp.float32),
        "w1": s * jax.random.normal(ks[4], (d, h), jnp.float32),
        "b1": jnp.zeros((1, h), jnp.float32),
        "w2": s * jax.random.normal(ks[5], (h, d), jnp.float32),
        "b2": jnp.zeros((1, d), jnp.float32),
        "wfc": s * jax.random.normal(ks[6], (d, num_classes), jnp.float32),
        "bfc": jnp.zeros((1, num_classes), jnp.float32),
    }


def transformer_dc_forward(x_con, x_cat, params, *, num_classes=2, tile_b=8):
    B, n_con = x_con.shape
    _, n_cat = x_cat.shape
    S = n_cat + 1
    assert B % tile_b == 0, "pad the batch to a multiple of tile_b"
    # NOTE: at production batch sizes keep tile_b modest enough for v7x's 64 MiB
    # VMEM (or raise pltpu.CompilerParams(vmem_limit_bytes=...)); per-sample
    # footprint here is only a few KB, so tile_b can grow into the thousands.

    # glue: trivial index arithmetic only — the embedding lookup itself happens
    # inside the kernel.  Slot 0 (continuous token) gets a -1 sentinel so its
    # one-hot row is all-zero.
    idx = x_cat.astype(jnp.int32) + params["cat_offsets"][None, :]
    idx_full = jnp.concatenate(
        [jnp.full((B, 1), -1, dtype=jnp.int32), idx], axis=1
    ).reshape(B * S, 1)

    weights = [
        params["emb_table"],
        params["wcon"], params["bcon"],
        params["wqkv"], params["bqkv"], params["wo"], params["bo"],
        params["ln1g"], params["ln1b"], params["ln2g"], params["ln2b"],
        params["w1"], params["b1"], params["w2"], params["b2"],
        params["wfc"], params["bfc"],
    ]

    in_specs = [
        pl.BlockSpec((tile_b, n_con), lambda i: (i, 0)),       # x_con: batch-tiled
        pl.BlockSpec((tile_b * S, 1), lambda i: (i, 0)),       # indices: batch-tiled
    ] + [
        pl.BlockSpec(w.shape, lambda i, nd=w.ndim: (0,) * nd)  # weights: VMEM-resident
        for w in weights
    ]
    out_spec = pl.BlockSpec((tile_b, num_classes), lambda i: (i, 0))

    return pl.pallas_call(
        transformer_dc_kernel,
        out_shape=jax.ShapeDtypeStruct((B, num_classes), jnp.float32),
        grid=(B // tile_b,),
        in_specs=in_specs,
        out_specs=out_spec,
        compiler_params=pltpu.CompilerParams(
            dimension_semantics=("parallel",),   # shard batch tiles across TCs (v7x)
        ),
    )(x_con.astype(jnp.float32), idx_full, *weights)


# ----------------------------- main ------------------------------------------

if __name__ == "__main__":
    # small Census-like shapes
    B, N_CON, N_CAT, VOCAB = 16, 6, 7, 10
    D, H, NUM_CLASSES = 16, 32, 2           # embedding_dim=16, fc -> 2 classes
    TILE_B = 8                              # grid = (B // TILE_B,) = (2,)

    key = jax.random.PRNGKey(0)
    k_par, k_con, k_cat = jax.random.split(key, 3)

    params = make_params(
        k_par, n_con=N_CON, n_cat=N_CAT, vocab=VOCAB, d=D, h=H,
        num_classes=NUM_CLASSES,
    )
    x_con = jax.random.normal(k_con, (B, N_CON), jnp.float32)
    x_cat = jax.random.randint(k_cat, (B, N_CAT), 0, VOCAB, dtype=jnp.int32)

    out = transformer_dc_forward(
        x_con, x_cat, params, num_classes=NUM_CLASSES, tile_b=TILE_B
    )
    out = jax.block_until_ready(out)
    assert out.shape == (B, NUM_CLASSES) and out.dtype == jnp.float32
    assert bool(jnp.all(jnp.isfinite(out)))
    print("KERNEL_OK")
</pallas_src>

<mosaic_0001>
module attributes {stable_mosaic.version = 11 : i64} {
  func.func @transformer_dc_kernel(%arg0: i32, %arg1: memref<8x6xf32, #tpu.memory_space<vmem>>, %arg2: memref<64x1xi32, #tpu.memory_space<vmem>>, %arg3: memref<70x16xf32, #tpu.memory_space<vmem>>, %arg4: memref<6x16xf32, #tpu.memory_space<vmem>>, %arg5: memref<1x16xf32, #tpu.memory_space<vmem>>, %arg6: memref<16x48xf32, #tpu.memory_space<vmem>>, %arg7: memref<1x48xf32, #tpu.memory_space<vmem>>, %arg8: memref<16x16xf32, #tpu.memory_space<vmem>>, %arg9: memref<1x16xf32, #tpu.memory_space<vmem>>, %arg10: memref<1x16xf32, #tpu.memory_space<vmem>>, %arg11: memref<1x16xf32, #tpu.memory_space<vmem>>, %arg12: memref<1x16xf32, #tpu.memory_space<vmem>>, %arg13: memref<1x16xf32, #tpu.memory_space<vmem>>, %arg14: memref<16x32xf32, #tpu.memory_space<vmem>>, %arg15: memref<1x32xf32, #tpu.memory_space<vmem>>, %arg16: memref<32x16xf32, #tpu.memory_space<vmem>>, %arg17: memref<1x16xf32, #tpu.memory_space<vmem>>, %arg18: memref<16x2xf32, #tpu.memory_space<vmem>>, %arg19: memref<1x2xf32, #tpu.memory_space<vmem>>, %arg20: memref<8x2xf32, #tpu.memory_space<vmem>>) attributes {dimension_semantics = [#tpu.dimension_semantics<parallel>], iteration_bounds = array<i64: 2>, scalar_prefetch = 0 : i64, scratch_operands = 0 : i64, tpu.core_type = #tpu.core_type<tc>, window_params = [{transform_indices = @transform_0, window_bounds = array<i64: 8, 6>}, {transform_indices = @transform_1, window_bounds = array<i64: 64, 1>}, {pipeline_mode = #tpu.pipeline_mode<synchronous>, transform_indices = @transform_2, window_bounds = array<i64: 70, 16>}, {pipeline_mode = #tpu.pipeline_mode<synchronous>, transform_indices = @transform_3, window_bounds = array<i64: 6, 16>}, {pipeline_mode = #tpu.pipeline_mode<synchronous>, transform_indices = @transform_4, window_bounds = array<i64: 1, 16>}, {pipeline_mode = #tpu.pipeline_mode<synchronous>, transform_indices = @transform_5, window_bounds = array<i64: 16, 48>}, {pipeline_mode = #tpu.pipeline_mode<synchronous>, transform_indices = @transform_6, window_bounds = array<i64: 1, 48>}, {pipeline_mode = #tpu.pipeline_mode<synchronous>, transform_indices = @transform_7, window_bounds = array<i64: 16, 16>}, {pipeline_mode = #tpu.pipeline_mode<synchronous>, transform_indices = @transform_8, window_bounds = array<i64: 1, 16>}, {pipeline_mode = #tpu.pipeline_mode<synchronous>, transform_indices = @transform_9, window_bounds = array<i64: 1, 16>}, {pipeline_mode = #tpu.pipeline_mode<synchronous>, transform_indices = @transform_10, window_bounds = array<i64: 1, 16>}, {pipeline_mode = #tpu.pipeline_mode<synchronous>, transform_indices = @transform_11, window_bounds = array<i64: 1, 16>}, {pipeline_mode = #tpu.pipeline_mode<synchronous>, transform_indices = @transform_12, window_bounds = array<i64: 1, 16>}, {pipeline_mode = #tpu.pipeline_mode<synchronous>, transform_indices = @transform_13, window_bounds = array<i64: 16, 32>}, {pipeline_mode = #tpu.pipeline_mode<synchronous>, transform_indices = @transform_14, window_bounds = array<i64: 1, 32>}, {pipeline_mode = #tpu.pipeline_mode<synchronous>, transform_indices = @transform_15, window_bounds = array<i64: 32, 16>}, {pipeline_mode = #tpu.pipeline_mode<synchronous>, transform_indices = @transform_16, window_bounds = array<i64: 1, 16>}, {pipeline_mode = #tpu.pipeline_mode<synchronous>, transform_indices = @transform_17, window_bounds = array<i64: 16, 2>}, {pipeline_mode = #tpu.pipeline_mode<synchronous>, transform_indices = @transform_18, window_bounds = array<i64: 1, 2>}, {transform_indices = @transform_19, window_bounds = array<i64: 8, 2>}]} {
    %c0 = arith.constant 0 : index
    %c0_0 = arith.constant 0 : index
    %0 = vector.load %arg1[%c0, %c0_0] : memref<8x6xf32, #tpu.memory_space<vmem>>, vector<8x6xf32>
    %c0_1 = arith.constant 0 : index
    %c0_2 = arith.constant 0 : index
    %1 = vector.load %arg4[%c0_1, %c0_2] : memref<6x16xf32, #tpu.memory_space<vmem>>, vector<6x16xf32>
    %cst = arith.constant dense<0.000000e+00> : vector<8x16xf32>
    %2 = tpu.matmul %0, %1, %cst {dimension_numbers = #tpu.dot_dimension_numbers<[1], [0], [0], [1], [0, 0, 1, 1], [], []>} : vector<8x6xf32>, vector<6x16xf32>, vector<8x16xf32> -> vector<8x16xf32>
    %c0_3 = arith.constant 0 : index
    %c0_4 = arith.constant 0 : index
    %3 = vector.load %arg5[%c0_3, %c0_4] : memref<1x16xf32, #tpu.memory_space<vmem>>, vector<1x16xf32>
    %4 = vector.broadcast %3 : vector<1x16xf32> to vector<8x16xf32>
    %5 = arith.addf %2, %4 : vector<8x16xf32>
    %6 = tpu.iota {dimensions = array<i32: 1>} : vector<64x70xi32>
    %c0_5 = arith.constant 0 : index
    %c0_6 = arith.constant 0 : index
    %7 = vector.load %arg2[%c0_5, %c0_6] : memref<64x1xi32, #tpu.memory_space<vmem>>, vector<64x1xi32>
    %8 = vector.broadcast %7 : vector<64x1xi32> to vector<64x70xi32>
    %9 = arith.cmpi eq, %6, %8 : vector<64x70xi32>
    %10 = arith.extui %9 : vector<64x70xi1> to vector<64x70xi32>
    %11 = arith.sitofp %10 : vector<64x70xi32> to vector<64x70xf32>
    %c0_7 = arith.constant 0 : index
    %c0_8 = arith.constant 0 : index
    %12 = vector.load %arg3[%c0_7, %c0_8] : memref<70x16xf32, #tpu.memory_space<vmem>>, vector<70x16xf32>
    %cst_9 = arith.constant dense<0.000000e+00> : vector<64x16xf32>
    %13 = tpu.matmul %11, %12, %cst_9 {dimension_numbers = #tpu.dot_dimension_numbers<[1], [0], [0], [1], [0, 0, 1, 1], [], []>} : vector<64x70xf32>, vector<70x16xf32>, vector<64x16xf32> -> vector<64x16xf32>
    %14 = tpu.iota {dimensions = array<i32: 1>} : vector<8x8x16xi32>
    %c0_i32 = arith.constant 0 : i32
    %15 = vector.broadcast %c0_i32 : i32 to vector<8x8x16xi32>
    %16 = arith.cmpi eq, %14, %15 : vector<8x8x16xi32>
    %17 = vector.shape_cast %5 : vector<8x16xf32> to vector<8x1x16xf32>
    %18 = vector.shape_cast %13 : vector<64x16xf32> to vector<8x8x16xf32>
    %19 = vector.shape_cast %17 : vector<8x1x16xf32> to vector<8x1x16xf32>
    %20 = vector.broadcast %19 : vector<8x1x16xf32> to vector<8x8x16xf32>
    %21 = arith.select %16, %20, %18 : vector<8x8x16xi1>, vector<8x8x16xf32>
    %22 = vector.shape_cast %21 : vector<8x8x16xf32> to vector<64x16xf32>
    %c0_10 = arith.constant 0 : index
    %c0_11 = arith.constant 0 : index
    %23 = vector.load %arg6[%c0_10, %c0_11] : memref<16x48xf32, #tpu.memory_space<vmem>>, vector<16x48xf32>
    %cst_12 = arith.constant dense<0.000000e+00> : vector<64x48xf32>
    %24 = tpu.matmul %22, %23, %cst_12 {dimension_numbers = #tpu.dot_dimension_numbers<[1], [0], [0], [1], [0, 0, 1, 1], [], []>} : vector<64x16xf32>, vector<16x48xf32>, vector<64x48xf32> -> vector<64x48xf32>
    %c0_13 = arith.constant 0 : index
    %c0_14 = arith.constant 0 : index
    %25 = vector.load %arg7[%c0_13, %c0_14] : memref<1x48xf32, #tpu.memory_space<vmem>>, vector<1x48xf32>
    %26 = vector.broadcast %25 : vector<1x48xf32> to vector<64x48xf32>
    %27 = arith.addf %24, %26 : vector<64x48xf32>
    %28 = vector.extract_strided_slice %27 {offsets = [0, 0], sizes = [64, 16], strides = [1, 1]} : vector<64x48xf32> to vector<64x16xf32>
    %29 = vector.shape_cast %28 : vector<64x16xf32> to vector<8x8x16xf32>
    %30 = vector.extract_strided_slice %27 {offsets = [0, 16], sizes = [64, 16], strides = [1, 1]} : vector<64x48xf32> to vector<64x16xf32>
    %31 = vector.shape_cast %30 : vector<64x16xf32> to vector<8x8x16xf32>
    %32 = vector.extract_strided_slice %27 {offsets = [0, 32], sizes = [64, 16], strides = [1, 1]} : vector<64x48xf32> to vector<64x16xf32>
    %33 = vector.shape_cast %32 : vector<64x16xf32> to vector<8x8x16xf32>
    %34 = vector.shape_cast %29 : vector<8x8x16xf32> to vector<8x8x1x16xf32>
    %35 = vector.shape_cast %31 : vector<8x8x16xf32> to vector<8x1x8x16xf32>
    %36 = vector.broadcast %34 : vector<8x8x1x16xf32> to vector<8x8x8x16xf32>
    %37 = vector.broadcast %35 : vector<8x1x8x16xf32> to vector<8x8x8x16xf32>
    %38 = arith.mulf %36, %37 : vector<8x8x8x16xf32>
    %cst_15 = arith.constant dense<0.000000e+00> : vector<8x8x8xf32>
    %39 = vector.multi_reduction <add>, %38, %cst_15 [3] : vector<8x8x8x16xf32> to vector<8x8x8xf32>
    %cst_16 = arith.constant 2.500000e-01 : f32
    %40 = vector.broadcast %cst_16 : f32 to vector<8x8x8xf32>
    %41 = arith.mulf %39, %40 : vector<8x8x8xf32>
    %cst_17 = arith.constant dense<0xFF800000> : vector<8x8xf32>
    %42 = vector.multi_reduction <maximumf>, %41, %cst_17 [2] : vector<8x8x8xf32> to vector<8x8xf32>
    %43 = vector.shape_cast %42 : vector<8x8xf32> to vector<8x8x1xf32>
    %44 = vector.broadcast %43 : vector<8x8x1xf32> to vector<8x8x8xf32>
    %45 = arith.subf %41, %44 : vector<8x8x8xf32>
    %46 = math.exp %45 : vector<8x8x8xf32>
    %cst_18 = arith.constant dense<0.000000e+00> : vector<8x8xf32>
    %47 = vector.multi_reduction <add>, %46, %cst_18 [2] : vector<8x8x8xf32> to vector<8x8xf32>
    %48 = vector.shape_cast %47 : vector<8x8xf32> to vector<8x8x1xf32>
    %49 = tpu.reciprocal %48 {approx = true} : vector<8x8x1xf32> -> vector<8x8x1xf32>
    %50 = vector.broadcast %49 : vector<8x8x1xf32> to vector<8x8x8xf32>
    %51 = arith.mulf %46, %50 : vector<8x8x8xf32>
    %52 = vector.shape_cast %51 : vector<8x8x8xf32> to vector<8x8x8x1xf32>
    %53 = vector.shape_cast %33 : vector<8x8x16xf32> to vector<8x1x8x16xf32>
    %54 = vector.broadcast %52 : vector<8x8x8x1xf32> to vector<8x8x8x16xf32>
    %55 = vector.broadcast %53 : vector<8x1x8x16xf32> to vector<8x8x8x16xf32>
    %56 = arith.mulf %54, %55 : vector<8x8x8x16xf32>
    %cst_19 = arith.constant dense<0.000000e+00> : vector<8x8x16xf32>
    %57 = vector.multi_reduction <add>, %56, %cst_19 [2] : vector<8x8x8x16xf32> to vector<8x8x16xf32>
    %58 = vector.shape_cast %57 : vector<8x8x16xf32> to vector<64x16xf32>
    %c0_20 = arith.constant 0 : index
    %c0_21 = arith.constant 0 : index
    %59 = vector.load %arg8[%c0_20, %c0_21] : memref<16x16xf32, #tpu.memory_space<vmem>>, vector<16x16xf32>
    %cst_22 = arith.constant dense<0.000000e+00> : vector<64x16xf32>
    %60 = tpu.matmul %58, %59, %cst_22 {dimension_numbers = #tpu.dot_dimension_numbers<[1], [0], [0], [1], [0, 0, 1, 1], [], []>} : vector<64x16xf32>, vector<16x16xf32>, vector<64x16xf32> -> vector<64x16xf32>
    %c0_23 = arith.constant 0 : index
    %c0_24 = arith.constant 0 : index
    %61 = vector.load %arg9[%c0_23, %c0_24] : memref<1x16xf32, #tpu.memory_space<vmem>>, vector<1x16xf32>
    %62 = vector.broadcast %61 : vector<1x16xf32> to vector<64x16xf32>
    %63 = arith.addf %60, %62 : vector<64x16xf32>
    %64 = arith.addf %22, %63 : vector<64x16xf32>
    %c0_25 = arith.constant 0 : index
    %c0_26 = arith.constant 0 : index
    %65 = vector.load %arg10[%c0_25, %c0_26] : memref<1x16xf32, #tpu.memory_space<vmem>>, vector<1x16xf32>
    %c0_27 = arith.constant 0 : index
    %c0_28 = arith.constant 0 : index
    %66 = vector.load %arg11[%c0_27, %c0_28] : memref<1x16xf32, #tpu.memory_space<vmem>>, vector<1x16xf32>
    %cst_29 = arith.constant dense<0.000000e+00> : vector<64xf32>
    %67 = vector.multi_reduction <add>, %64, %cst_29 [1] : vector<64x16xf32> to vector<64xf32>
    %68 = vector.shape_cast %67 : vector<64xf32> to vector<64x1xf32>
    %cst_30 = arith.constant 1.600000e+01 : f32
    %69 = vector.broadcast %cst_30 : f32 to vector<64x1xf32>
    %70 = arith.divf %68, %69 : vector<64x1xf32>
    %71 = vector.broadcast %70 : vector<64x1xf32> to vector<64x16xf32>
    %72 = arith.subf %64, %71 : vector<64x16xf32>
    %73 = arith.mulf %72, %72 : vector<64x16xf32>
    %cst_31 = arith.constant dense<0.000000e+00> : vector<64xf32>
    %74 = vector.multi_reduction <add>, %73, %cst_31 [1] : vector<64x16xf32> to vector<64xf32>
    %75 = vector.shape_cast %74 : vector<64xf32> to vector<64x1xf32>
    %cst_32 = arith.constant 1.600000e+01 : f32
    %76 = vector.broadcast %cst_32 : f32 to vector<64x1xf32>
    %77 = arith.divf %75, %76 : vector<64x1xf32>
    %78 = vector.broadcast %70 : vector<64x1xf32> to vector<64x16xf32>
    %79 = arith.subf %64, %78 : vector<64x16xf32>
    %cst_33 = arith.constant 9.99999974E-6 : f32
    %80 = vector.broadcast %cst_33 : f32 to vector<64x1xf32>
    %81 = arith.addf %77, %80 : vector<64x1xf32>
    %82 = math.rsqrt %81 : vector<64x1xf32>
    %83 = vector.broadcast %82 : vector<64x1xf32> to vector<64x16xf32>
    %84 = arith.mulf %79, %83 : vector<64x16xf32>
    %85 = vector.broadcast %65 : vector<1x16xf32> to vector<64x16xf32>
    %86 = arith.mulf %84, %85 : vector<64x16xf32>
    %87 = vector.broadcast %66 : vector<1x16xf32> to vector<64x16xf32>
    %88 = arith.addf %86, %87 : vector<64x16xf32>
    %c0_34 = arith.constant 0 : index
    %c0_35 = arith.constant 0 : index
    %89 = vector.load %arg14[%c0_34, %c0_35] : memref<16x32xf32, #tpu.memory_space<vmem>>, vector<16x32xf32>
    %cst_36 = arith.constant dense<0.000000e+00> : vector<64x32xf32>
    %90 = tpu.matmul %88, %89, %cst_36 {dimension_numbers = #tpu.dot_dimension_numbers<[1], [0], [0], [1], [0, 0, 1, 1], [], []>} : vector<64x16xf32>, vector<16x32xf32>, vector<64x32xf32> -> vector<64x32xf32>
    %c0_37 = arith.constant 0 : index
    %c0_38 = arith.constant 0 : index
    %91 = vector.load %arg15[%c0_37, %c0_38] : memref<1x32xf32, #tpu.memory_space<vmem>>, vector<1x32xf32>
    %92 = vector.broadcast %91 : vector<1x32xf32> to vector<64x32xf32>
    %93 = arith.addf %90, %92 : vector<64x32xf32>
    %cst_39 = arith.constant 0.000000e+00 : f32
    %94 = vector.broadcast %cst_39 : f32 to vector<64x32xf32>
    %95 = arith.maximumf %93, %94 : vector<64x32xf32>
    %c0_40 = arith.constant 0 : index
    %c0_41 = arith.constant 0 : index
    %96 = vector.load %arg16[%c0_40, %c0_41] : memref<32x16xf32, #tpu.memory_space<vmem>>, vector<32x16xf32>
    %cst_42 = arith.constant dense<0.000000e+00> : vector<64x16xf32>
    %97 = tpu.matmul %95, %96, %cst_42 {dimension_numbers = #tpu.dot_dimension_numbers<[1], [0], [0], [1], [0, 0, 1, 1], [], []>} : vector<64x32xf32>, vector<32x16xf32>, vector<64x16xf32> -> vector<64x16xf32>
    %c0_43 = arith.constant 0 : index
    %c0_44 = arith.constant 0 : index
    %98 = vector.load %arg17[%c0_43, %c0_44] : memref<1x16xf32, #tpu.memory_space<vmem>>, vector<1x16xf32>
    %99 = vector.broadcast %98 : vector<1x16xf32> to vector<64x16xf32>
    %100 = arith.addf %97, %99 : vector<64x16xf32>
    %101 = arith.addf %88, %100 : vector<64x16xf32>
    %c0_45 = arith.constant 0 : index
    %c0_46 = arith.constant 0 : index
    %102 = vector.load %arg12[%c0_45, %c0_46] : memref<1x16xf32, #tpu.memory_space<vmem>>, vector<1x16xf32>
    %c0_47 = arith.constant 0 : index
    %c0_48 = arith.constant 0 : index
    %103 = vector.load %arg13[%c0_47, %c0_48] : memref<1x16xf32, #tpu.memory_space<vmem>>, vector<1x16xf32>
    %cst_49 = arith.constant dense<0.000000e+00> : vector<64xf32>
    %104 = vector.multi_reduction <add>, %101, %cst_49 [1] : vector<64x16xf32> to vector<64xf32>
    %105 = vector.shape_cast %104 : vector<64xf32> to vector<64x1xf32>
    %cst_50 = arith.constant 1.600000e+01 : f32
    %106 = vector.broadcast %cst_50 : f32 to vector<64x1xf32>
    %107 = arith.divf %105, %106 : vector<64x1xf32>
    %108 = vector.broadcast %107 : vector<64x1xf32> to vector<64x16xf32>
    %109 = arith.subf %101, %108 : vector<64x16xf32>
    %110 = arith.mulf %109, %109 : vector<64x16xf32>
    %cst_51 = arith.constant dense<0.000000e+00> : vector<64xf32>
    %111 = vector.multi_reduction <add>, %110, %cst_51 [1] : vector<64x16xf32> to vector<64xf32>
    %112 = vector.shape_cast %111 : vector<64xf32> to vector<64x1xf32>
    %cst_52 = arith.constant 1.600000e+01 : f32
    %113 = vector.broadcast %cst_52 : f32 to vector<64x1xf32>
    %114 = arith.divf %112, %113 : vector<64x1xf32>
    %115 = vector.broadcast %107 : vector<64x1xf32> to vector<64x16xf32>
    %116 = arith.subf %101, %115 : vector<64x16xf32>
    %cst_53 = arith.constant 9.99999974E-6 : f32
    %117 = vector.broadcast %cst_53 : f32 to vector<64x1xf32>
    %118 = arith.addf %114, %117 : vector<64x1xf32>
    %119 = math.rsqrt %118 : vector<64x1xf32>
    %120 = vector.broadcast %119 : vector<64x1xf32> to vector<64x16xf32>
    %121 = arith.mulf %116, %120 : vector<64x16xf32>
    %122 = vector.broadcast %102 : vector<1x16xf32> to vector<64x16xf32>
    %123 = arith.mulf %121, %122 : vector<64x16xf32>
    %124 = vector.broadcast %103 : vector<1x16xf32> to vector<64x16xf32>
    %125 = arith.addf %123, %124 : vector<64x16xf32>
    %126 = vector.shape_cast %125 : vector<64x16xf32> to vector<8x8x16xf32>
    %cst_54 = arith.constant dense<0.000000e+00> : vector<8x16xf32>
    %127 = vector.multi_reduction <add>, %126, %cst_54 [1] : vector<8x8x16xf32> to vector<8x16xf32>
    %cst_55 = arith.constant 1.250000e-01 : f32
    %128 = vector.broadcast %cst_55 : f32 to vector<8x16xf32>
    %129 = arith.mulf %127, %128 : vector<8x16xf32>
    %c0_56 = arith.constant 0 : index
    %c0_57 = arith.constant 0 : index
    %130 = vector.load %arg18[%c0_56, %c0_57] : memref<16x2xf32, #tpu.memory_space<vmem>>, vector<16x2xf32>
    %cst_58 = arith.constant dense<0.000000e+00> : vector<8x2xf32>
    %131 = tpu.matmul %129, %130, %cst_58 {dimension_numbers = #tpu.dot_dimension_numbers<[1], [0], [0], [1], [0, 0, 1, 1], [], []>} : vector<8x16xf32>, vector<16x2xf32>, vector<8x2xf32> -> vector<8x2xf32>
    %c0_59 = arith.constant 0 : index
    %c0_60 = arith.constant 0 : index
    %132 = vector.load %arg19[%c0_59, %c0_60] : memref<1x2xf32, #tpu.memory_space<vmem>>, vector<1x2xf32>
    %133 = vector.broadcast %132 : vector<1x2xf32> to vector<8x2xf32>
    %134 = arith.addf %131, %133 : vector<8x2xf32>
    %c0_61 = arith.constant 0 : index
    %c0_62 = arith.constant 0 : index
    %135 = vector.load %arg20[%c0_61, %c0_62] : memref<8x2xf32, #tpu.memory_space<vmem>>, vector<8x2xf32>
    tpu.vector_store %arg20[%c0_61, %c0_62], %134 {strides = array<i32>} : memref<8x2xf32, #tpu.memory_space<vmem>>, vector<8x2xf32>,
    return
  }
  func.func @transform_0(%arg0: i32) -> (i32, i32) {
    %c0_i32 = arith.constant 0 : i32
    %c0_i32_0 = arith.constant 0 : i32
    return %arg0, %c0_i32 : i32, i32
  }
  func.func @transform_1(%arg0: i32) -> (i32, i32) {
    %c0_i32 = arith.constant 0 : i32
    %c0_i32_0 = arith.constant 0 : i32
    return %arg0, %c0_i32 : i32, i32
  }
  func.func @transform_2(%arg0: i32) -> (i32, i32) {
    %c0_i32 = arith.constant 0 : i32
    %c0_i32_0 = arith.constant 0 : i32
    %c0_i32_1 = arith.constant 0 : i32
    return %c0_i32, %c0_i32_0 : i32, i32
  }
  func.func @transform_3(%arg0: i32) -> (i32, i32) {
    %c0_i32 = arith.constant 0 : i32
    %c0_i32_0 = arith.constant 0 : i32
    %c0_i32_1 = arith.constant 0 : i32
    return %c0_i32, %c0_i32_0 : i32, i32
  }
  func.func @transform_4(%arg0: i32) -> (i32, i32) {
    %c0_i32 = arith.constant 0 : i32
    %c0_i32_0 = arith.constant 0 : i32
    %c0_i32_1 = arith.constant 0 : i32
    return %c0_i32, %c0_i32_0 : i32, i32
  }
  func.func @transform_5(%arg0: i32) -> (i32, i32) {
    %c0_i32 = arith.constant 0 : i32
    %c0_i32_0 = arith.constant 0 : i32
    %c0_i32_1 = arith.constant 0 : i32
    return %c0_i32, %c0_i32_0 : i32, i32
  }
  func.func @transform_6(%arg0: i32) -> (i32, i32) {
    %c0_i32 = arith.constant 0 : i32
    %c0_i32_0 = arith.constant 0 : i32
    %c0_i32_1 = arith.constant 0 : i32
    return %c0_i32, %c0_i32_0 : i32, i32
  }
  func.func @transform_7(%arg0: i32) -> (i32, i32) {
    %c0_i32 = arith.constant 0 : i32
    %c0_i32_0 = arith.constant 0 : i32
    %c0_i32_1 = arith.constant 0 : i32
    return %c0_i32, %c0_i32_0 : i32, i32
  }
  func.func @transform_8(%arg0: i32) -> (i32, i32) {
    %c0_i32 = arith.constant 0 : i32
    %c0_i32_0 = arith.constant 0 : i32
    %c0_i32_1 = arith.constant 0 : i32
    return %c0_i32, %c0_i32_0 : i32, i32
  }
  func.func @transform_9(%arg0: i32) -> (i32, i32) {
    %c0_i32 = arith.constant 0 : i32
    %c0_i32_0 = arith.constant 0 : i32
    %c0_i32_1 = arith.constant 0 : i32
    return %c0_i32, %c0_i32_0 : i32, i32
  }
  func.func @transform_10(%arg0: i32) -> (i32, i32) {
    %c0_i32 = arith.constant 0 : i32
    %c0_i32_0 = arith.constant 0 : i32
    %c0_i32_1 = arith.constant 0 : i32
    return %c0_i32, %c0_i32_0 : i32, i32
  }
  func.func @transform_11(%arg0: i32) -> (i32, i32) {
    %c0_i32 = arith.constant 0 : i32
    %c0_i32_0 = arith.constant 0 : i32
    %c0_i32_1 = arith.constant 0 : i32
    return %c0_i32, %c0_i32_0 : i32, i32
  }
  func.func @transform_12(%arg0: i32) -> (i32, i32) {
    %c0_i32 = arith.constant 0 : i32
    %c0_i32_0 = arith.constant 0 : i32
    %c0_i32_1 = arith.constant 0 : i32
    return %c0_i32, %c0_i32_0 : i32, i32
  }
  func.func @transform_13(%arg0: i32) -> (i32, i32) {
    %c0_i32 = arith.constant 0 : i32
    %c0_i32_0 = arith.constant 0 : i32
    %c0_i32_1 = arith.constant 0 : i32
    return %c0_i32, %c0_i32_0 : i32, i32
  }
  func.func @transform_14(%arg0: i32) -> (i32, i32) {
    %c0_i32 = arith.constant 0 : i32
    %c0_i32_0 = arith.constant 0 : i32
    %c0_i32_1 = arith.constant 0 : i32
    return %c0_i32, %c0_i32_0 : i32, i32
  }
  func.func @transform_15(%arg0: i32) -> (i32, i32) {
    %c0_i32 = arith.constant 0 : i32
    %c0_i32_0 = arith.constant 0 : i32
    %c0_i32_1 = arith.constant 0 : i32
    return %c0_i32, %c0_i32_0 : i32, i32
  }
  func.func @transform_16(%arg0: i32) -> (i32, i32) {
    %c0_i32 = arith.constant 0 : i32
    %c0_i32_0 = arith.constant 0 : i32
    %c0_i32_1 = arith.constant 0 : i32
    return %c0_i32, %c0_i32_0 : i32, i32
  }
  func.func @transform_17(%arg0: i32) -> (i32, i32) {
    %c0_i32 = arith.constant 0 : i32
    %c0_i32_0 = arith.constant 0 : i32
    %c0_i32_1 = arith.constant 0 : i32
    return %c0_i32, %c0_i32_0 : i32, i32
  }
  func.func @transform_18(%arg0: i32) -> (i32, i32) {
    %c0_i32 = arith.constant 0 : i32
    %c0_i32_0 = arith.constant 0 : i32
    %c0_i32_1 = arith.constant 0 : i32
    return %c0_i32, %c0_i32_0 : i32, i32
  }
  func.func @transform_19(%arg0: i32) -> (i32, i32) {
    %c0_i32 = arith.constant 0 : i32
    %c0_i32_0 = arith.constant 0 : i32
    return %arg0, %c0_i32 : i32, i32
  }
}

</mosaic_0001>

<llo_original>
// kernel: tpu_custom_call.1
$region0: #{tpu_custom_call.1}
  #allocation0 [shape = 'u32[]', space=smem, size = 0x4, offset = 0x4, fixed_abs, tag = 'smem constant byte address 0x4 - core index']
  #allocation1 [shape = 'u32[144,128]{1,0:T(1,128)}', space=vmem, size = 0x12000, scoped, tag = 'internal scratch']
  %s0 = inlined_call_operand.vmem [shape: f32[16,6], index: 0, kind: input, shape index: {}]
  %s1 = inlined_call_operand.vmem [shape: s32[128,1], index: 1, kind: input, shape index: {}]
  %s2 = inlined_call_operand.vmem [shape: f32[70,16], index: 2, kind: input, shape index: {}]
  %s3 = inlined_call_operand.vmem [shape: f32[6,16], index: 3, kind: input, shape index: {}]
  %s4 = inlined_call_operand.vmem [shape: f32[1,16], index: 4, kind: input, shape index: {}]
  %s5 = inlined_call_operand.vmem [shape: f32[16,48], index: 5, kind: input, shape index: {}]
  %s6 = inlined_call_operand.vmem [shape: f32[1,48], index: 6, kind: input, shape index: {}]
  %s7 = inlined_call_operand.vmem [shape: f32[16,16], index: 7, kind: input, shape index: {}]
  %s8 = inlined_call_operand.vmem [shape: f32[1,16], index: 8, kind: input, shape index: {}]
  %s9 = inlined_call_operand.vmem [shape: f32[1,16], index: 9, kind: input, shape index: {}]
  %s10 = inlined_call_operand.vmem [shape: f32[1,16], index: 10, kind: input, shape index: {}]
  %s11 = inlined_call_operand.vmem [shape: f32[1,16], index: 11, kind: input, shape index: {}]
  %s12 = inlined_call_operand.vmem [shape: f32[1,16], index: 12, kind: input, shape index: {}]
  %s13 = inlined_call_operand.vmem [shape: f32[16,32], index: 13, kind: input, shape index: {}]
  %s14 = inlined_call_operand.vmem [shape: f32[1,32], index: 14, kind: input, shape index: {}]
  %s15 = inlined_call_operand.vmem [shape: f32[32,16], index: 15, kind: input, shape index: {}]
  %s16 = inlined_call_operand.vmem [shape: f32[1,16], index: 16, kind: input, shape index: {}]
  %s17 = inlined_call_operand.vmem [shape: f32[16,2], index: 17, kind: input, shape index: {}]
  %s18 = inlined_call_operand.vmem [shape: f32[1,2], index: 18, kind: input, shape index: {}]
  %s19 = inlined_call_operand.vmem [shape: f32[16,2], index: 19, kind: output, shape index: {}]
  %s20 = sld [smem:[#allocation0]]
  $region109: #{tpu_custom_call.1} parent=0
    _
  %s22 = ssub.s32 1, %s20
  %s23 = scalar_select 0, %s22, %s20
  loop: start=0, step=1, limit=4
  $region2: #{tpu_custom_call.1} parent=0 // loop_pre_header
    _
  $region3: #{tpu_custom_call.1} parent=0 // loop_header
    %s25 = sphi 0, %s29
    %p26 = scmp.ge.s32.totalorder %s25, 4
    %s35 = sphi 0, %s37
    %s38 = sphi 0, %s35
    %s39 = sphi 0, %s38
    %s55 = sphi 0, %s39
    %s61 = sphi 0, %s63
    %s64 = sphi 0, %s61
    %s65 = sphi 0, %s64
    %s81 = sphi 0, %s65
    %s85 = sphi 0, %s85
    %s87 = sphi 0, %s85
    %s88 = sphi 0, %s87
    %s102 = sphi 0, %s88
    %s106 = sphi 0, %s106
    %s108 = sphi 0, %s106
    %s109 = sphi 0, %s108
    %s123 = sphi 0, %s109
    %s127 = sphi 0, %s127
    %s129 = sphi 0, %s127
    %s130 = sphi 0, %s129
    %s144 = sphi 0, %s130
    %s148 = sphi 0, %s148
    %s150 = sphi 0, %s148
    %s151 = sphi 0, %s150
    %s165 = sphi 0, %s151
    %s169 = sphi 0, %s169
    %s171 = sphi 0, %s169
    %s172 = sphi 0, %s171
    %s186 = sphi 0, %s172
    %s190 = sphi 0, %s190
    %s192 = sphi 0, %s190
    %s193 = sphi 0, %s192
    %s207 = sphi 0, %s193
    %s211 = sphi 0, %s211
    %s213 = sphi 0, %s211
    %s214 = sphi 0, %s213
    %s228 = sphi 0, %s214
    %s232 = sphi 0, %s232
    %s234 = sphi 0, %s232
    %s235 = sphi 0, %s234
    %s249 = sphi 0, %s235
    %s253 = sphi 0, %s253
    %s255 = sphi 0, %s253
    %s256 = sphi 0, %s255
    %s270 = sphi 0, %s256
    %s274 = sphi 0, %s274
    %s276 = sphi 0, %s274
    %s277 = sphi 0, %s276
    %s291 = sphi 0, %s277
    %s295 = sphi 0, %s295
    %s297 = sphi 0, %s295
    %s298 = sphi 0, %s297
    %s312 = sphi 0, %s298
    %s316 = sphi 0, %s316
    %s318 = sphi 0, %s316
    %s319 = sphi 0, %s318
    %s333 = sphi 0, %s319
    %s337 = sphi 0, %s337
    %s339 = sphi 0, %s337
    %s340 = sphi 0, %s339
    %s354 = sphi 0, %s340
    %s358 = sphi 0, %s358
    %s360 = sphi 0, %s358
    %s361 = sphi 0, %s360
    %s375 = sphi 0, %s361
    %s379 = sphi 0, %s379
    %s381 = sphi 0, %s379
    %s382 = sphi 0, %s381
    %s396 = sphi 0, %s382
    %s400 = sphi 0, %s400
    %s402 = sphi 0, %s400
    %s403 = sphi 0, %s402
    %s417 = sphi 0, %s403
    %s421 = sphi 0, %s421
    %s423 = sphi 0, %s421
    %s424 = sphi 0, %s423
    %s438 = sphi 0, %s424
    %s444 = sphi 0, %s446
    %s447 = sphi 0, %s444
    %s448 = sphi 0, %s447
    %s464 = sphi 0, %s448
  $region4: #{tpu_custom_call.1} parent=0 // loop_header_branch
    %28 = sbr.rel (%p26) target = $region8
  $region5: #{tpu_custom_call.1} parent=0 // loop_body
    %s30 = ssub.s32 %s25, 1
    %s31 = ssub.s32 %s25, 2
    %s32 = sadd.s32 %s25, 1
    %s33 = ssub.s32 %s25, %s32
    %p34 = scmp.eq.s32.totalorder %s33, 0
    %s36 = sadd.s32 %s35, 1
    %s37 = scalar_select %p34, %s35, %s36
    %p40 = pneg %p34
    %p41 = scmp.eq.s32.totalorder %s25, 1
    %p42 = por %p40, %p41
    %p43 = scmp.ne.s32.totalorder %s35, %s38
    %p44 = scmp.eq.s32.totalorder %s25, 0
    %p45 = por %p43, %p44
    %p46 = scmp.ne.s32.totalorder %s35, %s38
    %p47 = scmp.eq.s32.totalorder %s30, 1
    %p48 = por %p46, %p47
    %p49 = scmp.ne.s32.totalorder %s38, %s39
    %p50 = scmp.eq.s32.totalorder %s30, 0
    %p51 = por %p49, %p50
    %p52 = scmp.ne.s32.totalorder %s38, %s39
    %p53 = scmp.eq.s32.totalorder %s31, 1
    %p54 = por %p52, %p53
    %p56 = scmp.ne.s32.totalorder %s39, %s55
    %p57 = scmp.eq.s32.totalorder %s31, 0
    %p58 = por %p56, %p57
    %s59 = ssub.s32 %s25, %s32
    %p60 = scmp.eq.s32.totalorder %s59, 0
    %s62 = sadd.s32 %s61, 1
    %s63 = scalar_select %p60, %s61, %s62
    %p66 = pneg %p60
    %p67 = scmp.eq.s32.totalorder %s25, 1
    %p68 = por %p66, %p67
    %p69 = scmp.ne.s32.totalorder %s61, %s64
    %p70 = scmp.eq.s32.totalorder %s25, 0
    %p71 = por %p69, %p70
    %p72 = scmp.ne.s32.totalorder %s61, %s64
    %p73 = scmp.eq.s32.totalorder %s30, 1
    %p74 = por %p72, %p73
    %p75 = scmp.ne.s32.totalorder %s64, %s65
    %p76 = scmp.eq.s32.totalorder %s30, 0
    %p77 = por %p75, %p76
    %p78 = scmp.ne.s32.totalorder %s64, %s65
    %p79 = scmp.eq.s32.totalorder %s31, 1
    %p80 = por %p78, %p79
    %p82 = scmp.ne.s32.totalorder %s65, %s81
    %p83 = scmp.eq.s32.totalorder %s31, 0
    %p84 = por %p82, %p83
    %s86 = sadd.s32 %s85, 1
    %p89 = scmp.eq.s32.totalorder %s25, 1
    %p90 = scmp.ne.s32.totalorder %s85, %s87
    %p91 = scmp.eq.s32.totalorder %s25, 0
    %p92 = por %p90, %p91
    %p93 = scmp.ne.s32.totalorder %s85, %s87
    %p94 = scmp.eq.s32.totalorder %s30, 1
    %p95 = por %p93, %p94
    %p96 = scmp.ne.s32.totalorder %s87, %s88
    %p97 = scmp.eq.s32.totalorder %s30, 0
    %p98 = por %p96, %p97
    %p99 = scmp.ne.s32.totalorder %s87, %s88
    %p100 = scmp.eq.s32.totalorder %s31, 1
    %p101 = por %p99, %p100
    %p103 = scmp.ne.s32.totalorder %s88, %s102
    %p104 = scmp.eq.s32.totalorder %s31, 0
    %p105 = por %p103, %p104
    %s107 = sadd.s32 %s106, 1
    %p110 = scmp.eq.s32.totalorder %s25, 1
    %p111 = scmp.ne.s32.totalorder %s106, %s108
    %p112 = scmp.eq.s32.totalorder %s25, 0
    %p113 = por %p111, %p112
    %p114 = scmp.ne.s32.totalorder %s106, %s108
    %p115 = scmp.eq.s32.totalorder %s30, 1
    %p116 = por %p114, %p115
    %p117 = scmp.ne.s32.totalorder %s108, %s109
    %p118 = scmp.eq.s32.totalorder %s30, 0
    %p119 = por %p117, %p118
    %p120 = scmp.ne.s32.totalorder %s108, %s109
    %p121 = scmp.eq.s32.totalorder %s31, 1
    %p122 = por %p120, %p121
    %p124 = scmp.ne.s32.totalorder %s109, %s123
    %p125 = scmp.eq.s32.totalorder %s31, 0
    %p126 = por %p124, %p125
    %s128 = sadd.s32 %s127, 1
    %p131 = scmp.eq.s32.totalorder %s25, 1
    %p132 = scmp.ne.s32.totalorder %s127, %s129
    %p133 = scmp.eq.s32.totalorder %s25, 0
    %p134 = por %p132, %p133
    %p135 = scmp.ne.s32.totalorder %s127, %s129
    %p136 = scmp.eq.s32.totalorder %s30, 1
    %p137 = por %p135, %p136
    %p138 = scmp.ne.s32.totalorder %s129, %s130
    %p139 = scmp.eq.s32.totalorder %s30, 0
    %p140 = por %p138, %p139
    %p141 = scmp.ne.s32.totalorder %s129, %s130
    %p142 = scmp.eq.s32.totalorder %s31, 1
    %p143 = por %p141, %p142
    %p145 = scmp.ne.s32.totalorder %s130, %s144
    %p146 = scmp.eq.s32.totalorder %s31, 0
    %p147 = por %p145, %p146
    %s149 = sadd.s32 %s148, 1
    %p152 = scmp.eq.s32.totalorder %s25, 1
    %p153 = scmp.ne.s32.totalorder %s148, %s150
    %p154 = scmp.eq.s32.totalorder %s25, 0
    %p155 = por %p153, %p154
    %p156 = scmp.ne.s32.totalorder %s148, %s150
    %p157 = scmp.eq.s32.totalorder %s30, 1
    %p158 = por %p156, %p157
    %p159 = scmp.ne.s32.totalorder %s150, %s151
    %p160 = scmp.eq.s32.totalorder %s30, 0
    %p161 = por %p159, %p160
    %p162 = scmp.ne.s32.totalorder %s150, %s151
    %p163 = scmp.eq.s32.totalorder %s31, 1
    %p164 = por %p162, %p163
    %p166 = scmp.ne.s32.totalorder %s151, %s165
    %p167 = scmp.eq.s32.totalorder %s31, 0
    %p168 = por %p166, %p167
    %s170 = sadd.s32 %s169, 1
    %p173 = scmp.eq.s32.totalorder %s25, 1
    %p174 = scmp.ne.s32.totalorder %s169, %s171
    %p175 = scmp.eq.s32.totalorder %s25, 0
    %p176 = por %p174, %p175
    %p177 = scmp.ne.s32.totalorder %s169, %s171
    %p178 = scmp.eq.s32.totalorder %s30, 1
    %p179 = por %p177, %p178
    %p180 = scmp.ne.s32.totalorder %s171, %s172
    %p181 = scmp.eq.s32.totalorder %s30, 0
    %p182 = por %p180, %p181
    %p183 = scmp.ne.s32.totalorder %s171, %s172
    %p184 = scmp.eq.s32.totalorder %s31, 1
    %p185 = por %p183, %p184
    %p187 = scmp.ne.s32.totalorder %s172, %s186
    %p188 = scmp.eq.s32.totalorder %s31, 0
    %p189 = por %p187, %p188
    %s191 = sadd.s32 %s190, 1
    %p194 = scmp.eq.s32.totalorder %s25, 1
    %p195 = scmp.ne.s32.totalorder %s190, %s192
    %p196 = scmp.eq.s32.totalorder %s25, 0
    %p197 = por %p195, %p196
    %p198 = scmp.ne.s32.totalorder %s190, %s192
    %p199 = scmp.eq.s32.totalorder %s30, 1
    %p200 = por %p198, %p199
    %p201 = scmp.ne.s32.totalorder %s192, %s193
    %p202 = scmp.eq.s32.totalorder %s30, 0
    %p203 = por %p201, %p202
    %p204 = scmp.ne.s32.totalorder %s192, %s193
    %p205 = scmp.eq.s32.totalorder %s31, 1
    %p206 = por %p204, %p205
    %p208 = scmp.ne.s32.totalorder %s193, %s207
    %p209 = scmp.eq.s32.totalorder %s31, 0
    %p210 = por %p208, %p209
    %s212 = sadd.s32 %s211, 1
    %p215 = scmp.eq.s32.totalorder %s25, 1
    %p216 = scmp.ne.s32.totalorder %s211, %s213
    %p217 = scmp.eq.s32.totalorder %s25, 0
    %p218 = por %p216, %p217
    %p219 = scmp.ne.s32.totalorder %s211, %s213
    %p220 = scmp.eq.s32.totalorder %s30, 1
    %p221 = por %p219, %p220
    %p222 = scmp.ne.s32.totalorder %s213, %s214
    %p223 = scmp.eq.s32.totalorder %s30, 0
    %p224 = por %p222, %p223
    %p225 = scmp.ne.s32.totalorder %s213, %s214
    %p226 = scmp.eq.s32.totalorder %s31, 1
    %p227 = por %p225, %p226
    %p229 = scmp.ne.s32.totalorder %s214, %s228
    %p230 = scmp.eq.s32.totalorder %s31, 0
    %p231 = por %p229, %p230
    %s233 = sadd.s32 %s232, 1
    %p236 = scmp.eq.s32.totalorder %s25, 1
    %p237 = scmp.ne.s32.totalorder %s232, %s234
    %p238 = scmp.eq.s32.totalorder %s25, 0
    %p239 = por %p237, %p238
    %p240 = scmp.ne.s32.totalorder %s232, %s234
    %p241 = scmp.eq.s32.totalorder %s30, 1
    %p242 = por %p240, %p241
    %p243 = scmp.ne.s32.totalorder %s234, %s235
    %p244 = scmp.eq.s32.totalorder %s30, 0
    %p245 = por %p243, %p244
    %p246 = scmp.ne.s32.totalorder %s234, %s235
    %p247 = scmp.eq.s32.totalorder %s31, 1
    %p248 = por %p246, %p247
    %p250 = scmp.ne.s32.totalorder %s235, %s249
    %p251 = scmp.eq.s32.totalorder %s31, 0
    %p252 = por %p250, %p251
    %s254 = sadd.s32 %s253, 1
    %p257 = scmp.eq.s32.totalorder %s25, 1
    %p258 = scmp.ne.s32.totalorder %s253, %s255
    %p259 = scmp.eq.s32.totalorder %s25, 0
    %p260 = por %p258, %p259
    %p261 = scmp.ne.s32.totalorder %s253, %s255
    %p262 = scmp.eq.s32.totalorder %s30, 1
    %p263 = por %p261, %p262
    %p264 = scmp.ne.s32.totalorder %s255, %s256
    %p265 = scmp.eq.s32.totalorder %s30, 0
    %p266 = por %p264, %p265
    %p267 = scmp.ne.s32.totalorder %s255, %s256
    %p268 = scmp.eq.s32.totalorder %s31, 1
    %p269 = por %p267, %p268
    %p271 = scmp.ne.s32.totalorder %s256, %s270
    %p272 = scmp.eq.s32.totalorder %s31, 0
    %p273 = por %p271, %p272
    %s275 = sadd.s32 %s274, 1
    %p278 = scmp.eq.s32.totalorder %s25, 1
    %p279 = scmp.ne.s32.totalorder %s274, %s276
    %p280 = scmp.eq.s32.totalorder %s25, 0
    %p281 = por %p279, %p280
    %p282 = scmp.ne.s32.totalorder %s274, %s276
    %p283 = scmp.eq.s32.totalorder %s30, 1
    %p284 = por %p282, %p283
    %p285 = scmp.ne.s32.totalorder %s276, %s277
    %p286 = scmp.eq.s32.totalorder %s30, 0
    %p287 = por %p285, %p286
    %p288 = scmp.ne.s32.totalorder %s276, %s277
    %p289 = scmp.eq.s32.totalorder %s31, 1
    %p290 = por %p288, %p289
    %p292 = scmp.ne.s32.totalorder %s277, %s291
    %p293 = scmp.eq.s32.totalorder %s31, 0
    %p294 = por %p292, %p293
    %s296 = sadd.s32 %s295, 1
    %p299 = scmp.eq.s32.totalorder %s25, 1
    %p300 = scmp.ne.s32.totalorder %s295, %s297
    %p301 = scmp.eq.s32.totalorder %s25, 0
    %p302 = por %p300, %p301
    %p303 = scmp.ne.s32.totalorder %s295, %s297
    %p304 = scmp.eq.s32.totalorder %s30, 1
    %p305 = por %p303, %p304
    %p306 = scmp.ne.s32.totalorder %s297, %s298
    %p307 = scmp.eq.s32.totalorder %s30, 0
    %p308 = por %p306, %p307
    %p309 = scmp.ne.s32.totalorder %s297, %s298
    %p310 = scmp.eq.s32.totalorder %s31, 1
    %p311 = por %p309, %p310
    %p313 = scmp.ne.s32.totalorder %s298, %s312
    %p314 = scmp.eq.s32.totalorder %s31, 0
    %p315 = por %p313, %p314
    %s317 = sadd.s32 %s316, 1
    %p320 = scmp.eq.s32.totalorder %s25, 1
    %p321 = scmp.ne.s32.totalorder %s316, %s318
    %p322 = scmp.eq.s32.totalorder %s25, 0
    %p323 = por %p321, %p322
    %p324 = scmp.ne.s32.totalorder %s316, %s318
    %p325 = scmp.eq.s32.totalorder %s30, 1
    %p326 = por %p324, %p325
    %p327 = scmp.ne.s32.totalorder %s318, %s319
    %p328 = scmp.eq.s32.totalorder %s30, 0
    %p329 = por %p327, %p328
    %p330 = scmp.ne.s32.totalorder %s318, %s319
    %p331 = scmp.eq.s32.totalorder %s31, 1
    %p332 = por %p330, %p331
    %p334 = scmp.ne.s32.totalorder %s319, %s333
    %p335 = scmp.eq.s32.totalorder %s31, 0
    %p336 = por %p334, %p335
    %s338 = sadd.s32 %s337, 1
    %p341 = scmp.eq.s32.totalorder %s25, 1
    %p342 = scmp.ne.s32.totalorder %s337, %s339
    %p343 = scmp.eq.s32.totalorder %s25, 0
    %p344 = por %p342, %p343
    %p345 = scmp.ne.s32.totalorder %s337, %s339
    %p346 = scmp.eq.s32.totalorder %s30, 1
    %p347 = por %p345, %p346
    %p348 = scmp.ne.s32.totalorder %s339, %s340
    %p349 = scmp.eq.s32.totalorder %s30, 0
    %p350 = por %p348, %p349
    %p351 = scmp.ne.s32.totalorder %s339, %s340
    %p352 = scmp.eq.s32.totalorder %s31, 1
    %p353 = por %p351, %p352
    %p355 = scmp.ne.s32.totalorder %s340, %s354
    %p356 = scmp.eq.s32.totalorder %s31, 0
    %p357 = por %p355, %p356
    %s359 = sadd.s32 %s358, 1
    %p362 = scmp.eq.s32.totalorder %s25, 1
    %p363 = scmp.ne.s32.totalorder %s358, %s360
    %p364 = scmp.eq.s32.totalorder %s25, 0
    %p365 = por %p363, %p364
    %p366 = scmp.ne.s32.totalorder %s358, %s360
    %p367 = scmp.eq.s32.totalorder %s30, 1
    %p368 = por %p366, %p367
    %p369 = scmp.ne.s32.totalorder %s360, %s361
    %p370 = scmp.eq.s32.totalorder %s30, 0
    %p371 = por %p369, %p370
    %p372 = scmp.ne.s32.totalorder %s360, %s361
    %p373 = scmp.eq.s32.totalorder %s31, 1
    %p374 = por %p372, %p373
    %p376 = scmp.ne.s32.totalorder %s361, %s375
    %p377 = scmp.eq.s32.totalorder %s31, 0
    %p378 = por %p376, %p377
    %s380 = sadd.s32 %s379, 1
    %p383 = scmp.eq.s32.totalorder %s25, 1
    %p384 = scmp.ne.s32.totalorder %s379, %s381
    %p385 = scmp.eq.s32.totalorder %s25, 0
    %p386 = por %p384, %p385
    %p387 = scmp.ne.s32.totalorder %s379, %s381
    %p388 = scmp.eq.s32.totalorder %s30, 1
    %p389 = por %p387, %p388
    %p390 = scmp.ne.s32.totalorder %s381, %s382
    %p391 = scmp.eq.s32.totalorder %s30, 0
    %p392 = por %p390, %p391
    %p393 = scmp.ne.s32.totalorder %s381, %s382
    %p394 = scmp.eq.s32.totalorder %s31, 1
    %p395 = por %p393, %p394
    %p397 = scmp.ne.s32.totalorder %s382, %s396
    %p398 = scmp.eq.s32.totalorder %s31, 0
    %p399 = por %p397, %p398
    %s401 = sadd.s32 %s400, 1
    %p404 = scmp.eq.s32.totalorder %s25, 1
    %p405 = scmp.ne.s32.totalorder %s400, %s402
    %p406 = scmp.eq.s32.totalorder %s25, 0
    %p407 = por %p405, %p406
    %p408 = scmp.ne.s32.totalorder %s400, %s402
    %p409 = scmp.eq.s32.totalorder %s30, 1
    %p410 = por %p408, %p409
    %p411 = scmp.ne.s32.totalorder %s402, %s403
    %p412 = scmp.eq.s32.totalorder %s30, 0
    %p413 = por %p411, %p412
    %p414 = scmp.ne.s32.totalorder %s402, %s403
    %p415 = scmp.eq.s32.totalorder %s31, 1
    %p416 = por %p414, %p415
    %p418 = scmp.ne.s32.totalorder %s403, %s417
    %p419 = scmp.eq.s32.totalorder %s31, 0
    %p420 = por %p418, %p419
    %s422 = sadd.s32 %s421, 1
    %p425 = scmp.eq.s32.totalorder %s25, 1
    %p426 = scmp.ne.s32.totalorder %s421, %s423
    %p427 = scmp.eq.s32.totalorder %s25, 0
    %p428 = por %p426, %p427
    %p429 = scmp.ne.s32.totalorder %s421, %s423
    %p430 = scmp.eq.s32.totalorder %s30, 1
    %p431 = por %p429, %p430
    %p432 = scmp.ne.s32.totalorder %s423, %s424
    %p433 = scmp.eq.s32.totalorder %s30, 0
    %p434 = por %p432, %p433
    %p435 = scmp.ne.s32.totalorder %s423, %s424
    %p436 = scmp.eq.s32.totalorder %s31, 1
    %p437 = por %p435, %p436
    %p439 = scmp.ne.s32.totalorder %s424, %s438
    %p440 = scmp.eq.s32.totalorder %s31, 0
    %p441 = por %p439, %p440
    %s442 = ssub.s32 %s25, %s32
    %p443 = scmp.eq.s32.totalorder %s442, 0
    %s445 = sadd.s32 %s444, 1
    %s446 = scalar_select %p443, %s444, %s445
    %p449 = pneg %p443
    %p450 = scmp.eq.s32.totalorder %s25, 1
    %p451 = por %p449, %p450
    %p452 = scmp.ne.s32.totalorder %s444, %s447
    %p453 = scmp.eq.s32.totalorder %s25, 0
    %p454 = por %p452, %p453
    %p455 = scmp.ne.s32.totalorder %s444, %s447
    %p456 = scmp.eq.s32.totalorder %s30, 1
    %p457 = por %p455, %p456
    %p458 = scmp.ne.s32.totalorder %s447, %s448
    %p459 = scmp.eq.s32.totalorder %s30, 0
    %p460 = por %p458, %p459
    %p461 = scmp.ne.s32.totalorder %s447, %s448
    %p462 = scmp.eq.s32.totalorder %s31, 1
    %p463 = por %p461, %p462
    %p465 = scmp.ne.s32.totalorder %s448, %s464
    %p466 = scmp.eq.s32.totalorder %s31, 0
    %p467 = por %p465, %p466
    %p468 = scmp.le.s32.totalorder 1, %s25
    %p469 = scmp.lt.s32.totalorder %s25, 3
    %p470 = pnand %p468, %p469
    %p471 = pneg %p470
    // Predicated region
    $region9: #{tpu_custom_call.1} parent=5 // pred_check
      _
    $region10: #{tpu_custom_call.1} parent=5 // pred_check_branch
      %473 = sbr.rel (%p470) target = $region12
    $region11: #{tpu_custom_call.1} parent=5 // pred_region
      %s474 = ssub.s32 %s25, 1
      // Predicated region
      $region13: #{tpu_custom_call.1} parent=11 // pred_check
        %p475 = pneg %p98
      $region14: #{tpu_custom_call.1} parent=11 // pred_check_branch
        %477 = sbr.rel (%p475) target = $region16
      $region15: #{tpu_custom_call.1} parent=11 // pred_region
        _
      $region16: #{tpu_custom_call.1} parent=11 // pred_fallthru
        _
      // Predicated region
      $region17: #{tpu_custom_call.1} parent=11 // pred_check
        %p478 = pneg %p119
      $region18: #{tpu_custom_call.1} parent=11 // pred_check_branch
        %480 = sbr.rel (%p478) target = $region20
      $region19: #{tpu_custom_call.1} parent=11 // pred_region
        _
      $region20: #{tpu_custom_call.1} parent=11 // pred_fallthru
        _
      // Predicated region
      $region21: #{tpu_custom_call.1} parent=11 // pred_check
        %p481 = pneg %p140
      $region22: #{tpu_custom_call.1} parent=11 // pred_check_branch
        %483 = sbr.rel (%p481) target = $region24
      $region23: #{tpu_custom_call.1} parent=11 // pred_region
        _
      $region24: #{tpu_custom_call.1} parent=11 // pred_fallthru
        _
      // Predicated region
      $region25: #{tpu_custom_call.1} parent=11 // pred_check
        %p484 = pneg %p161
      $region26: #{tpu_custom_call.1} parent=11 // pred_check_branch
        %486 = sbr.rel (%p484) target = $region28
      $region27: #{tpu_custom_call.1} parent=11 // pred_region
        _
      $region28: #{tpu_custom_call.1} parent=11 // pred_fallthru
        _
      // Predicated region
      $region29: #{tpu_custom_call.1} parent=11 // pred_check
        %p487 = pneg %p182
      $region30: #{tpu_custom_call.1} parent=11 // pred_check_branch
        %489 = sbr.rel (%p487) target = $region32
      $region31: #{tpu_custom_call.1} parent=11 // pred_region
        _
      $region32: #{tpu_custom_call.1} parent=11 // pred_fallthru
        _
      // Predicated region
      $region33: #{tpu_custom_call.1} parent=11 // pred_check
        %p490 = pneg %p203
      $region34: #{tpu_custom_call.1} parent=11 // pred_check_branch
        %492 = sbr.rel (%p490) target = $region36
      $region35: #{tpu_custom_call.1} parent=11 // pred_region
        _
      $region36: #{tpu_custom_call.1} parent=11 // pred_fallthru
        _
      // Predicated region
      $region37: #{tpu_custom_call.1} parent=11 // pred_check
        %p493 = pneg %p224
      $region38: #{tpu_custom_call.1} parent=11 // pred_check_branch
        %495 = sbr.rel (%p493) target = $region40
      $region39: #{tpu_custom_call.1} parent=11 // pred_region
        _
      $region40: #{tpu_custom_call.1} parent=11 // pred_fallthru
        _
      // Predicated region
      $region41: #{tpu_custom_call.1} parent=11 // pred_check
        %p496 = pneg %p245
      $region42: #{tpu_custom_call.1} parent=11 // pred_check_branch
        %498 = sbr.rel (%p496) target = $region44
      $region43: #{tpu_custom_call.1} parent=11 // pred_region
        _
      $region44: #{tpu_custom_call.1} parent=11 // pred_fallthru
        _
      // Predicated region
      $region45: #{tpu_custom_call.1} parent=11 // pred_check
        %p499 = pneg %p266
      $region46: #{tpu_custom_call.1} parent=11 // pred_check_branch
        %501 = sbr.rel (%p499) target = $region48
      $region47: #{tpu_custom_call.1} parent=11 // pred_region
        _
      $region48: #{tpu_custom_call.1} parent=11 // pred_fallthru
        _
      // Predicated region
      $region49: #{tpu_custom_call.1} parent=11 // pred_check
        %p502 = pneg %p287
      $region50: #{tpu_custom_call.1} parent=11 // pred_check_branch
        %504 = sbr.rel (%p502) target = $region52
      $region51: #{tpu_custom_call.1} parent=11 // pred_region
        _
      $region52: #{tpu_custom_call.1} parent=11 // pred_fallthru
        _
      // Predicated region
      $region53: #{tpu_custom_call.1} parent=11 // pred_check
        %p505 = pneg %p308
      $region54: #{tpu_custom_call.1} parent=11 // pred_check_branch
        %507 = sbr.rel (%p505) target = $region56
      $region55: #{tpu_custom_call.1} parent=11 // pred_region
        _
      $region56: #{tpu_custom_call.1} parent=11 // pred_fallthru
        _
      // Predicated region
      $region57: #{tpu_custom_call.1} parent=11 // pred_check
        %p508 = pneg %p329
      $region58: #{tpu_custom_call.1} parent=11 // pred_check_branch
        %510 = sbr.rel (%p508) target = $region60
      $region59: #{tpu_custom_call.1} parent=11 // pred_region
        _
      $region60: #{tpu_custom_call.1} parent=11 // pred_fallthru
        _
      // Predicated region
      $region61: #{tpu_custom_call.1} parent=11 // pred_check
        %p511 = pneg %p350
      $region62: #{tpu_custom_call.1} parent=11 // pred_check_branch
        %513 = sbr.rel (%p511) target = $region64
      $region63: #{tpu_custom_call.1} parent=11 // pred_region
        _
      $region64: #{tpu_custom_call.1} parent=11 // pred_fallthru
        _
      // Predicated region
      $region65: #{tpu_custom_call.1} parent=11 // pred_check
        %p514 = pneg %p371
      $region66: #{tpu_custom_call.1} parent=11 // pred_check_branch
        %516 = sbr.rel (%p514) target = $region68
      $region67: #{tpu_custom_call.1} parent=11 // pred_region
        _
      $region68: #{tpu_custom_call.1} parent=11 // pred_fallthru
        _
      // Predicated region
      $region69: #{tpu_custom_call.1} parent=11 // pred_check
        %p517 = pneg %p392
      $region70: #{tpu_custom_call.1} parent=11 // pred_check_branch
        %519 = sbr.rel (%p517) target = $region72
      $region71: #{tpu_custom_call.1} parent=11 // pred_region
        _
      $region72: #{tpu_custom_call.1} parent=11 // pred_fallthru
        _
      // Predicated region
      $region73: #{tpu_custom_call.1} parent=11 // pred_check
        %p520 = pneg %p413
      $region74: #{tpu_custom_call.1} parent=11 // pred_check_branch
        %522 = sbr.rel (%p520) target = $region76
      $region75: #{tpu_custom_call.1} parent=11 // pred_region
        _
      $region76: #{tpu_custom_call.1} parent=11 // pred_fallthru
        _
      // Predicated region
      $region77: #{tpu_custom_call.1} parent=11 // pred_check
        %p523 = pneg %p434
      $region78: #{tpu_custom_call.1} parent=11 // pred_check_branch
        %525 = sbr.rel (%p523) target = $region80
      $region79: #{tpu_custom_call.1} parent=11 // pred_region
        _
      $region80: #{tpu_custom_call.1} parent=11 // pred_fallthru
        _
    $region12: #{tpu_custom_call.1} parent=5 // pred_fallthru
      _
    %p526 = scmp.lt.s32.totalorder %s25, 2
    // Predicated region
    $region81: #{tpu_custom_call.1} parent=5 // pred_check
      %p527 = pneg %p526
    $region82: #{tpu_custom_call.1} parent=5 // pred_check_branch
      %529 = sbr.rel (%p527) target = $region84
    $region83: #{tpu_custom_call.1} parent=5 // pred_region
      // Predicated region
      $region85: #{tpu_custom_call.1} parent=83 // pred_check
        %p530 = pneg %p45
      $region86: #{tpu_custom_call.1} parent=83 // pred_check_branch
        %532 = sbr.rel (%p530) target = $region88
      $region87: #{tpu_custom_call.1} parent=83 // pred_region
        %p533 = scmp.lt.s32.totalorder %s25, 1
        %s534 = scalar_select %p533, %s25, 1
        %s535 = smul.addr %s534, 8
        %s536 = scalar_lea.vmem %s0, %s535
      $region88: #{tpu_custom_call.1} parent=83 // pred_fallthru
        _
      // Predicated region
      $region89: #{tpu_custom_call.1} parent=83 // pred_check
        %p537 = pneg %p71
      $region90: #{tpu_custom_call.1} parent=83 // pred_check_branch
        %539 = sbr.rel (%p537) target = $region92
      $region91: #{tpu_custom_call.1} parent=83 // pred_region
        %s540 = smul.u32 8, %s25
        %p541 = scmp.lt.s32.totalorder %s540, 15
        %s542 = scalar_select %p541, %s540, 15
        %s543 = smul.addr %s542, 8
        %s544 = scalar_lea.vmem %s1, %s543
        %s545 = smul.u32 8, %s25
      $region92: #{tpu_custom_call.1} parent=83 // pred_fallthru
        _
    $region84: #{tpu_custom_call.1} parent=5 // pred_fallthru
      _
    %p546 = scmp.le.s32.totalorder 1, %s25
    %p547 = scmp.lt.s32.totalorder %s25, 3
    %p548 = pnand %p546, %p547
    %p549 = pneg %p548
    // Predicated region
    $region93: #{tpu_custom_call.1} parent=5 // pred_check
      _
    $region94: #{tpu_custom_call.1} parent=5 // pred_check_branch
      %551 = sbr.rel (%p548) target = $region96
    $region95: #{tpu_custom_call.1} parent=5 // pred_region
      %s552 = ssub.s32 %s25, 1
      %p553 = scmp.lt.s32.totalorder %s30, 1
      %s554 = scalar_select %p553, %s30, 1
      %s555 = smul.addr %s554, 8
      %s556 = scalar_lea.vmem %s0, %s555
      %p557 = pneg %p51
      %p558 = pneg %p48
      %s559 = smul.u32 8, %s30
      %p560 = scmp.lt.s32.totalorder %s559, 15
      %s561 = scalar_select %p560, %s559, 15
      %s562 = smul.addr %s561, 8
      %s563 = scalar_lea.vmem %s1, %s562
      %p564 = pneg %p77
      %p565 = pneg %p74
      %p566 = pneg %p98
      %p567 = pneg %p95
      %p568 = pneg %p119
      %p569 = pneg %p116
      %p570 = pneg %p140
      %p571 = pneg %p137
      %p572 = pneg %p161
      %p573 = pneg %p158
      %p574 = pneg %p182
      %p575 = pneg %p179
      %p576 = pneg %p203
      %p577 = pneg %p200
      %p578 = pneg %p224
      %p579 = pneg %p221
      %p580 = pneg %p245
      %p581 = pneg %p242
      %p582 = pneg %p266
      %p583 = pneg %p263
      %p584 = pneg %p287
      %p585 = pneg %p284
      %p586 = pneg %p308
      %p587 = pneg %p305
      %p588 = pneg %p329
      %p589 = pneg %p326
      %p590 = pneg %p350
      %p591 = pneg %p347
      %p592 = pneg %p371
      %p593 = pneg %p368
      %p594 = pneg %p392
      %p595 = pneg %p389
      %p596 = pneg %p413
      %p597 = pneg %p410
      %p598 = pneg %p434
      %p599 = pneg %p431
      %p600 = pneg %p460
      %p601 = pneg %p457
      %p602 = scmp.lt.s32.totalorder %s30, 1
      %s603 = scalar_select %p602, %s30, 1
      %s604 = smul.addr %s603, 8
      %s605 = scalar_lea.vmem %s19, %s604
      %p606 = scmp.lt.s32.totalorder %s30, 1
      %s607 = scalar_select %p606, %s30, 1
      %s608 = smul.addr %s607, 8
      %s609 = scalar_lea.vmem %s0, %s608
      %s610 = smul.u32 8, %s30
      %p611 = scmp.lt.s32.totalorder %s610, 15
      %s612 = scalar_select %p611, %s610, 15
      %s613 = smul.addr %s612, 8
      %s614 = scalar_lea.vmem %s1, %s613
      %s615 = smul.u32 8, %s30
      %p616 = scmp.lt.s32.totalorder %s30, 1
      %s617 = scalar_select %p616, %s30, 1
      %s618 = smul.addr %s617, 8
      %s619 = scalar_lea.vmem %s19, %s618
      %v620 = vld [vmem:[%s609] sm:$0xff]
      %v621 = vld [vmem:[%s3] sm:$0x3f]
      %v622 = vld [vmem:[%s4] sm:$0x1]
      %v624 = vlaneseq
      %v625 = vshrl.u32 %v624, 7
      %v626 = vsub.s32 0, %v625
      %v627 = vrot.slane %v622, %v626
      %vm629 = vcmask 48128
      %v631 = vsel %vm629, %v620, 0
      %vm633 = vcmask 1045504
      %v635 = vsel %vm633, %v621, 0
      %637 = vmatprep.subr.mxu0 0.0
      %638 = vmatpush1.msra.mxu0 %v635
      %639 = vmatprep.subr.mxu0 0.0
      %640 = vmatpush1.msra.mxu0 0.0
      %641 = vmatprep.subr.mxu0 0.0
      %642 = vmatpush1.msra.mxu0 0.0
      %643 = vmatprep.subr.mxu0 0.0
      %644 = vmatpush1.msra.mxu0 0.0
      %645 = vmatprep.subr.mxu0 0.0
      %646 = vmatpush1.msra.mxu0 0.0
      %647 = vmatprep.subr.mxu0 0.0
      %648 = vmatpush1.msra.mxu0 0.0
      %649 = vmatprep.subr.mxu0 0.0
      %650 = vmatpush1.msra.mxu0 0.0
      %651 = vmatprep.subr.mxu0 0.0
      %652 = vmatpush1.msra.mxu0 0.0
      %653 = vmatprep.subr.mxu0 0.0
      %654 = vmatpush1.msra.mxu0 0.0
      %655 = vmatprep.subr.mxu0 0.0
      %656 = vmatpush1.msra.mxu0 0.0
      %657 = vmatprep.subr.mxu0 0.0
      %658 = vmatpush1.msra.mxu0 0.0
      %659 = vmatprep.subr.mxu0 0.0
      %660 = vmatpush1.msra.mxu0 0.0
      %661 = vmatprep.subr.mxu0 0.0
      %662 = vmatpush1.msra.mxu0 0.0
      %663 = vmatprep.subr.mxu0 0.0
      %664 = vmatpush1.msra.mxu0 0.0
      %665 = vmatprep.subr.mxu0 0.0
      %666 = vmatpush1.msra.mxu0 0.0
      %667 = vmatprep.subr.mxu0 0.0
      %668 = vmatpush1.msra.mxu0 0.0
      %669 = vmatprep.subr.mxu0 0.0
      %670 = vmatpush1.msra.mxu0 0.0
      %671 = vmatprep.subr.mxu0 0.0
      %672 = vmatpush1.msra.mxu0 0.0
      %673 = vmatprep.subr.mxu0 0.0
      %674 = vmatpush1.msra.mxu0 0.0
      %675 = vmatprep.subr.mxu0 0.0
      %676 = vmatpush1.msra.mxu0 0.0
      %677 = vmatprep.subr.mxu0 0.0
      %678 = vmatpush1.msra.mxu0 0.0
      %679 = vmatprep.subr.mxu0 0.0
      %680 = vmatpush1.msra.mxu0 0.0
      %681 = vmatprep.subr.mxu0 0.0
      %682 = vmatpush1.msra.mxu0 0.0
      %683 = vmatprep.subr.mxu0 0.0
      %684 = vmatpush1.msra.mxu0 0.0
      %685 = vmatprep.subr.mxu0 0.0
      %686 = vmatpush1.msra.mxu0 0.0
      %687 = vmatprep.subr.mxu0 0.0
      %688 = vmatpush1.msra.mxu0 0.0
      %689 = vmatprep.subr.mxu0 0.0
      %690 = vmatpush1.msra.mxu0 0.0
      %691 = vmatprep.subr.mxu0 0.0
      %692 = vmatpush1.msra.mxu0 0.0
      %693 = vmatprep.subr.mxu0 0.0
      %694 = vmatpush1.msra.mxu0 0.0
      %695 = vmatprep.subr.mxu0 0.0
      %696 = vmatpush1.msra.mxu0 0.0
      %697 = vmatprep.subr.mxu0 0.0
      %698 = vmatpush1.msra.mxu0 0.0
      %699 = vmatprep.subr.mxu0 0.0
      %700 = vmatpush1.msra.mxu0 0.0
      %701 = vmatprep.mubr.f32.mxu0 0.0
      %702 = vmatmul.mubr.f32.gmra.mrb[0].mxu0 %v631
      %v703 = vpop.f32.mrb[0].mxu0
      %v704 = vadd.f32 %v627, %v703
      %v705 = vpop.f32.mrb[0].mxu0
      %706 = vdwg.mxu0
      %v707 = vlaneseq
      %v708 = vand.u32 %v707, 127
      %v709 = vld [vmem:[%s614] sm:$0xff]
      %v710 = vld [vmem:[%s614 + $0x8] sm:$0xff]
      %v711 = vld [vmem:[%s614 + $0x10] sm:$0xff]
      %v712 = vld [vmem:[%s614 + $0x18] sm:$0xff]
      %v713 = vld [vmem:[%s614 + $0x20] sm:$0xff]
      %v714 = vld [vmem:[%s614 + $0x28] sm:$0xff]
      %v715 = vld [vmem:[%s614 + $0x30] sm:$0xff]
      %v716 = vld [vmem:[%s614 + $0x38] sm:$0xff]
      %717 = vset.pattern.permute.xlu0 0
      %718 = vperm.xlu0 %717, %v709
      %v719 = vpop.permute.xlu0 %718
      %720 = vset.pattern.permute.xlu0 0
      %721 = vperm.xlu0 %720, %v710
      %v722 = vpop.permute.xlu0 %721
      %723 = vset.pattern.permute.xlu0 0
      %724 = vperm.xlu0 %723, %v711
      %v725 = vpop.permute.xlu0 %724
      %726 = vset.pattern.permute.xlu0 0
      %727 = vperm.xlu0 %726, %v712
      %v728 = vpop.permute.xlu0 %727
      %729 = vset.pattern.permute.xlu0 0
      %730 = vperm.xlu0 %729, %v713
      %v731 = vpop.permute.xlu0 %730
      %732 = vset.pattern.permute.xlu0 0
      %733 = vperm.xlu0 %732, %v714
      %v734 = vpop.permute.xlu0 %733
      %735 = vset.pattern.permute.xlu0 0
      %736 = vperm.xlu0 %735, %v715
      %v737 = vpop.permute.xlu0 %736
      %738 = vset.pattern.permute.xlu0 0
      %739 = vperm.xlu0 %738, %v716
      %v740 = vpop.permute.xlu0 %739
      %vm741 = vcmp.eq.s32.totalorder %v708, %v719
      %vm742 = vcmp.eq.s32.totalorder %v708, %v722
      %vm743 = vcmp.eq.s32.totalorder %v708, %v725
      %vm744 = vcmp.eq.s32.totalorder %v708, %v728
      %vm745 = vcmp.eq.s32.totalorder %v708, %v731
      %vm746 = vcmp.eq.s32.totalorder %v708, %v734
      %vm747 = vcmp.eq.s32.totalorder %v708, %v737
      %vm748 = vcmp.eq.s32.totalorder %v708, %v740
      %v749 = vsel %vm741, 1, 0
      %v750 = vsel %vm742, 1, 0
      %v751 = vsel %vm743, 1, 0
      %v752 = vsel %vm744, 1, 0
      %v753 = vsel %vm745, 1, 0
      %v754 = vsel %vm746, 1, 0
      %v755 = vsel %vm747, 1, 0
      %v756 = vsel %vm748, 1, 0
      %v757 = vcvt.s32.f32 %v749
      %v758 = vcvt.s32.f32 %v750
      %v759 = vcvt.s32.f32 %v751
      %v760 = vcvt.s32.f32 %v752
      %v761 = vcvt.s32.f32 %v753
      %v762 = vcvt.s32.f32 %v754
      %v763 = vcvt.s32.f32 %v755
      %v764 = vcvt.s32.f32 %v756
      %v765 = vld [vmem:[%s2] sm:$0xff]
      %v766 = vld [vmem:[%s2 + $0x8] sm:$0xff]
      %v767 = vld [vmem:[%s2 + $0x10] sm:$0xff]
      %v768 = vld [vmem:[%s2 + $0x18] sm:$0xff]
      %v769 = vld [vmem:[%s2 + $0x20] sm:$0xff]
      %v770 = vld [vmem:[%s2 + $0x28] sm:$0xff]
      %v771 = vld [vmem:[%s2 + $0x30] sm:$0xff]
      %v772 = vld [vmem:[%s2 + $0x38] sm:$0xff]
      %v773 = vld [vmem:[%s2 + $0x40] sm:$0x3f]
      %vm774 = vcmask 572416
      %v776 = vsel %vm774, %v757, 0
      %v779 = vsel %vm774, %v758, 0
      %v782 = vsel %vm774, %v759, 0
      %v785 = vsel %vm774, %v760, 0
      %v788 = vsel %vm774, %v761, 0
      %v791 = vsel %vm774, %v762, 0
      %v794 = vsel %vm774, %v763, 0
      %v797 = vsel %vm774, %v764, 0
      %v800 = vsel %vm633, %v773, 0
      %802 = vmatprep.subr.mxu0 0.0
      %803 = vmatpush1.msra.mxu0 %v765
      %804 = vmatprep.subr.mxu0 0.0
      %805 = vmatpush1.msra.mxu0 %v766
      %806 = vmatprep.subr.mxu0 0.0
      %807 = vmatpush1.msra.mxu0 %v767
      %808 = vmatprep.subr.mxu0 0.0
      %809 = vmatpush1.msra.mxu0 %v768
      %810 = vmatprep.subr.mxu0 0.0
      %811 = vmatpush1.msra.mxu0 %v769
      %812 = vmatprep.subr.mxu0 0.0
      %813 = vmatpush1.msra.mxu0 %v770
      %814 = vmatprep.subr.mxu0 0.0
      %815 = vmatpush1.msra.mxu0 %v771
      %816 = vmatprep.subr.mxu0 0.0
      %817 = vmatpush1.msra.mxu0 %v772
      %818 = vmatprep.subr.mxu0 0.0
      %819 = vmatpush1.msra.mxu0 %v800
      %820 = vmatprep.subr.mxu0 0.0
      %821 = vmatpush1.msra.mxu0 0.0
      %822 = vmatprep.subr.mxu0 0.0
      %823 = vmatpush1.msra.mxu0 0.0
      %824 = vmatprep.subr.mxu0 0.0
      %825 = vmatpush1.msra.mxu0 0.0
      %826 = vmatprep.subr.mxu0 0.0
      %827 = vmatpush1.msra.mxu0 0.0
      %828 = vmatprep.subr.mxu0 0.0
      %829 = vmatpush1.msra.mxu0 0.0
      %830 = vmatprep.subr.mxu0 0.0
      %831 = vmatpush1.msra.mxu0 0.0
      %832 = vmatprep.subr.mxu0 0.0
      %833 = vmatpush1.msra.mxu0 0.0
      %834 = vmatprep.subr.mxu0 0.0
      %835 = vmatpush1.msra.mxu0 0.0
      %836 = vmatprep.subr.mxu0 0.0
      %837 = vmatpush1.msra.mxu0 0.0
      %838 = vmatprep.subr.mxu0 0.0
      %839 = vmatpush1.msra.mxu0 0.0
      %840 = vmatprep.subr.mxu0 0.0
      %841 = vmatpush1.msra.mxu0 0.0
      %842 = vmatprep.subr.mxu0 0.0
      %843 = vmatpush1.msra.mxu0 0.0
      %844 = vmatprep.subr.mxu0 0.0
      %845 = vmatpush1.msra.mxu0 0.0
      %846 = vmatprep.subr.mxu0 0.0
      %847 = vmatpush1.msra.mxu0 0.0
      %848 = vmatprep.subr.mxu0 0.0
      %849 = vmatpush1.msra.mxu0 0.0
      %850 = vmatprep.subr.mxu0 0.0
      %851 = vmatpush1.msra.mxu0 0.0
      %852 = vmatprep.subr.mxu0 0.0
      %853 = vmatpush1.msra.mxu0 0.0
      %854 = vmatprep.subr.mxu0 0.0
      %855 = vmatpush1.msra.mxu0 0.0
      %856 = vmatprep.subr.mxu0 0.0
      %857 = vmatpush1.msra.mxu0 0.0
      %858 = vmatprep.subr.mxu0 0.0
      %859 = vmatpush1.msra.mxu0 0.0
      %860 = vmatprep.subr.mxu0 0.0
      %861 = vmatpush1.msra.mxu0 0.0
      %862 = vmatprep.subr.mxu0 0.0
      %863 = vmatpush1.msra.mxu0 0.0
      %864 = vmatprep.subr.mxu0 0.0
      %865 = vmatpush1.msra.mxu0 0.0
      %866 = vmatprep.mubr.f32.mxu0 0.0
      %867 = vmatmul.mubr.f32.gmra.mrb[0].mxu0 %v776
      %v868 = vpop.f32.mrb[0].mxu0
      %v869 = vadd.f32 0.0, %v868
      %v870 = vpop.f32.mrb[0].mxu0
      %871 = vmatprep.mubr.f32.mxu0 0.0
      %872 = vmatmul.mubr.f32.gmra.mrb[0].mxu0 %v779
      %v873 = vpop.f32.mrb[0].mxu0
      %v874 = vadd.f32 0.0, %v873
      %v875 = vpop.f32.mrb[0].mxu0
      %876 = vmatprep.mubr.f32.mxu0 0.0
      %877 = vmatmul.mubr.f32.gmra.mrb[0].mxu0 %v782
      %v878 = vpop.f32.mrb[0].mxu0
      %v879 = vadd.f32 0.0, %v878
      %v880 = vpop.f32.mrb[0].mxu0
      %881 = vmatprep.mubr.f32.mxu0 0.0
      %882 = vmatmul.mubr.f32.gmra.mrb[0].mxu0 %v785
      %v883 = vpop.f32.mrb[0].mxu0
      %v884 = vadd.f32 0.0, %v883
      %v885 = vpop.f32.mrb[0].mxu0
      %886 = vmatprep.mubr.f32.mxu0 0.0
      %887 = vmatmul.mubr.f32.gmra.mrb[0].mxu0 %v788
      %v888 = vpop.f32.mrb[0].mxu0
      %v889 = vadd.f32 0.0, %v888
      %v890 = vpop.f32.mrb[0].mxu0
      %891 = vmatprep.mubr.f32.mxu0 0.0
      %892 = vmatmul.mubr.f32.gmra.mrb[0].mxu0 %v791
      %v893 = vpop.f32.mrb[0].mxu0
      %v894 = vadd.f32 0.0, %v893
      %v895 = vpop.f32.mrb[0].mxu0
      %896 = vmatprep.mubr.f32.mxu0 0.0
      %897 = vmatmul.mubr.f32.gmra.mrb[0].mxu0 %v794
      %v898 = vpop.f32.mrb[0].mxu0
      %v899 = vadd.f32 0.0, %v898
      %v900 = vpop.f32.mrb[0].mxu0
      %901 = vmatprep.mubr.f32.mxu0 0.0
      %902 = vmatmul.mubr.f32.gmra.mrb[0].mxu0 %v797
      %v903 = vpop.f32.mrb[0].mxu0
      %v904 = vadd.f32 0.0, %v903
      %v905 = vpop.f32.mrb[0].mxu0
      %906 = vdwg.mxu0
      %v907 = vlaneseq
      %v908 = vshrl.u32 %v907, 7
      %vm909 = vcmp.eq.s32.totalorder %v908, 0
      %v911 = vcombine.high %v704, %v704
      %v913 = vunpack.c.l.s4 1966171168
      %v914 = vunpack.c.0.s8 %v913
      %v915 = vlaneseq
      %v916 = vshrl.u32 %v915, 7
      %v917 = vsub.s32 %v914, %v916
      %v918 = vrot.slane %v704, %v917
      %v920 = vunpack.c.l.s4 1966171168
      %v921 = vunpack.c.0.s8 %v920
      %v922 = vlaneseq
      %v923 = vshrl.u32 %v922, 7
      %v924 = vsub.s32 %v921, %v923
      %v925 = vrot.slane %v911, %v924
      %v926 = vcombine.high %v918, %v918
      %v927 = vcombine.high %v925, %v925
      %v929 = vunpack.c.l.s4 1966171168
      %v930 = vunpack.c.0.s8 %v929
      %v931 = vlaneseq
      %v932 = vshrl.u32 %v931, 7
      %v933 = vsub.s32 %v930, %v932
      %v934 = vrot.slane %v918, %v933
      %v936 = vunpack.c.l.s4 1966171168
      %v937 = vunpack.c.0.s8 %v936
      %v938 = vlaneseq
      %v939 = vshrl.u32 %v938, 7
      %v940 = vsub.s32 %v937, %v939
      %v941 = vrot.slane %v925, %v940
      %v943 = vunpack.c.l.s4 1966171168
      %v944 = vunpack.c.0.s8 %v943
      %v945 = vlaneseq
      %v946 = vshrl.u32 %v945, 7
      %v947 = vsub.s32 %v944, %v946
      %v948 = vrot.slane %v926, %v947
      %v950 = vunpack.c.l.s4 1966171168
      %v951 = vunpack.c.0.s8 %v950
      %v952 = vlaneseq
      %v953 = vshrl.u32 %v952, 7
      %v954 = vsub.s32 %v951, %v953
      %v955 = vrot.slane %v927, %v954
      %v956 = vcombine.high %v934, %v934
      %v957 = vcombine.high %v941, %v941
      %v958 = vcombine.high %v948, %v948
      %v959 = vcombine.high %v955, %v955
      %v960 = vlaneseq
      %v961 = vshrl.u32 %v960, 7
      %v962 = vsub.s32 0, %v961
      %v963 = vrot.slane %v934, %v962
      %v964 = vlaneseq
      %v965 = vshrl.u32 %v964, 7
      %v966 = vsub.s32 0, %v965
      %v967 = vrot.slane %v948, %v966
      %v968 = vlaneseq
      %v969 = vshrl.u32 %v968, 7
      %v970 = vsub.s32 0, %v969
      %v971 = vrot.slane %v956, %v970
      %v972 = vlaneseq
      %v973 = vshrl.u32 %v972, 7
      %v974 = vsub.s32 0, %v973
      %v975 = vrot.slane %v958, %v974
      %v976 = vlaneseq
      %v977 = vshrl.u32 %v976, 7
      %v978 = vsub.s32 0, %v977
      %v979 = vrot.slane %v941, %v978
      %v980 = vlaneseq
      %v981 = vshrl.u32 %v980, 7
      %v982 = vsub.s32 0, %v981
      %v983 = vrot.slane %v955, %v982
      %v984 = vlaneseq
      %v985 = vshrl.u32 %v984, 7
      %v986 = vsub.s32 0, %v985
      %v987 = vrot.slane %v957, %v986
      %v988 = vlaneseq
      %v989 = vshrl.u32 %v988, 7
      %v990 = vsub.s32 0, %v989
      %v991 = vrot.slane %v959, %v990
      %v1000 = vsel %vm909, %v963, %v869
      %v1001 = vsel %vm909, %v967, %v874
      %v1002 = vsel %vm909, %v971, %v879
      %v1003 = vsel %vm909, %v975, %v884
      %v1004 = vsel %vm909, %v979, %v889
      %v1005 = vsel %vm909, %v983, %v894
      %v1006 = vsel %vm909, %v987, %v899
      %v1007 = vsel %vm909, %v991, %v904
      %v1008 = vld [vmem:[%s5] sm:$0xff]
      %v1009 = vld [vmem:[%s5 + $0x8] sm:$0xff]
      %v1010 = vld [vmem:[%s6] sm:$0x1]
      %v1012 = vlaneseq
      %v1013 = vshrl.u32 %v1012, 7
      %v1014 = vsub.s32 0, %v1013
      %v1015 = vrot.slane %v1010, %v1014
      %vm1017 = vcmask 130048
      %v1019 = vsel %vm1017, %v1000, 0
      %v1022 = vsel %vm1017, %v1001, 0
      %v1025 = vsel %vm1017, %v1002, 0
      %v1028 = vsel %vm1017, %v1003, 0
      %v1031 = vsel %vm1017, %v1004, 0
      %v1034 = vsel %vm1017, %v1005, 0
      %v1037 = vsel %vm1017, %v1006, 0
      %v1040 = vsel %vm1017, %v1007, 0
      %1042 = vmatprep.subr.mxu0 0.0
      %1043 = vmatpush1.msra.mxu0 %v1008
      %1044 = vmatprep.subr.mxu0 0.0
      %1045 = vmatpush1.msra.mxu0 %v1009
      %1046 = vmatprep.subr.mxu0 0.0
      %1047 = vmatpush1.msra.mxu0 0.0
      %1048 = vmatprep.subr.mxu0 0.0
      %1049 = vmatpush1.msra.mxu0 0.0
      %1050 = vmatprep.subr.mxu0 0.0
      %1051 = vmatpush1.msra.mxu0 0.0
      %1052 = vmatprep.subr.mxu0 0.0
      %1053 = vmatpush1.msra.mxu0 0.0
      %1054 = vmatprep.subr.mxu0 0.0
      %1055 = vmatpush1.msra.mxu0 0.0
      %1056 = vmatprep.subr.mxu0 0.0
      %1057 = vmatpush1.msra.mxu0 0.0
      %1058 = vmatprep.subr.mxu0 0.0
      %1059 = vmatpush1.msra.mxu0 0.0
      %1060 = vmatprep.subr.mxu0 0.0
      %1061 = vmatpush1.msra.mxu0 0.0
      %1062 = vmatprep.subr.mxu0 0.0
      %1063 = vmatpush1.msra.mxu0 0.0
      %1064 = vmatprep.subr.mxu0 0.0
      %1065 = vmatpush1.msra.mxu0 0.0
      %1066 = vmatprep.subr.mxu0 0.0
      %1067 = vmatpush1.msra.mxu0 0.0
      %1068 = vmatprep.subr.mxu0 0.0
      %1069 = vmatpush1.msra.mxu0 0.0
      %1070 = vmatprep.subr.mxu0 0.0
      %1071 = vmatpush1.msra.mxu0 0.0
      %1072 = vmatprep.subr.mxu0 0.0
      %1073 = vmatpush1.msra.mxu0 0.0
      %1074 = vmatprep.subr.mxu0 0.0
      %1075 = vmatpush1.msra.mxu0 0.0
      %1076 = vmatprep.subr.mxu0 0.0
      %1077 = vmatpush1.msra.mxu0 0.0
      %1078 = vmatprep.subr.mxu0 0.0
      %1079 = vmatpush1.msra.mxu0 0.0
      %1080 = vmatprep.subr.mxu0 0.0
      %1081 = vmatpush1.msra.mxu0 0.0
      %1082 = vmatprep.subr.mxu0 0.0
      %1083 = vmatpush1.msra.mxu0 0.0
      %1084 = vmatprep.subr.mxu0 0.0
      %1085 = vmatpush1.msra.mxu0 0.0
      %1086 = vmatprep.subr.mxu0 0.0
      %1087 = vmatpush1.msra.mxu0 0.0
      %1088 = vmatprep.subr.mxu0 0.0
      %1089 = vmatpush1.msra.mxu0 0.0
      %1090 = vmatprep.subr.mxu0 0.0
      %1091 = vmatpush1.msra.mxu0 0.0
      %1092 = vmatprep.subr.mxu0 0.0
      %1093 = vmatpush1.msra.mxu0 0.0
      %1094 = vmatprep.subr.mxu0 0.0
      %1095 = vmatpush1.msra.mxu0 0.0
      %1096 = vmatprep.subr.mxu0 0.0
      %1097 = vmatpush1.msra.mxu0 0.0
      %1098 = vmatprep.subr.mxu0 0.0
      %1099 = vmatpush1.msra.mxu0 0.0
      %1100 = vmatprep.subr.mxu0 0.0
      %1101 = vmatpush1.msra.mxu0 0.0
      %1102 = vmatprep.subr.mxu0 0.0
      %1103 = vmatpush1.msra.mxu0 0.0
      %1104 = vmatprep.subr.mxu0 0.0
      %1105 = vmatpush1.msra.mxu0 0.0
      %1106 = vmatprep.mubr.f32.mxu0 0.0
      %1107 = vmatmul.mubr.f32.gmra.mrb[0].mxu0 %v1019
      %v1108 = vpop.f32.mrb[0].mxu0
      %v1109 = vadd.f32 %v1015, %v1108
      %v1110 = vpop.f32.mrb[0].mxu0
      %1111 = vmatprep.mubr.f32.mxu0 0.0
      %1112 = vmatmul.mubr.f32.gmra.mrb[0].mxu0 %v1022
      %v1113 = vpop.f32.mrb[0].mxu0
      %v1114 = vadd.f32 %v1015, %v1113
      %v1115 = vpop.f32.mrb[0].mxu0
      %1116 = vmatprep.mubr.f32.mxu0 0.0
      %1117 = vmatmul.mubr.f32.gmra.mrb[0].mxu0 %v1025
      %v1118 = vpop.f32.mrb[0].mxu0
      %v1119 = vadd.f32 %v1015, %v1118
      %v1120 = vpop.f32.mrb[0].mxu0
      %1121 = vmatprep.mubr.f32.mxu0 0.0
      %1122 = vmatmul.mubr.f32.gmra.mrb[0].mxu0 %v1028
      %v1123 = vpop.f32.mrb[0].mxu0
      %v1124 = vadd.f32 %v1015, %v1123
      %v1125 = vpop.f32.mrb[0].mxu0
      %1126 = vmatprep.mubr.f32.mxu0 0.0
      %1127 = vmatmul.mubr.f32.gmra.mrb[0].mxu0 %v1031
      %v1128 = vpop.f32.mrb[0].mxu0
      %v1129 = vadd.f32 %v1015, %v1128
      %v1130 = vpop.f32.mrb[0].mxu0
      %1131 = vmatprep.mubr.f32.mxu0 0.0
      %1132 = vmatmul.mubr.f32.gmra.mrb[0].mxu0 %v1034
      %v1133 = vpop.f32.mrb[0].mxu0
      %v1134 = vadd.f32 %v1015, %v1133
      %v1135 = vpop.f32.mrb[0].mxu0
      %1136 = vmatprep.mubr.f32.mxu0 0.0
      %1137 = vmatmul.mubr.f32.gmra.mrb[0].mxu0 %v1037
      %v1138 = vpop.f32.mrb[0].mxu0
      %v1139 = vadd.f32 %v1015, %v1138
      %v1140 = vpop.f32.mrb[0].mxu0
      %1141 = vmatprep.mubr.f32.mxu0 0.0
      %1142 = vmatmul.mubr.f32.gmra.mrb[0].mxu0 %v1040
      %v1143 = vpop.f32.mrb[0].mxu0
      %v1144 = vadd.f32 %v1015, %v1143
      %v1145 = vpop.f32.mrb[0].mxu0
      %1146 = vdwg.mxu0
      %v1155 = vcombine.high %v1109, %v1109
      %v1157 = vunpack.c.l.s4 1966171168
      %v1158 = vunpack.c.0.s8 %v1157
      %v1159 = vlaneseq
      %v1160 = vshrl.u32 %v1159, 7
      %v1161 = vsub.s32 %v1158, %v1160
      %v1162 = vrot.slane %v1109, %v1161
      %v1164 = vunpack.c.l.s4 1966171168
      %v1165 = vunpack.c.0.s8 %v1164
      %v1166 = vlaneseq
      %v1167 = vshrl.u32 %v1166, 7
      %v1168 = vsub.s32 %v1165, %v1167
      %v1169 = vrot.slane %v1155, %v1168
      %v1170 = vcombine.high %v1162, %v1162
      %v1171 = vcombine.high %v1169, %v1169
      %v1173 = vunpack.c.l.s4 1966171168
      %v1174 = vunpack.c.0.s8 %v1173
      %v1175 = vlaneseq
      %v1176 = vshrl.u32 %v1175, 7
      %v1177 = vsub.s32 %v1174, %v1176
      %v1178 = vrot.slane %v1162, %v1177
      %v1180 = vunpack.c.l.s4 1966171168
      %v1181 = vunpack.c.0.s8 %v1180
      %v1182 = vlaneseq
      %v1183 = vshrl.u32 %v1182, 7
      %v1184 = vsub.s32 %v1181, %v1183
      %v1185 = vrot.slane %v1169, %v1184
      %v1187 = vunpack.c.l.s4 1966171168
      %v1188 = vunpack.c.0.s8 %v1187
      %v1189 = vlaneseq
      %v1190 = vshrl.u32 %v1189, 7
      %v1191 = vsub.s32 %v1188, %v1190
      %v1192 = vrot.slane %v1170, %v1191
      %v1194 = vunpack.c.l.s4 1966171168
      %v1195 = vunpack.c.0.s8 %v1194
      %v1196 = vlaneseq
      %v1197 = vshrl.u32 %v1196, 7
      %v1198 = vsub.s32 %v1195, %v1197
      %v1199 = vrot.slane %v1171, %v1198
      %v1200 = vcombine.high %v1178, %v1178
      %v1201 = vcombine.high %v1185, %v1185
      %v1202 = vcombine.high %v1192, %v1192
      %v1203 = vcombine.high %v1199, %v1199
      %v1204 = vcombine.high %v1114, %v1114
      %v1206 = vunpack.c.l.s4 1966171168
      %v1207 = vunpack.c.0.s8 %v1206
      %v1208 = vlaneseq
      %v1209 = vshrl.u32 %v1208, 7
      %v1210 = vsub.s32 %v1207, %v1209
      %v1211 = vrot.slane %v1114, %v1210
      %v1213 = vunpack.c.l.s4 1966171168
      %v1214 = vunpack.c.0.s8 %v1213
      %v1215 = vlaneseq
      %v1216 = vshrl.u32 %v1215, 7
      %v1217 = vsub.s32 %v1214, %v1216
      %v1218 = vrot.slane %v1204, %v1217
      %v1219 = vcombine.high %v1211, %v1211
      %v1220 = vcombine.high %v1218, %v1218
      %v1222 = vunpack.c.l.s4 1966171168
      %v1223 = vunpack.c.0.s8 %v1222
      %v1224 = vlaneseq
      %v1225 = vshrl.u32 %v1224, 7
      %v1226 = vsub.s32 %v1223, %v1225
      %v1227 = vrot.slane %v1211, %v1226
      %v1229 = vunpack.c.l.s4 1966171168
      %v1230 = vunpack.c.0.s8 %v1229
      %v1231 = vlaneseq
      %v1232 = vshrl.u32 %v1231, 7
      %v1233 = vsub.s32 %v1230, %v1232
      %v1234 = vrot.slane %v1218, %v1233
      %v1236 = vunpack.c.l.s4 1966171168
      %v1237 = vunpack.c.0.s8 %v1236
      %v1238 = vlaneseq
      %v1239 = vshrl.u32 %v1238, 7
      %v1240 = vsub.s32 %v1237, %v1239
      %v1241 = vrot.slane %v1219, %v1240
      %v1243 = vunpack.c.l.s4 1966171168
      %v1244 = vunpack.c.0.s8 %v1243
      %v1245 = vlaneseq
      %v1246 = vshrl.u32 %v1245, 7
      %v1247 = vsub.s32 %v1244, %v1246
      %v1248 = vrot.slane %v1220, %v1247
      %v1249 = vcombine.high %v1227, %v1227
      %v1250 = vcombine.high %v1234, %v1234
      %v1251 = vcombine.high %v1241, %v1241
      %v1252 = vcombine.high %v1248, %v1248
      %v1253 = vcombine.high %v1119, %v1119
      %v1255 = vunpack.c.l.s4 1966171168
      %v1256 = vunpack.c.0.s8 %v1255
      %v1257 = vlaneseq
      %v1258 = vshrl.u32 %v1257, 7
      %v1259 = vsub.s32 %v1256, %v1258
      %v1260 = vrot.slane %v1119, %v1259
      %v1262 = vunpack.c.l.s4 1966171168
      %v1263 = vunpack.c.0.s8 %v1262
      %v1264 = vlaneseq
      %v1265 = vshrl.u32 %v1264, 7
      %v1266 = vsub.s32 %v1263, %v1265
      %v1267 = vrot.slane %v1253, %v1266
      %v1268 = vcombine.high %v1260, %v1260
      %v1269 = vcombine.high %v1267, %v1267
      %v1271 = vunpack.c.l.s4 1966171168
      %v1272 = vunpack.c.0.s8 %v1271
      %v1273 = vlaneseq
      %v1274 = vshrl.u32 %v1273, 7
      %v1275 = vsub.s32 %v1272, %v1274
      %v1276 = vrot.slane %v1260, %v1275
      %v1278 = vunpack.c.l.s4 1966171168
      %v1279 = vunpack.c.0.s8 %v1278
      %v1280 = vlaneseq
      %v1281 = vshrl.u32 %v1280, 7
      %v1282 = vsub.s32 %v1279, %v1281
      %v1283 = vrot.slane %v1267, %v1282
      %v1285 = vunpack.c.l.s4 1966171168
      %v1286 = vunpack.c.0.s8 %v1285
      %v1287 = vlaneseq
      %v1288 = vshrl.u32 %v1287, 7
      %v1289 = vsub.s32 %v1286, %v1288
      %v1290 = vrot.slane %v1268, %v1289
      %v1292 = vunpack.c.l.s4 1966171168
      %v1293 = vunpack.c.0.s8 %v1292
      %v1294 = vlaneseq
      %v1295 = vshrl.u32 %v1294, 7
      %v1296 = vsub.s32 %v1293, %v1295
      %v1297 = vrot.slane %v1269, %v1296
      %v1298 = vcombine.high %v1276, %v1276
      %v1299 = vcombine.high %v1283, %v1283
      %v1300 = vcombine.high %v1290, %v1290
      %v1301 = vcombine.high %v1297, %v1297
      %v1302 = vcombine.high %v1124, %v1124
      %v1304 = vunpack.c.l.s4 1966171168
      %v1305 = vunpack.c.0.s8 %v1304
      %v1306 = vlaneseq
      %v1307 = vshrl.u32 %v1306, 7
      %v1308 = vsub.s32 %v1305, %v1307
      %v1309 = vrot.slane %v1124, %v1308
      %v1311 = vunpack.c.l.s4 1966171168
      %v1312 = vunpack.c.0.s8 %v1311
      %v1313 = vlaneseq
      %v1314 = vshrl.u32 %v1313, 7
      %v1315 = vsub.s32 %v1312, %v1314
      %v1316 = vrot.slane %v1302, %v1315
      %v1317 = vcombine.high %v1309, %v1309
      %v1318 = vcombine.high %v1316, %v1316
      %v1320 = vunpack.c.l.s4 1966171168
      %v1321 = vunpack.c.0.s8 %v1320
      %v1322 = vlaneseq
      %v1323 = vshrl.u32 %v1322, 7
      %v1324 = vsub.s32 %v1321, %v1323
      %v1325 = vrot.slane %v1309, %v1324
      %v1327 = vunpack.c.l.s4 1966171168
      %v1328 = vunpack.c.0.s8 %v1327
      %v1329 = vlaneseq
      %v1330 = vshrl.u32 %v1329, 7
      %v1331 = vsub.s32 %v1328, %v1330
      %v1332 = vrot.slane %v1316, %v1331
      %v1334 = vunpack.c.l.s4 1966171168
      %v1335 = vunpack.c.0.s8 %v1334
      %v1336 = vlaneseq
      %v1337 = vshrl.u32 %v1336, 7
      %v1338 = vsub.s32 %v1335, %v1337
      %v1339 = vrot.slane %v1317, %v1338
      %v1341 = vunpack.c.l.s4 1966171168
      %v1342 = vunpack.c.0.s8 %v1341
      %v1343 = vlaneseq
      %v1344 = vshrl.u32 %v1343, 7
      %v1345 = vsub.s32 %v1342, %v1344
      %v1346 = vrot.slane %v1318, %v1345
      %v1347 = vcombine.high %v1325, %v1325
      %v1348 = vcombine.high %v1332, %v1332
      %v1349 = vcombine.high %v1339, %v1339
      %v1350 = vcombine.high %v1346, %v1346
      %v1351 = vcombine.high %v1129, %v1129
      %v1353 = vunpack.c.l.s4 1966171168
      %v1354 = vunpack.c.0.s8 %v1353
      %v1355 = vlaneseq
      %v1356 = vshrl.u32 %v1355, 7
      %v1357 = vsub.s32 %v1354, %v1356
      %v1358 = vrot.slane %v1129, %v1357
      %v1360 = vunpack.c.l.s4 1966171168
      %v1361 = vunpack.c.0.s8 %v1360
      %v1362 = vlaneseq
      %v1363 = vshrl.u32 %v1362, 7
      %v1364 = vsub.s32 %v1361, %v1363
      %v1365 = vrot.slane %v1351, %v1364
      %v1366 = vcombine.high %v1358, %v1358
      %v1367 = vcombine.high %v1365, %v1365
      %v1369 = vunpack.c.l.s4 1966171168
      %v1370 = vunpack.c.0.s8 %v1369
      %v1371 = vlaneseq
      %v1372 = vshrl.u32 %v1371, 7
      %v1373 = vsub.s32 %v1370, %v1372
      %v1374 = vrot.slane %v1358, %v1373
      %v1376 = vunpack.c.l.s4 1966171168
      %v1377 = vunpack.c.0.s8 %v1376
      %v1378 = vlaneseq
      %v1379 = vshrl.u32 %v1378, 7
      %v1380 = vsub.s32 %v1377, %v1379
      %v1381 = vrot.slane %v1365, %v1380
      %v1383 = vunpack.c.l.s4 1966171168
      %v1384 = vunpack.c.0.s8 %v1383
      %v1385 = vlaneseq
      %v1386 = vshrl.u32 %v1385, 7
      %v1387 = vsub.s32 %v1384, %v1386
      %v1388 = vrot.slane %v1366, %v1387
      %v1390 = vunpack.c.l.s4 1966171168
      %v1391 = vunpack.c.0.s8 %v1390
      %v1392 = vlaneseq
      %v1393 = vshrl.u32 %v1392, 7
      %v1394 = vsub.s32 %v1391, %v1393
      %v1395 = vrot.slane %v1367, %v1394
      %v1396 = vcombine.high %v1374, %v1374
      %v1397 = vcombine.high %v1381, %v1381
      %v1398 = vcombine.high %v1388, %v1388
      %v1399 = vcombine.high %v1395, %v1395
      %v1400 = vcombine.high %v1134, %v1134
      %v1402 = vunpack.c.l.s4 1966171168
      %v1403 = vunpack.c.0.s8 %v1402
      %v1404 = vlaneseq
      %v1405 = vshrl.u32 %v1404, 7
      %v1406 = vsub.s32 %v1403, %v1405
      %v1407 = vrot.slane %v1134, %v1406
      %v1409 = vunpack.c.l.s4 1966171168
      %v1410 = vunpack.c.0.s8 %v1409
      %v1411 = vlaneseq
      %v1412 = vshrl.u32 %v1411, 7
      %v1413 = vsub.s32 %v1410, %v1412
      %v1414 = vrot.slane %v1400, %v1413
      %v1415 = vcombine.high %v1407, %v1407
      %v1416 = vcombine.high %v1414, %v1414
      %v1418 = vunpack.c.l.s4 1966171168
      %v1419 = vunpack.c.0.s8 %v1418
      %v1420 = vlaneseq
      %v1421 = vshrl.u32 %v1420, 7
      %v1422 = vsub.s32 %v1419, %v1421
      %v1423 = vrot.slane %v1407, %v1422
      %v1425 = vunpack.c.l.s4 1966171168
      %v1426 = vunpack.c.0.s8 %v1425
      %v1427 = vlaneseq
      %v1428 = vshrl.u32 %v1427, 7
      %v1429 = vsub.s32 %v1426, %v1428
      %v1430 = vrot.slane %v1414, %v1429
      %v1432 = vunpack.c.l.s4 1966171168
      %v1433 = vunpack.c.0.s8 %v1432
      %v1434 = vlaneseq
      %v1435 = vshrl.u32 %v1434, 7
      %v1436 = vsub.s32 %v1433, %v1435
      %v1437 = vrot.slane %v1415, %v1436
      %v1439 = vunpack.c.l.s4 1966171168
      %v1440 = vunpack.c.0.s8 %v1439
      %v1441 = vlaneseq
      %v1442 = vshrl.u32 %v1441, 7
      %v1443 = vsub.s32 %v1440, %v1442
      %v1444 = vrot.slane %v1416, %v1443
      %v1445 = vcombine.high %v1423, %v1423
      %v1446 = vcombine.high %v1430, %v1430
      %v1447 = vcombine.high %v1437, %v1437
      %v1448 = vcombine.high %v1444, %v1444
      %v1449 = vcombine.high %v1139, %v1139
      %v1451 = vunpack.c.l.s4 1966171168
      %v1452 = vunpack.c.0.s8 %v1451
      %v1453 = vlaneseq
      %v1454 = vshrl.u32 %v1453, 7
      %v1455 = vsub.s32 %v1452, %v1454
      %v1456 = vrot.slane %v1139, %v1455
      %v1458 = vunpack.c.l.s4 1966171168
      %v1459 = vunpack.c.0.s8 %v1458
      %v1460 = vlaneseq
      %v1461 = vshrl.u32 %v1460, 7
      %v1462 = vsub.s32 %v1459, %v1461
      %v1463 = vrot.slane %v1449, %v1462
      %v1464 = vcombine.high %v1456, %v1456
      %v1465 = vcombine.high %v1463, %v1463
      %v1467 = vunpack.c.l.s4 1966171168
      %v1468 = vunpack.c.0.s8 %v1467
      %v1469 = vlaneseq
      %v1470 = vshrl.u32 %v1469, 7
      %v1471 = vsub.s32 %v1468, %v1470
      %v1472 = vrot.slane %v1456, %v1471
      %v1474 = vunpack.c.l.s4 1966171168
      %v1475 = vunpack.c.0.s8 %v1474
      %v1476 = vlaneseq
      %v1477 = vshrl.u32 %v1476, 7
      %v1478 = vsub.s32 %v1475, %v1477
      %v1479 = vrot.slane %v1463, %v1478
      %v1481 = vunpack.c.l.s4 1966171168
      %v1482 = vunpack.c.0.s8 %v1481
      %v1483 = vlaneseq
      %v1484 = vshrl.u32 %v1483, 7
      %v1485 = vsub.s32 %v1482, %v1484
      %v1486 = vrot.slane %v1464, %v1485
      %v1488 = vunpack.c.l.s4 1966171168
      %v1489 = vunpack.c.0.s8 %v1488
      %v1490 = vlaneseq
      %v1491 = vshrl.u32 %v1490, 7
      %v1492 = vsub.s32 %v1489, %v1491
      %v1493 = vrot.slane %v1465, %v1492
      %v1494 = vcombine.high %v1472, %v1472
      %v1495 = vcombine.high %v1479, %v1479
      %v1496 = vcombine.high %v1486, %v1486
      %v1497 = vcombine.high %v1493, %v1493
      %v1498 = vcombine.high %v1144, %v1144
      %v1500 = vunpack.c.l.s4 1966171168
      %v1501 = vunpack.c.0.s8 %v1500
      %v1502 = vlaneseq
      %v1503 = vshrl.u32 %v1502, 7
      %v1504 = vsub.s32 %v1501, %v1503
      %v1505 = vrot.slane %v1144, %v1504
      %v1507 = vunpack.c.l.s4 1966171168
      %v1508 = vunpack.c.0.s8 %v1507
      %v1509 = vlaneseq
      %v1510 = vshrl.u32 %v1509, 7
      %v1511 = vsub.s32 %v1508, %v1510
      %v1512 = vrot.slane %v1498, %v1511
      %v1513 = vcombine.high %v1505, %v1505
      %v1514 = vcombine.high %v1512, %v1512
      %v1516 = vunpack.c.l.s4 1966171168
      %v1517 = vunpack.c.0.s8 %v1516
      %v1518 = vlaneseq
      %v1519 = vshrl.u32 %v1518, 7
      %v1520 = vsub.s32 %v1517, %v1519
      %v1521 = vrot.slane %v1505, %v1520
      %v1523 = vunpack.c.l.s4 1966171168
      %v1524 = vunpack.c.0.s8 %v1523
      %v1525 = vlaneseq
      %v1526 = vshrl.u32 %v1525, 7
      %v1527 = vsub.s32 %v1524, %v1526
      %v1528 = vrot.slane %v1512, %v1527
      %v1530 = vunpack.c.l.s4 1966171168
      %v1531 = vunpack.c.0.s8 %v1530
      %v1532 = vlaneseq
      %v1533 = vshrl.u32 %v1532, 7
      %v1534 = vsub.s32 %v1531, %v1533
      %v1535 = vrot.slane %v1513, %v1534
      %v1537 = vunpack.c.l.s4 1966171168
      %v1538 = vunpack.c.0.s8 %v1537
      %v1539 = vlaneseq
      %v1540 = vshrl.u32 %v1539, 7
      %v1541 = vsub.s32 %v1538, %v1540
      %v1542 = vrot.slane %v1514, %v1541
      %v1543 = vcombine.high %v1521, %v1521
      %v1544 = vcombine.high %v1528, %v1528
      %v1545 = vcombine.high %v1535, %v1535
      %v1546 = vcombine.high %v1542, %v1542
      %v1547 = vlaneseq
      %v1548 = vshrl.u32 %v1547, 7
      %v1549 = vsub.s32 0, %v1548
      %v1550 = vrot.slane %v1178, %v1549
      %v1551 = vlaneseq
      %v1552 = vshrl.u32 %v1551, 7
      %v1553 = vsub.s32 0, %v1552
      %v1554 = vrot.slane %v1192, %v1553
      %v1555 = vlaneseq
      %v1556 = vshrl.u32 %v1555, 7
      %v1557 = vsub.s32 0, %v1556
      %v1558 = vrot.slane %v1200, %v1557
      %v1559 = vlaneseq
      %v1560 = vshrl.u32 %v1559, 7
      %v1561 = vsub.s32 0, %v1560
      %v1562 = vrot.slane %v1202, %v1561
      %v1563 = vlaneseq
      %v1564 = vshrl.u32 %v1563, 7
      %v1565 = vsub.s32 0, %v1564
      %v1566 = vrot.slane %v1185, %v1565
      %v1567 = vlaneseq
      %v1568 = vshrl.u32 %v1567, 7
      %v1569 = vsub.s32 0, %v1568
      %v1570 = vrot.slane %v1199, %v1569
      %v1571 = vlaneseq
      %v1572 = vshrl.u32 %v1571, 7
      %v1573 = vsub.s32 0, %v1572
      %v1574 = vrot.slane %v1201, %v1573
      %v1575 = vlaneseq
      %v1576 = vshrl.u32 %v1575, 7
      %v1577 = vsub.s32 0, %v1576
      %v1578 = vrot.slane %v1203, %v1577
      %v1579 = vlaneseq
      %v1580 = vshrl.u32 %v1579, 7
      %v1581 = vsub.s32 0, %v1580
      %v1582 = vrot.slane %v1227, %v1581
      %v1583 = vlaneseq
      %v1584 = vshrl.u32 %v1583, 7
      %v1585 = vsub.s32 0, %v1584
      %v1586 = vrot.slane %v1241, %v1585
      %v1587 = vlaneseq
      %v1588 = vshrl.u32 %v1587, 7
      %v1589 = vsub.s32 0, %v1588
      %v1590 = vrot.slane %v1249, %v1589
      %v1591 = vlaneseq
      %v1592 = vshrl.u32 %v1591, 7
      %v1593 = vsub.s32 0, %v1592
      %v1594 = vrot.slane %v1251, %v1593
      %v1595 = vlaneseq
      %v1596 = vshrl.u32 %v1595, 7
      %v1597 = vsub.s32 0, %v1596
      %v1598 = vrot.slane %v1234, %v1597
      %v1599 = vlaneseq
      %v1600 = vshrl.u32 %v1599, 7
      %v1601 = vsub.s32 0, %v1600
      %v1602 = vrot.slane %v1248, %v1601
      %v1603 = vlaneseq
      %v1604 = vshrl.u32 %v1603, 7
      %v1605 = vsub.s32 0, %v1604
      %v1606 = vrot.slane %v1250, %v1605
      %v1607 = vlaneseq
      %v1608 = vshrl.u32 %v1607, 7
      %v1609 = vsub.s32 0, %v1608
      %v1610 = vrot.slane %v1252, %v1609
      %v1611 = vlaneseq
      %v1612 = vshrl.u32 %v1611, 7
      %v1613 = vsub.s32 0, %v1612
      %v1614 = vrot.slane %v1276, %v1613
      %v1615 = vlaneseq
      %v1616 = vshrl.u32 %v1615, 7
      %v1617 = vsub.s32 0, %v1616
      %v1618 = vrot.slane %v1290, %v1617
      %v1619 = vlaneseq
      %v1620 = vshrl.u32 %v1619, 7
      %v1621 = vsub.s32 0, %v1620
      %v1622 = vrot.slane %v1298, %v1621
      %v1623 = vlaneseq
      %v1624 = vshrl.u32 %v1623, 7
      %v1625 = vsub.s32 0, %v1624
      %v1626 = vrot.slane %v1300, %v1625
      %v1627 = vlaneseq
      %v1628 = vshrl.u32 %v1627, 7
      %v1629 = vsub.s32 0, %v1628
      %v1630 = vrot.slane %v1283, %v1629
      %v1631 = vlaneseq
      %v1632 = vshrl.u32 %v1631, 7
      %v1633 = vsub.s32 0, %v1632
      %v1634 = vrot.slane %v1297, %v1633
      %v1635 = vlaneseq
      %v1636 = vshrl.u32 %v1635, 7
      %v1637 = vsub.s32 0, %v1636
      %v1638 = vrot.slane %v1299, %v1637
      %v1639 = vlaneseq
      %v1640 = vshrl.u32 %v1639, 7
      %v1641 = vsub.s32 0, %v1640
      %v1642 = vrot.slane %v1301, %v1641
      %v1643 = vlaneseq
      %v1644 = vshrl.u32 %v1643, 7
      %v1645 = vsub.s32 0, %v1644
      %v1646 = vrot.slane %v1325, %v1645
      %v1647 = vlaneseq
      %v1648 = vshrl.u32 %v1647, 7
      %v1649 = vsub.s32 0, %v1648
      %v1650 = vrot.slane %v1339, %v1649
      %v1651 = vlaneseq
      %v1652 = vshrl.u32 %v1651, 7
      %v1653 = vsub.s32 0, %v1652
      %v1654 = vrot.slane %v1347, %v1653
      %v1655 = vlaneseq
      %v1656 = vshrl.u32 %v1655, 7
      %v1657 = vsub.s32 0, %v1656
      %v1658 = vrot.slane %v1349, %v1657
      %v1659 = vlaneseq
      %v1660 = vshrl.u32 %v1659, 7
      %v1661 = vsub.s32 0, %v1660
      %v1662 = vrot.slane %v1332, %v1661
      %v1663 = vlaneseq
      %v1664 = vshrl.u32 %v1663, 7
      %v1665 = vsub.s32 0, %v1664
      %v1666 = vrot.slane %v1346, %v1665
      %v1667 = vlaneseq
      %v1668 = vshrl.u32 %v1667, 7
      %v1669 = vsub.s32 0, %v1668
      %v1670 = vrot.slane %v1348, %v1669
      %v1671 = vlaneseq
      %v1672 = vshrl.u32 %v1671, 7
      %v1673 = vsub.s32 0, %v1672
      %v1674 = vrot.slane %v1350, %v1673
      %v1675 = vlaneseq
      %v1676 = vshrl.u32 %v1675, 7
      %v1677 = vsub.s32 0, %v1676
      %v1678 = vrot.slane %v1374, %v1677
      %v1679 = vlaneseq
      %v1680 = vshrl.u32 %v1679, 7
      %v1681 = vsub.s32 0, %v1680
      %v1682 = vrot.slane %v1388, %v1681
      %v1683 = vlaneseq
      %v1684 = vshrl.u32 %v1683, 7
      %v1685 = vsub.s32 0, %v1684
      %v1686 = vrot.slane %v1396, %v1685
      %v1687 = vlaneseq
      %v1688 = vshrl.u32 %v1687, 7
      %v1689 = vsub.s32 0, %v1688
      %v1690 = vrot.slane %v1398, %v1689
      %v1691 = vlaneseq
      %v1692 = vshrl.u32 %v1691, 7
      %v1693 = vsub.s32 0, %v1692
      %v1694 = vrot.slane %v1381, %v1693
      %v1695 = vlaneseq
      %v1696 = vshrl.u32 %v1695, 7
      %v1697 = vsub.s32 0, %v1696
      %v1698 = vrot.slane %v1395, %v1697
      %v1699 = vlaneseq
      %v1700 = vshrl.u32 %v1699, 7
      %v1701 = vsub.s32 0, %v1700
      %v1702 = vrot.slane %v1397, %v1701
      %v1703 = vlaneseq
      %v1704 = vshrl.u32 %v1703, 7
      %v1705 = vsub.s32 0, %v1704
      %v1706 = vrot.slane %v1399, %v1705
      %v1707 = vlaneseq
      %v1708 = vshrl.u32 %v1707, 7
      %v1709 = vsub.s32 0, %v1708
      %v1710 = vrot.slane %v1423, %v1709
      %v1711 = vlaneseq
      %v1712 = vshrl.u32 %v1711, 7
      %v1713 = vsub.s32 0, %v1712
      %v1714 = vrot.slane %v1437, %v1713
      %v1715 = vlaneseq
      %v1716 = vshrl.u32 %v1715, 7
      %v1717 = vsub.s32 0, %v1716
      %v1718 = vrot.slane %v1445, %v1717
      %v1719 = vlaneseq
      %v1720 = vshrl.u32 %v1719, 7
      %v1721 = vsub.s32 0, %v1720
      %v1722 = vrot.slane %v1447, %v1721
      %v1723 = vlaneseq
      %v1724 = vshrl.u32 %v1723, 7
      %v1725 = vsub.s32 0, %v1724
      %v1726 = vrot.slane %v1430, %v1725
      %v1727 = vlaneseq
      %v1728 = vshrl.u32 %v1727, 7
      %v1729 = vsub.s32 0, %v1728
      %v1730 = vrot.slane %v1444, %v1729
      %v1731 = vlaneseq
      %v1732 = vshrl.u32 %v1731, 7
      %v1733 = vsub.s32 0, %v1732
      %v1734 = vrot.slane %v1446, %v1733
      %v1735 = vlaneseq
      %v1736 = vshrl.u32 %v1735, 7
      %v1737 = vsub.s32 0, %v1736
      %v1738 = vrot.slane %v1448, %v1737
      %v1739 = vlaneseq
      %v1740 = vshrl.u32 %v1739, 7
      %v1741 = vsub.s32 0, %v1740
      %v1742 = vrot.slane %v1472, %v1741
      %v1743 = vlaneseq
      %v1744 = vshrl.u32 %v1743, 7
      %v1745 = vsub.s32 0, %v1744
      %v1746 = vrot.slane %v1486, %v1745
      %v1747 = vlaneseq
      %v1748 = vshrl.u32 %v1747, 7
      %v1749 = vsub.s32 0, %v1748
      %v1750 = vrot.slane %v1494, %v1749
      %v1751 = vlaneseq
      %v1752 = vshrl.u32 %v1751, 7
      %v1753 = vsub.s32 0, %v1752
      %v1754 = vrot.slane %v1496, %v1753
      %v1755 = vlaneseq
      %v1756 = vshrl.u32 %v1755, 7
      %v1757 = vsub.s32 0, %v1756
      %v1758 = vrot.slane %v1479, %v1757
      %v1759 = vlaneseq
      %v1760 = vshrl.u32 %v1759, 7
      %v1761 = vsub.s32 0, %v1760
      %v1762 = vrot.slane %v1493, %v1761
      %v1763 = vlaneseq
      %v1764 = vshrl.u32 %v1763, 7
      %v1765 = vsub.s32 0, %v1764
      %v1766 = vrot.slane %v1495, %v1765
      %v1767 = vlaneseq
      %v1768 = vshrl.u32 %v1767, 7
      %v1769 = vsub.s32 0, %v1768
      %v1770 = vrot.slane %v1497, %v1769
      %v1771 = vlaneseq
      %v1772 = vshrl.u32 %v1771, 7
      %v1773 = vsub.s32 0, %v1772
      %v1774 = vrot.slane %v1521, %v1773
      %v1775 = vlaneseq
      %v1776 = vshrl.u32 %v1775, 7
      %v1777 = vsub.s32 0, %v1776
      %v1778 = vrot.slane %v1535, %v1777
      %v1779 = vlaneseq
      %v1780 = vshrl.u32 %v1779, 7
      %v1781 = vsub.s32 0, %v1780
      %v1782 = vrot.slane %v1543, %v1781
      %v1783 = vlaneseq
      %v1784 = vshrl.u32 %v1783, 7
      %v1785 = vsub.s32 0, %v1784
      %v1786 = vrot.slane %v1545, %v1785
      %v1787 = vlaneseq
      %v1788 = vshrl.u32 %v1787, 7
      %v1789 = vsub.s32 0, %v1788
      %v1790 = vrot.slane %v1528, %v1789
      %v1791 = vlaneseq
      %v1792 = vshrl.u32 %v1791, 7
      %v1793 = vsub.s32 0, %v1792
      %v1794 = vrot.slane %v1542, %v1793
      %v1795 = vlaneseq
      %v1796 = vshrl.u32 %v1795, 7
      %v1797 = vsub.s32 0, %v1796
      %v1798 = vrot.slane %v1544, %v1797
      %v1799 = vlaneseq
      %v1800 = vshrl.u32 %v1799, 7
      %v1801 = vsub.s32 0, %v1800
      %v1802 = vrot.slane %v1546, %v1801
      %1867 = vrot.lane.b32.xlu0 %v1109, 112
      %v1868 = vpop.permute.xlu0 %1867
      %1869 = vrot.lane.b32.xlu0 %v1114, 112
      %v1870 = vpop.permute.xlu0 %1869
      %1871 = vrot.lane.b32.xlu0 %v1119, 112
      %v1872 = vpop.permute.xlu0 %1871
      %1873 = vrot.lane.b32.xlu0 %v1124, 112
      %v1874 = vpop.permute.xlu0 %1873
      %1875 = vrot.lane.b32.xlu0 %v1129, 112
      %v1876 = vpop.permute.xlu0 %1875
      %1877 = vrot.lane.b32.xlu0 %v1134, 112
      %v1878 = vpop.permute.xlu0 %1877
      %1879 = vrot.lane.b32.xlu0 %v1139, 112
      %v1880 = vpop.permute.xlu0 %1879
      %1881 = vrot.lane.b32.xlu0 %v1144, 112
      %v1882 = vpop.permute.xlu0 %1881
      %v1891 = vmul.f32 %v1550, %v1868
      %v1892 = vmul.f32 %v1554, %v1868
      %v1893 = vmul.f32 %v1558, %v1868
      %v1894 = vmul.f32 %v1562, %v1868
      %v1895 = vmul.f32 %v1566, %v1868
      %v1896 = vmul.f32 %v1570, %v1868
      %v1897 = vmul.f32 %v1574, %v1868
      %v1898 = vmul.f32 %v1578, %v1868
      %v1899 = vmul.f32 %v1582, %v1870
      %v1900 = vmul.f32 %v1586, %v1870
      %v1901 = vmul.f32 %v1590, %v1870
      %v1902 = vmul.f32 %v1594, %v1870
      %v1903 = vmul.f32 %v1598, %v1870
      %v1904 = vmul.f32 %v1602, %v1870
      %v1905 = vmul.f32 %v1606, %v1870
      %v1906 = vmul.f32 %v1610, %v1870
      %v1907 = vmul.f32 %v1614, %v1872
      %v1908 = vmul.f32 %v1618, %v1872
      %v1909 = vmul.f32 %v1622, %v1872
      %v1910 = vmul.f32 %v1626, %v1872
      %v1911 = vmul.f32 %v1630, %v1872
      %v1912 = vmul.f32 %v1634, %v1872
      %v1913 = vmul.f32 %v1638, %v1872
      %v1914 = vmul.f32 %v1642, %v1872
      %v1915 = vmul.f32 %v1646, %v1874
      %v1916 = vmul.f32 %v1650, %v1874
      %v1917 = vmul.f32 %v1654, %v1874
      %v1918 = vmul.f32 %v1658, %v1874
      %v1919 = vmul.f32 %v1662, %v1874
      %v1920 = vmul.f32 %v1666, %v1874
      %v1921 = vmul.f32 %v1670, %v1874
      %v1922 = vmul.f32 %v1674, %v1874
      %v1923 = vmul.f32 %v1678, %v1876
      %v1924 = vmul.f32 %v1682, %v1876
      %v1925 = vmul.f32 %v1686, %v1876
      %v1926 = vmul.f32 %v1690, %v1876
      %v1927 = vmul.f32 %v1694, %v1876
      %v1928 = vmul.f32 %v1698, %v1876
      %v1929 = vmul.f32 %v1702, %v1876
      %v1930 = vmul.f32 %v1706, %v1876
      %v1931 = vmul.f32 %v1710, %v1878
      %v1932 = vmul.f32 %v1714, %v1878
      %v1933 = vmul.f32 %v1718, %v1878
      %v1934 = vmul.f32 %v1722, %v1878
      %v1935 = vmul.f32 %v1726, %v1878
      %v1936 = vmul.f32 %v1730, %v1878
      %v1937 = vmul.f32 %v1734, %v1878
      %v1938 = vmul.f32 %v1738, %v1878
      %v1939 = vmul.f32 %v1742, %v1880
      %v1940 = vmul.f32 %v1746, %v1880
      %v1941 = vmul.f32 %v1750, %v1880
      %v1942 = vmul.f32 %v1754, %v1880
      %v1943 = vmul.f32 %v1758, %v1880
      %v1944 = vmul.f32 %v1762, %v1880
      %v1945 = vmul.f32 %v1766, %v1880
      %v1946 = vmul.f32 %v1770, %v1880
      %v1947 = vmul.f32 %v1774, %v1882
      %v1948 = vmul.f32 %v1778, %v1882
      %v1949 = vmul.f32 %v1782, %v1882
      %v1950 = vmul.f32 %v1786, %v1882
      %v1951 = vmul.f32 %v1790, %v1882
      %v1952 = vmul.f32 %v1794, %v1882
      %v1953 = vmul.f32 %v1798, %v1882
      %v1954 = vmul.f32 %v1802, %v1882
      %v1955 = vsel %vm1017, %v1891, 0.0
      %1956 = vadd.xlane.f32.xlu0 %v1955
      %v1957 = vpop.xlane.xlu0 %1956
      %v1958 = vsel %vm1017, %v1892, 0.0
      %1959 = vadd.xlane.f32.xlu0 %v1958
      %v1960 = vpop.xlane.xlu0 %1959
      %v1961 = vsel %vm1017, %v1893, 0.0
      %1962 = vadd.xlane.f32.xlu0 %v1961
      %v1963 = vpop.xlane.xlu0 %1962
      %v1964 = vsel %vm1017, %v1894, 0.0
      %1965 = vadd.xlane.f32.xlu0 %v1964
      %v1966 = vpop.xlane.xlu0 %1965
      %v1967 = vsel %vm1017, %v1895, 0.0
      %1968 = vadd.xlane.f32.xlu0 %v1967
      %v1969 = vpop.xlane.xlu0 %1968
      %v1970 = vsel %vm1017, %v1896, 0.0
      %1971 = vadd.xlane.f32.xlu0 %v1970
      %v1972 = vpop.xlane.xlu0 %1971
      %v1973 = vsel %vm1017, %v1897, 0.0
      %1974 = vadd.xlane.f32.xlu0 %v1973
      %v1975 = vpop.xlane.xlu0 %1974
      %v1976 = vsel %vm1017, %v1898, 0.0
      %1977 = vadd.xlane.f32.xlu0 %v1976
      %v1978 = vpop.xlane.xlu0 %1977
      %v1979 = vsel %vm1017, %v1899, 0.0
      %1980 = vadd.xlane.f32.xlu0 %v1979
      %v1981 = vpop.xlane.xlu0 %1980
      %v1982 = vsel %vm1017, %v1900, 0.0
      %1983 = vadd.xlane.f32.xlu0 %v1982
      %v1984 = vpop.xlane.xlu0 %1983
      %v1985 = vsel %vm1017, %v1901, 0.0
      %1986 = vadd.xlane.f32.xlu0 %v1985
      %v1987 = vpop.xlane.xlu0 %1986
      %v1988 = vsel %vm1017, %v1902, 0.0
      %1989 = vadd.xlane.f32.xlu0 %v1988
      %v1990 = vpop.xlane.xlu0 %1989
      %v1991 = vsel %vm1017, %v1903, 0.0
      %1992 = vadd.xlane.f32.xlu0 %v1991
      %v1993 = vpop.xlane.xlu0 %1992
      %v1994 = vsel %vm1017, %v1904, 0.0
      %1995 = vadd.xlane.f32.xlu0 %v1994
      %v1996 = vpop.xlane.xlu0 %1995
      %v1997 = vsel %vm1017, %v1905, 0.0
      %1998 = vadd.xlane.f32.xlu0 %v1997
      %v1999 = vpop.xlane.xlu0 %1998
      %v2000 = vsel %vm1017, %v1906, 0.0
      %2001 = vadd.xlane.f32.xlu0 %v2000
      %v2002 = vpop.xlane.xlu0 %2001
      %v2003 = vsel %vm1017, %v1907, 0.0
      %2004 = vadd.xlane.f32.xlu0 %v2003
      %v2005 = vpop.xlane.xlu0 %2004
      %v2006 = vsel %vm1017, %v1908, 0.0
      %2007 = vadd.xlane.f32.xlu0 %v2006
      %v2008 = vpop.xlane.xlu0 %2007
      %v2009 = vsel %vm1017, %v1909, 0.0
      %2010 = vadd.xlane.f32.xlu0 %v2009
      %v2011 = vpop.xlane.xlu0 %2010
      %v2012 = vsel %vm1017, %v1910, 0.0
      %2013 = vadd.xlane.f32.xlu0 %v2012
      %v2014 = vpop.xlane.xlu0 %2013
      %v2015 = vsel %vm1017, %v1911, 0.0
      %2016 = vadd.xlane.f32.xlu0 %v2015
      %v2017 = vpop.xlane.xlu0 %2016
      %v2018 = vsel %vm1017, %v1912, 0.0
      %2019 = vadd.xlane.f32.xlu0 %v2018
      %v2020 = vpop.xlane.xlu0 %2019
      %v2021 = vsel %vm1017, %v1913, 0.0
      %2022 = vadd.xlane.f32.xlu0 %v2021
      %v2023 = vpop.xlane.xlu0 %2022
      %v2024 = vsel %vm1017, %v1914, 0.0
      %2025 = vadd.xlane.f32.xlu0 %v2024
      %v2026 = vpop.xlane.xlu0 %2025
      %v2027 = vsel %vm1017, %v1915, 0.0
      %2028 = vadd.xlane.f32.xlu0 %v2027
      %v2029 = vpop.xlane.xlu0 %2028
      %v2030 = vsel %vm1017, %v1916, 0.0
      %2031 = vadd.xlane.f32.xlu0 %v2030
      %v2032 = vpop.xlane.xlu0 %2031
      %v2033 = vsel %vm1017, %v1917, 0.0
      %2034 = vadd.xlane.f32.xlu0 %v2033
      %v2035 = vpop.xlane.xlu0 %2034
      %v2036 = vsel %vm1017, %v1918, 0.0
      %2037 = vadd.xlane.f32.xlu0 %v2036
      %v2038 = vpop.xlane.xlu0 %2037
      %v2039 = vsel %vm1017, %v1919, 0.0
      %2040 = vadd.xlane.f32.xlu0 %v2039
      %v2041 = vpop.xlane.xlu0 %2040
      %v2042 = vsel %vm1017, %v1920, 0.0
      %2043 = vadd.xlane.f32.xlu0 %v2042
      %v2044 = vpop.xlane.xlu0 %2043
      %v2045 = vsel %vm1017, %v1921, 0.0
      %2046 = vadd.xlane.f32.xlu0 %v2045
      %v2047 = vpop.xlane.xlu0 %2046
      %v2048 = vsel %vm1017, %v1922, 0.0
      %2049 = vadd.xlane.f32.xlu0 %v2048
      %v2050 = vpop.xlane.xlu0 %2049
      %v2051 = vsel %vm1017, %v1923, 0.0
      %2052 = vadd.xlane.f32.xlu0 %v2051
      %v2053 = vpop.xlane.xlu0 %2052
      %v2054 = vsel %vm1017, %v1924, 0.0
      %2055 = vadd.xlane.f32.xlu0 %v2054
      %v2056 = vpop.xlane.xlu0 %2055
      %v2057 = vsel %vm1017, %v1925, 0.0
      %2058 = vadd.xlane.f32.xlu0 %v2057
      %v2059 = vpop.xlane.xlu0 %2058
      %v2060 = vsel %vm1017, %v1926, 0.0
      %2061 = vadd.xlane.f32.xlu0 %v2060
      %v2062 = vpop.xlane.xlu0 %2061
      %v2063 = vsel %vm1017, %v1927, 0.0
      %2064 = vadd.xlane.f32.xlu0 %v2063
      %v2065 = vpop.xlane.xlu0 %2064
      %v2066 = vsel %vm1017, %v1928, 0.0
      %2067 = vadd.xlane.f32.xlu0 %v2066
      %v2068 = vpop.xlane.xlu0 %2067
      %v2069 = vsel %vm1017, %v1929, 0.0
      %2070 = vadd.xlane.f32.xlu0 %v2069
      %v2071 = vpop.xlane.xlu0 %2070
      %v2072 = vsel %vm1017, %v1930, 0.0
      %2073 = vadd.xlane.f32.xlu0 %v2072
      %v2074 = vpop.xlane.xlu0 %2073
      %v2075 = vsel %vm1017, %v1931, 0.0
      %2076 = vadd.xlane.f32.xlu0 %v2075
      %v2077 = vpop.xlane.xlu0 %2076
      %v2078 = vsel %vm1017, %v1932, 0.0
      %2079 = vadd.xlane.f32.xlu0 %v2078
      %v2080 = vpop.xlane.xlu0 %2079
      %v2081 = vsel %vm1017, %v1933, 0.0
      %2082 = vadd.xlane.f32.xlu0 %v2081
      %v2083 = vpop.xlane.xlu0 %2082
      %v2084 = vsel %vm1017, %v1934, 0.0
      %2085 = vadd.xlane.f32.xlu0 %v2084
      %v2086 = vpop.xlane.xlu0 %2085
      %v2087 = vsel %vm1017, %v1935, 0.0
      %2088 = vadd.xlane.f32.xlu0 %v2087
      %v2089 = vpop.xlane.xlu0 %2088
      %v2090 = vsel %vm1017, %v1936, 0.0
      %2091 = vadd.xlane.f32.xlu0 %v2090
      %v2092 = vpop.xlane.xlu0 %2091
      %v2093 = vsel %vm1017, %v1937, 0.0
      %2094 = vadd.xlane.f32.xlu0 %v2093
      %v2095 = vpop.xlane.xlu0 %2094
      %v2096 = vsel %vm1017, %v1938, 0.0
      %2097 = vadd.xlane.f32.xlu0 %v2096
      %v2098 = vpop.xlane.xlu0 %2097
      %v2099 = vsel %vm1017, %v1939, 0.0
      %2100 = vadd.xlane.f32.xlu0 %v2099
      %v2101 = vpop.xlane.xlu0 %2100
      %v2102 = vsel %vm1017, %v1940, 0.0
      %2103 = vadd.xlane.f32.xlu0 %v2102
      %v2104 = vpop.xlane.xlu0 %2103
      %v2105 = vsel %vm1017, %v1941, 0.0
      %2106 = vadd.xlane.f32.xlu0 %v2105
      %v2107 = vpop.xlane.xlu0 %2106
      %v2108 = vsel %vm1017, %v1942, 0.0
      %2109 = vadd.xlane.f32.xlu0 %v2108
      %v2110 = vpop.xlane.xlu0 %2109
      %v2111 = vsel %vm1017, %v1943, 0.0
      %2112 = vadd.xlane.f32.xlu0 %v2111
      %v2113 = vpop.xlane.xlu0 %2112
      %v2114 = vsel %vm1017, %v1944, 0.0
      %2115 = vadd.xlane.f32.xlu0 %v2114
      %v2116 = vpop.xlane.xlu0 %2115
      %v2117 = vsel %vm1017, %v1945, 0.0
      %2118 = vadd.xlane.f32.xlu0 %v2117
      %v2119 = vpop.xlane.xlu0 %2118
      %v2120 = vsel %vm1017, %v1946, 0.0
      %2121 = vadd.xlane.f32.xlu0 %v2120
      %v2122 = vpop.xlane.xlu0 %2121
      %v2123 = vsel %vm1017, %v1947, 0.0
      %2124 = vadd.xlane.f32.xlu0 %v2123
      %v2125 = vpop.xlane.xlu0 %2124
      %v2126 = vsel %vm1017, %v1948, 0.0
      %2127 = vadd.xlane.f32.xlu0 %v2126
      %v2128 = vpop.xlane.xlu0 %2127
      %v2129 = vsel %vm1017, %v1949, 0.0
      %2130 = vadd.xlane.f32.xlu0 %v2129
      %v2131 = vpop.xlane.xlu0 %2130
      %v2132 = vsel %vm1017, %v1950, 0.0
      %2133 = vadd.xlane.f32.xlu0 %v2132
      %v2134 = vpop.xlane.xlu0 %2133
      %v2135 = vsel %vm1017, %v1951, 0.0
      %2136 = vadd.xlane.f32.xlu0 %v2135
      %v2137 = vpop.xlane.xlu0 %2136
      %v2138 = vsel %vm1017, %v1952, 0.0
      %2139 = vadd.xlane.f32.xlu0 %v2138
      %v2140 = vpop.xlane.xlu0 %2139
      %v2141 = vsel %vm1017, %v1953, 0.0
      %2142 = vadd.xlane.f32.xlu0 %v2141
      %v2143 = vpop.xlane.xlu0 %2142
      %v2144 = vsel %vm1017, %v1954, 0.0
      %2145 = vadd.xlane.f32.xlu0 %v2144
      %v2146 = vpop.xlane.xlu0 %2145
      %v2147 = vmul.f32 %v1957, 0.25
      %v2148 = vmul.f32 %v1960, 0.25
      %v2149 = vmul.f32 %v1963, 0.25
      %v2150 = vmul.f32 %v1966, 0.25
      %v2151 = vmul.f32 %v1969, 0.25
      %v2152 = vmul.f32 %v1972, 0.25
      %v2153 = vmul.f32 %v1975, 0.25
      %v2154 = vmul.f32 %v1978, 0.25
      %v2155 = vmul.f32 %v1981, 0.25
      %v2156 = vmul.f32 %v1984, 0.25
      %v2157 = vmul.f32 %v1987, 0.25
      %v2158 = vmul.f32 %v1990, 0.25
      %v2159 = vmul.f32 %v1993, 0.25
      %v2160 = vmul.f32 %v1996, 0.25
      %v2161 = vmul.f32 %v1999, 0.25
      %v2162 = vmul.f32 %v2002, 0.25
      %v2163 = vmul.f32 %v2005, 0.25
      %v2164 = vmul.f32 %v2008, 0.25
      %v2165 = vmul.f32 %v2011, 0.25
      %v2166 = vmul.f32 %v2014, 0.25
      %v2167 = vmul.f32 %v2017, 0.25
      %v2168 = vmul.f32 %v2020, 0.25
      %v2169 = vmul.f32 %v2023, 0.25
      %v2170 = vmul.f32 %v2026, 0.25
      %v2171 = vmul.f32 %v2029, 0.25
      %v2172 = vmul.f32 %v2032, 0.25
      %v2173 = vmul.f32 %v2035, 0.25
      %v2174 = vmul.f32 %v2038, 0.25
      %v2175 = vmul.f32 %v2041, 0.25
      %v2176 = vmul.f32 %v2044, 0.25
      %v2177 = vmul.f32 %v2047, 0.25
      %v2178 = vmul.f32 %v2050, 0.25
      %v2179 = vmul.f32 %v2053, 0.25
      %v2180 = vmul.f32 %v2056, 0.25
      %v2181 = vmul.f32 %v2059, 0.25
      %v2182 = vmul.f32 %v2062, 0.25
      %v2183 = vmul.f32 %v2065, 0.25
      %v2184 = vmul.f32 %v2068, 0.25
      %v2185 = vmul.f32 %v2071, 0.25
      %v2186 = vmul.f32 %v2074, 0.25
      %v2187 = vmul.f32 %v2077, 0.25
      %v2188 = vmul.f32 %v2080, 0.25
      %v2189 = vmul.f32 %v2083, 0.25
      %v2190 = vmul.f32 %v2086, 0.25
      %v2191 = vmul.f32 %v2089, 0.25
      %v2192 = vmul.f32 %v2092, 0.25
      %v2193 = vmul.f32 %v2095, 0.25
      %v2194 = vmul.f32 %v2098, 0.25
      %v2195 = vmul.f32 %v2101, 0.25
      %v2196 = vmul.f32 %v2104, 0.25
      %v2197 = vmul.f32 %v2107, 0.25
      %v2198 = vmul.f32 %v2110, 0.25
      %v2199 = vmul.f32 %v2113, 0.25
      %v2200 = vmul.f32 %v2116, 0.25
      %v2201 = vmul.f32 %v2119, 0.25
      %v2202 = vmul.f32 %v2122, 0.25
      %v2203 = vmul.f32 %v2125, 0.25
      %v2204 = vmul.f32 %v2128, 0.25
      %v2205 = vmul.f32 %v2131, 0.25
      %v2206 = vmul.f32 %v2134, 0.25
      %v2207 = vmul.f32 %v2137, 0.25
      %v2208 = vmul.f32 %v2140, 0.25
      %v2209 = vmul.f32 %v2143, 0.25
      %v2210 = vmul.f32 %v2146, 0.25
      %v2275 = vlaneseq
      %v2276 = vshrl.u32 %v2275, 7
      %v2277 = vsub.s32 %v708, %v2276
      %v2278 = vrot.slane %v2147, %v2277
      %v2279 = vlaneseq
      %v2280 = vshrl.u32 %v2279, 7
      %v2281 = vsub.s32 %v708, %v2280
      %v2282 = vrot.slane %v2148, %v2281
      %v2283 = vlaneseq
      %v2284 = vshrl.u32 %v2283, 7
      %v2285 = vsub.s32 %v708, %v2284
      %v2286 = vrot.slane %v2149, %v2285
      %v2287 = vlaneseq
      %v2288 = vshrl.u32 %v2287, 7
      %v2289 = vsub.s32 %v708, %v2288
      %v2290 = vrot.slane %v2150, %v2289
      %v2291 = vlaneseq
      %v2292 = vshrl.u32 %v2291, 7
      %v2293 = vsub.s32 %v708, %v2292
      %v2294 = vrot.slane %v2151, %v2293
      %v2295 = vlaneseq
      %v2296 = vshrl.u32 %v2295, 7
      %v2297 = vsub.s32 %v708, %v2296
      %v2298 = vrot.slane %v2152, %v2297
      %v2299 = vlaneseq
      %v2300 = vshrl.u32 %v2299, 7
      %v2301 = vsub.s32 %v708, %v2300
      %v2302 = vrot.slane %v2153, %v2301
      %v2303 = vlaneseq
      %v2304 = vshrl.u32 %v2303, 7
      %v2305 = vsub.s32 %v708, %v2304
      %v2306 = vrot.slane %v2154, %v2305
      %v2307 = vlaneseq
      %v2308 = vshrl.u32 %v2307, 7
      %v2309 = vsub.s32 %v708, %v2308
      %v2310 = vrot.slane %v2155, %v2309
      %v2311 = vlaneseq
      %v2312 = vshrl.u32 %v2311, 7
      %v2313 = vsub.s32 %v708, %v2312
      %v2314 = vrot.slane %v2156, %v2313
      %v2315 = vlaneseq
      %v2316 = vshrl.u32 %v2315, 7
      %v2317 = vsub.s32 %v708, %v2316
      %v2318 = vrot.slane %v2157, %v2317
      %v2319 = vlaneseq
      %v2320 = vshrl.u32 %v2319, 7
      %v2321 = vsub.s32 %v708, %v2320
      %v2322 = vrot.slane %v2158, %v2321
      %v2323 = vlaneseq
      %v2324 = vshrl.u32 %v2323, 7
      %v2325 = vsub.s32 %v708, %v2324
      %v2326 = vrot.slane %v2159, %v2325
      %v2327 = vlaneseq
      %v2328 = vshrl.u32 %v2327, 7
      %v2329 = vsub.s32 %v708, %v2328
      %v2330 = vrot.slane %v2160, %v2329
      %v2331 = vlaneseq
      %v2332 = vshrl.u32 %v2331, 7
      %v2333 = vsub.s32 %v708, %v2332
      %v2334 = vrot.slane %v2161, %v2333
      %v2335 = vlaneseq
      %v2336 = vshrl.u32 %v2335, 7
      %v2337 = vsub.s32 %v708, %v2336
      %v2338 = vrot.slane %v2162, %v2337
      %v2339 = vlaneseq
      %v2340 = vshrl.u32 %v2339, 7
      %v2341 = vsub.s32 %v708, %v2340
      %v2342 = vrot.slane %v2163, %v2341
      %v2343 = vlaneseq
      %v2344 = vshrl.u32 %v2343, 7
      %v2345 = vsub.s32 %v708, %v2344
      %v2346 = vrot.slane %v2164, %v2345
      %v2347 = vlaneseq
      %v2348 = vshrl.u32 %v2347, 7
      %v2349 = vsub.s32 %v708, %v2348
      %v2350 = vrot.slane %v2165, %v2349
      %v2351 = vlaneseq
      %v2352 = vshrl.u32 %v2351, 7
      %v2353 = vsub.s32 %v708, %v2352
      %v2354 = vrot.slane %v2166, %v2353
      %v2355 = vlaneseq
      %v2356 = vshrl.u32 %v2355, 7
      %v2357 = vsub.s32 %v708, %v2356
      %v2358 = vrot.slane %v2167, %v2357
      %v2359 = vlaneseq
      %v2360 = vshrl.u32 %v2359, 7
      %v2361 = vsub.s32 %v708, %v2360
      %v2362 = vrot.slane %v2168, %v2361
      %v2363 = vlaneseq
      %v2364 = vshrl.u32 %v2363, 7
      %v2365 = vsub.s32 %v708, %v2364
      %v2366 = vrot.slane %v2169, %v2365
      %v2367 = vlaneseq
      %v2368 = vshrl.u32 %v2367, 7
      %v2369 = vsub.s32 %v708, %v2368
      %v2370 = vrot.slane %v2170, %v2369
      %v2371 = vlaneseq
      %v2372 = vshrl.u32 %v2371, 7
      %v2373 = vsub.s32 %v708, %v2372
      %v2374 = vrot.slane %v2171, %v2373
      %v2375 = vlaneseq
      %v2376 = vshrl.u32 %v2375, 7
      %v2377 = vsub.s32 %v708, %v2376
      %v2378 = vrot.slane %v2172, %v2377
      %v2379 = vlaneseq
      %v2380 = vshrl.u32 %v2379, 7
      %v2381 = vsub.s32 %v708, %v2380
      %v2382 = vrot.slane %v2173, %v2381
      %v2383 = vlaneseq
      %v2384 = vshrl.u32 %v2383, 7
      %v2385 = vsub.s32 %v708, %v2384
      %v2386 = vrot.slane %v2174, %v2385
      %v2387 = vlaneseq
      %v2388 = vshrl.u32 %v2387, 7
      %v2389 = vsub.s32 %v708, %v2388
      %v2390 = vrot.slane %v2175, %v2389
      %v2391 = vlaneseq
      %v2392 = vshrl.u32 %v2391, 7
      %v2393 = vsub.s32 %v708, %v2392
      %v2394 = vrot.slane %v2176, %v2393
      %v2395 = vlaneseq
      %v2396 = vshrl.u32 %v2395, 7
      %v2397 = vsub.s32 %v708, %v2396
      %v2398 = vrot.slane %v2177, %v2397
      %v2399 = vlaneseq
      %v2400 = vshrl.u32 %v2399, 7
      %v2401 = vsub.s32 %v708, %v2400
      %v2402 = vrot.slane %v2178, %v2401
      %v2403 = vlaneseq
      %v2404 = vshrl.u32 %v2403, 7
      %v2405 = vsub.s32 %v708, %v2404
      %v2406 = vrot.slane %v2179, %v2405
      %v2407 = vlaneseq
      %v2408 = vshrl.u32 %v2407, 7
      %v2409 = vsub.s32 %v708, %v2408
      %v2410 = vrot.slane %v2180, %v2409
      %v2411 = vlaneseq
      %v2412 = vshrl.u32 %v2411, 7
      %v2413 = vsub.s32 %v708, %v2412
      %v2414 = vrot.slane %v2181, %v2413
      %v2415 = vlaneseq
      %v2416 = vshrl.u32 %v2415, 7
      %v2417 = vsub.s32 %v708, %v2416
      %v2418 = vrot.slane %v2182, %v2417
      %v2419 = vlaneseq
      %v2420 = vshrl.u32 %v2419, 7
      %v2421 = vsub.s32 %v708, %v2420
      %v2422 = vrot.slane %v2183, %v2421
      %v2423 = vlaneseq
      %v2424 = vshrl.u32 %v2423, 7
      %v2425 = vsub.s32 %v708, %v2424
      %v2426 = vrot.slane %v2184, %v2425
      %v2427 = vlaneseq
      %v2428 = vshrl.u32 %v2427, 7
      %v2429 = vsub.s32 %v708, %v2428
      %v2430 = vrot.slane %v2185, %v2429
      %v2431 = vlaneseq
      %v2432 = vshrl.u32 %v2431, 7
      %v2433 = vsub.s32 %v708, %v2432
      %v2434 = vrot.slane %v2186, %v2433
      %v2435 = vlaneseq
      %v2436 = vshrl.u32 %v2435, 7
      %v2437 = vsub.s32 %v708, %v2436
      %v2438 = vrot.slane %v2187, %v2437
      %v2439 = vlaneseq
      %v2440 = vshrl.u32 %v2439, 7
      %v2441 = vsub.s32 %v708, %v2440
      %v2442 = vrot.slane %v2188, %v2441
      %v2443 = vlaneseq
      %v2444 = vshrl.u32 %v2443, 7
      %v2445 = vsub.s32 %v708, %v2444
      %v2446 = vrot.slane %v2189, %v2445
      %v2447 = vlaneseq
      %v2448 = vshrl.u32 %v2447, 7
      %v2449 = vsub.s32 %v708, %v2448
      %v2450 = vrot.slane %v2190, %v2449
      %v2451 = vlaneseq
      %v2452 = vshrl.u32 %v2451, 7
      %v2453 = vsub.s32 %v708, %v2452
      %v2454 = vrot.slane %v2191, %v2453
      %v2455 = vlaneseq
      %v2456 = vshrl.u32 %v2455, 7
      %v2457 = vsub.s32 %v708, %v2456
      %v2458 = vrot.slane %v2192, %v2457
      %v2459 = vlaneseq
      %v2460 = vshrl.u32 %v2459, 7
      %v2461 = vsub.s32 %v708, %v2460
      %v2462 = vrot.slane %v2193, %v2461
      %v2463 = vlaneseq
      %v2464 = vshrl.u32 %v2463, 7
      %v2465 = vsub.s32 %v708, %v2464
      %v2466 = vrot.slane %v2194, %v2465
      %v2467 = vlaneseq
      %v2468 = vshrl.u32 %v2467, 7
      %v2469 = vsub.s32 %v708, %v2468
      %v2470 = vrot.slane %v2195, %v2469
      %v2471 = vlaneseq
      %v2472 = vshrl.u32 %v2471, 7
      %v2473 = vsub.s32 %v708, %v2472
      %v2474 = vrot.slane %v2196, %v2473
      %v2475 = vlaneseq
      %v2476 = vshrl.u32 %v2475, 7
      %v2477 = vsub.s32 %v708, %v2476
      %v2478 = vrot.slane %v2197, %v2477
      %v2479 = vlaneseq
      %v2480 = vshrl.u32 %v2479, 7
      %v2481 = vsub.s32 %v708, %v2480
      %v2482 = vrot.slane %v2198, %v2481
      %v2483 = vlaneseq
      %v2484 = vshrl.u32 %v2483, 7
      %v2485 = vsub.s32 %v708, %v2484
      %v2486 = vrot.slane %v2199, %v2485
      %v2487 = vlaneseq
      %v2488 = vshrl.u32 %v2487, 7
      %v2489 = vsub.s32 %v708, %v2488
      %v2490 = vrot.slane %v2200, %v2489
      %v2491 = vlaneseq
      %v2492 = vshrl.u32 %v2491, 7
      %v2493 = vsub.s32 %v708, %v2492
      %v2494 = vrot.slane %v2201, %v2493
      %v2495 = vlaneseq
      %v2496 = vshrl.u32 %v2495, 7
      %v2497 = vsub.s32 %v708, %v2496
      %v2498 = vrot.slane %v2202, %v2497
      %v2499 = vlaneseq
      %v2500 = vshrl.u32 %v2499, 7
      %v2501 = vsub.s32 %v708, %v2500
      %v2502 = vrot.slane %v2203, %v2501
      %v2503 = vlaneseq
      %v2504 = vshrl.u32 %v2503, 7
      %v2505 = vsub.s32 %v708, %v2504
      %v2506 = vrot.slane %v2204, %v2505
      %v2507 = vlaneseq
      %v2508 = vshrl.u32 %v2507, 7
      %v2509 = vsub.s32 %v708, %v2508
      %v2510 = vrot.slane %v2205, %v2509
      %v2511 = vlaneseq
      %v2512 = vshrl.u32 %v2511, 7
      %v2513 = vsub.s32 %v708, %v2512
      %v2514 = vrot.slane %v2206, %v2513
      %v2515 = vlaneseq
      %v2516 = vshrl.u32 %v2515, 7
      %v2517 = vsub.s32 %v708, %v2516
      %v2518 = vrot.slane %v2207, %v2517
      %v2519 = vlaneseq
      %v2520 = vshrl.u32 %v2519, 7
      %v2521 = vsub.s32 %v708, %v2520
      %v2522 = vrot.slane %v2208, %v2521
      %v2523 = vlaneseq
      %v2524 = vshrl.u32 %v2523, 7
      %v2525 = vsub.s32 %v708, %v2524
      %v2526 = vrot.slane %v2209, %v2525
      %v2527 = vlaneseq
      %v2528 = vshrl.u32 %v2527, 7
      %v2529 = vsub.s32 %v708, %v2528
      %v2530 = vrot.slane %v2210, %v2529
      %vm2531 = vcmask 1041409
      %v2532 = vsel %vm2531, %v2282, %v2278
      %vm2533 = vcmask 1042434
      %v2534 = vsel %vm2533, %v2286, %v2532
      %vm2535 = vcmask 1043459
      %v2536 = vsel %vm2535, %v2290, %v2534
      %vm2537 = vcmask 1044484
      %v2538 = vsel %vm2537, %v2294, %v2536
      %vm2539 = vcmask 1045509
      %v2540 = vsel %vm2539, %v2298, %v2538
      %vm2541 = vcmask 1046534
      %v2542 = vsel %vm2541, %v2302, %v2540
      %vm2543 = vcmask 1047559
      %v2544 = vsel %vm2543, %v2306, %v2542
      %v2545 = vsel %vm2531, %v2314, %v2310
      %v2546 = vsel %vm2533, %v2318, %v2545
      %v2547 = vsel %vm2535, %v2322, %v2546
      %v2548 = vsel %vm2537, %v2326, %v2547
      %v2549 = vsel %vm2539, %v2330, %v2548
      %v2550 = vsel %vm2541, %v2334, %v2549
      %v2551 = vsel %vm2543, %v2338, %v2550
      %v2552 = vsel %vm2531, %v2346, %v2342
      %v2553 = vsel %vm2533, %v2350, %v2552
      %v2554 = vsel %vm2535, %v2354, %v2553
      %v2555 = vsel %vm2537, %v2358, %v2554
      %v2556 = vsel %vm2539, %v2362, %v2555
      %v2557 = vsel %vm2541, %v2366, %v2556
      %v2558 = vsel %vm2543, %v2370, %v2557
      %v2559 = vsel %vm2531, %v2378, %v2374
      %v2560 = vsel %vm2533, %v2382, %v2559
      %v2561 = vsel %vm2535, %v2386, %v2560
      %v2562 = vsel %vm2537, %v2390, %v2561
      %v2563 = vsel %vm2539, %v2394, %v2562
      %v2564 = vsel %vm2541, %v2398, %v2563
      %v2565 = vsel %vm2543, %v2402, %v2564
      %v2566 = vsel %vm2531, %v2410, %v2406
      %v2567 = vsel %vm2533, %v2414, %v2566
      %v2568 = vsel %vm2535, %v2418, %v2567
      %v2569 = vsel %vm2537, %v2422, %v2568
      %v2570 = vsel %vm2539, %v2426, %v2569
      %v2571 = vsel %vm2541, %v2430, %v2570
      %v2572 = vsel %vm2543, %v2434, %v2571
      %v2573 = vsel %vm2531, %v2442, %v2438
      %v2574 = vsel %vm2533, %v2446, %v2573
      %v2575 = vsel %vm2535, %v2450, %v2574
      %v2576 = vsel %vm2537, %v2454, %v2575
      %v2577 = vsel %vm2539, %v2458, %v2576
      %v2578 = vsel %vm2541, %v2462, %v2577
      %v2579 = vsel %vm2543, %v2466, %v2578
      %v2580 = vsel %vm2531, %v2474, %v2470
      %v2581 = vsel %vm2533, %v2478, %v2580
      %v2582 = vsel %vm2535, %v2482, %v2581
      %v2583 = vsel %vm2537, %v2486, %v2582
      %v2584 = vsel %vm2539, %v2490, %v2583
      %v2585 = vsel %vm2541, %v2494, %v2584
      %v2586 = vsel %vm2543, %v2498, %v2585
      %v2587 = vsel %vm2531, %v2506, %v2502
      %v2588 = vsel %vm2533, %v2510, %v2587
      %v2589 = vsel %vm2535, %v2514, %v2588
      %v2590 = vsel %vm2537, %v2518, %v2589
      %v2591 = vsel %vm2539, %v2522, %v2590
      %v2592 = vsel %vm2541, %v2526, %v2591
      %v2593 = vsel %vm2543, %v2530, %v2592
      %vm2602 = vcmask 64512
      %v2603 = vsel %vm2602, %v2544, -inf
      %2604 = vmax.xlane.f32.xlu0 %v2603
      %v2605 = vpop.xlane.xlu0 %2604
      %v2606 = vsel %vm2602, %v2551, -inf
      %2607 = vmax.xlane.f32.xlu0 %v2606
      %v2608 = vpop.xlane.xlu0 %2607
      %v2609 = vsel %vm2602, %v2558, -inf
      %2610 = vmax.xlane.f32.xlu0 %v2609
      %v2611 = vpop.xlane.xlu0 %2610
      %v2612 = vsel %vm2602, %v2565, -inf
      %2613 = vmax.xlane.f32.xlu0 %v2612
      %v2614 = vpop.xlane.xlu0 %2613
      %v2615 = vsel %vm2602, %v2572, -inf
      %2616 = vmax.xlane.f32.xlu0 %v2615
      %v2617 = vpop.xlane.xlu0 %2616
      %v2618 = vsel %vm2602, %v2579, -inf
      %2619 = vmax.xlane.f32.xlu0 %v2618
      %v2620 = vpop.xlane.xlu0 %2619
      %v2621 = vsel %vm2602, %v2586, -inf
      %2622 = vmax.xlane.f32.xlu0 %v2621
      %v2623 = vpop.xlane.xlu0 %2622
      %v2624 = vsel %vm2602, %v2593, -inf
      %2625 = vmax.xlane.f32.xlu0 %v2624
      %v2626 = vpop.xlane.xlu0 %2625
      %v2635 = vlaneseq
      %v2636 = vshrl.u32 %v2635, 7
      %v2637 = vsub.s32 0, %v2636
      %v2638 = vrot.slane %v2605, %v2637
      %v2639 = vlaneseq
      %v2640 = vshrl.u32 %v2639, 7
      %v2641 = vsub.s32 1, %v2640
      %v2642 = vrot.slane %v2605, %v2641
      %v2643 = vlaneseq
      %v2644 = vshrl.u32 %v2643, 7
      %v2645 = vsub.s32 2, %v2644
      %v2646 = vrot.slane %v2605, %v2645
      %v2647 = vlaneseq
      %v2648 = vshrl.u32 %v2647, 7
      %v2649 = vsub.s32 3, %v2648
      %v2650 = vrot.slane %v2605, %v2649
      %v2651 = vlaneseq
      %v2652 = vshrl.u32 %v2651, 7
      %v2653 = vsub.s32 4, %v2652
      %v2654 = vrot.slane %v2605, %v2653
      %v2655 = vlaneseq
      %v2656 = vshrl.u32 %v2655, 7
      %v2657 = vsub.s32 5, %v2656
      %v2658 = vrot.slane %v2605, %v2657
      %v2659 = vlaneseq
      %v2660 = vshrl.u32 %v2659, 7
      %v2661 = vsub.s32 6, %v2660
      %v2662 = vrot.slane %v2605, %v2661
      %v2663 = vlaneseq
      %v2664 = vshrl.u32 %v2663, 7
      %v2665 = vsub.s32 7, %v2664
      %v2666 = vrot.slane %v2605, %v2665
      %v2667 = vlaneseq
      %v2668 = vshrl.u32 %v2667, 7
      %v2669 = vsub.s32 0, %v2668
      %v2670 = vrot.slane %v2608, %v2669
      %v2671 = vlaneseq
      %v2672 = vshrl.u32 %v2671, 7
      %v2673 = vsub.s32 1, %v2672
      %v2674 = vrot.slane %v2608, %v2673
      %v2675 = vlaneseq
      %v2676 = vshrl.u32 %v2675, 7
      %v2677 = vsub.s32 2, %v2676
      %v2678 = vrot.slane %v2608, %v2677
      %v2679 = vlaneseq
      %v2680 = vshrl.u32 %v2679, 7
      %v2681 = vsub.s32 3, %v2680
      %v2682 = vrot.slane %v2608, %v2681
      %v2683 = vlaneseq
      %v2684 = vshrl.u32 %v2683, 7
      %v2685 = vsub.s32 4, %v2684
      %v2686 = vrot.slane %v2608, %v2685
      %v2687 = vlaneseq
      %v2688 = vshrl.u32 %v2687, 7
      %v2689 = vsub.s32 5, %v2688
      %v2690 = vrot.slane %v2608, %v2689
      %v2691 = vlaneseq
      %v2692 = vshrl.u32 %v2691, 7
      %v2693 = vsub.s32 6, %v2692
      %v2694 = vrot.slane %v2608, %v2693
      %v2695 = vlaneseq
      %v2696 = vshrl.u32 %v2695, 7
      %v2697 = vsub.s32 7, %v2696
      %v2698 = vrot.slane %v2608, %v2697
      %v2699 = vlaneseq
      %v2700 = vshrl.u32 %v2699, 7
      %v2701 = vsub.s32 0, %v2700
      %v2702 = vrot.slane %v2611, %v2701
      %v2703 = vlaneseq
      %v2704 = vshrl.u32 %v2703, 7
      %v2705 = vsub.s32 1, %v2704
      %v2706 = vrot.slane %v2611, %v2705
      %v2707 = vlaneseq
      %v2708 = vshrl.u32 %v2707, 7
      %v2709 = vsub.s32 2, %v2708
      %v2710 = vrot.slane %v2611, %v2709
      %v2711 = vlaneseq
      %v2712 = vshrl.u32 %v2711, 7
      %v2713 = vsub.s32 3, %v2712
      %v2714 = vrot.slane %v2611, %v2713
      %v2715 = vlaneseq
      %v2716 = vshrl.u32 %v2715, 7
      %v2717 = vsub.s32 4, %v2716
      %v2718 = vrot.slane %v2611, %v2717
      %v2719 = vlaneseq
      %v2720 = vshrl.u32 %v2719, 7
      %v2721 = vsub.s32 5, %v2720
      %v2722 = vrot.slane %v2611, %v2721
      %v2723 = vlaneseq
      %v2724 = vshrl.u32 %v2723, 7
      %v2725 = vsub.s32 6, %v2724
      %v2726 = vrot.slane %v2611, %v2725
      %v2727 = vlaneseq
      %v2728 = vshrl.u32 %v2727, 7
      %v2729 = vsub.s32 7, %v2728
      %v2730 = vrot.slane %v2611, %v2729
      %v2731 = vlaneseq
      %v2732 = vshrl.u32 %v2731, 7
      %v2733 = vsub.s32 0, %v2732
      %v2734 = vrot.slane %v2614, %v2733
      %v2735 = vlaneseq
      %v2736 = vshrl.u32 %v2735, 7
      %v2737 = vsub.s32 1, %v2736
      %v2738 = vrot.slane %v2614, %v2737
      %v2739 = vlaneseq
      %v2740 = vshrl.u32 %v2739, 7
      %v2741 = vsub.s32 2, %v2740
      %v2742 = vrot.slane %v2614, %v2741
      %v2743 = vlaneseq
      %v2744 = vshrl.u32 %v2743, 7
      %v2745 = vsub.s32 3, %v2744
      %v2746 = vrot.slane %v2614, %v2745
      %v2747 = vlaneseq
      %v2748 = vshrl.u32 %v2747, 7
      %v2749 = vsub.s32 4, %v2748
      %v2750 = vrot.slane %v2614, %v2749
      %v2751 = vlaneseq
      %v2752 = vshrl.u32 %v2751, 7
      %v2753 = vsub.s32 5, %v2752
      %v2754 = vrot.slane %v2614, %v2753
      %v2755 = vlaneseq
      %v2756 = vshrl.u32 %v2755, 7
      %v2757 = vsub.s32 6, %v2756
      %v2758 = vrot.slane %v2614, %v2757
      %v2759 = vlaneseq
      %v2760 = vshrl.u32 %v2759, 7
      %v2761 = vsub.s32 7, %v2760
      %v2762 = vrot.slane %v2614, %v2761
      %v2763 = vlaneseq
      %v2764 = vshrl.u32 %v2763, 7
      %v2765 = vsub.s32 0, %v2764
      %v2766 = vrot.slane %v2617, %v2765
      %v2767 = vlaneseq
      %v2768 = vshrl.u32 %v2767, 7
      %v2769 = vsub.s32 1, %v2768
      %v2770 = vrot.slane %v2617, %v2769
      %v2771 = vlaneseq
      %v2772 = vshrl.u32 %v2771, 7
      %v2773 = vsub.s32 2, %v2772
      %v2774 = vrot.slane %v2617, %v2773
      %v2775 = vlaneseq
      %v2776 = vshrl.u32 %v2775, 7
      %v2777 = vsub.s32 3, %v2776
      %v2778 = vrot.slane %v2617, %v2777
      %v2779 = vlaneseq
      %v2780 = vshrl.u32 %v2779, 7
      %v2781 = vsub.s32 4, %v2780
      %v2782 = vrot.slane %v2617, %v2781
      %v2783 = vlaneseq
      %v2784 = vshrl.u32 %v2783, 7
      %v2785 = vsub.s32 5, %v2784
      %v2786 = vrot.slane %v2617, %v2785
      %v2787 = vlaneseq
      %v2788 = vshrl.u32 %v2787, 7
      %v2789 = vsub.s32 6, %v2788
      %v2790 = vrot.slane %v2617, %v2789
      %v2791 = vlaneseq
      %v2792 = vshrl.u32 %v2791, 7
      %v2793 = vsub.s32 7, %v2792
      %v2794 = vrot.slane %v2617, %v2793
      %v2795 = vlaneseq
      %v2796 = vshrl.u32 %v2795, 7
      %v2797 = vsub.s32 0, %v2796
      %v2798 = vrot.slane %v2620, %v2797
      %v2799 = vlaneseq
      %v2800 = vshrl.u32 %v2799, 7
      %v2801 = vsub.s32 1, %v2800
      %v2802 = vrot.slane %v2620, %v2801
      %v2803 = vlaneseq
      %v2804 = vshrl.u32 %v2803, 7
      %v2805 = vsub.s32 2, %v2804
      %v2806 = vrot.slane %v2620, %v2805
      %v2807 = vlaneseq
      %v2808 = vshrl.u32 %v2807, 7
      %v2809 = vsub.s32 3, %v2808
      %v2810 = vrot.slane %v2620, %v2809
      %v2811 = vlaneseq
      %v2812 = vshrl.u32 %v2811, 7
      %v2813 = vsub.s32 4, %v2812
      %v2814 = vrot.slane %v2620, %v2813
      %v2815 = vlaneseq
      %v2816 = vshrl.u32 %v2815, 7
      %v2817 = vsub.s32 5, %v2816
      %v2818 = vrot.slane %v2620, %v2817
      %v2819 = vlaneseq
      %v2820 = vshrl.u32 %v2819, 7
      %v2821 = vsub.s32 6, %v2820
      %v2822 = vrot.slane %v2620, %v2821
      %v2823 = vlaneseq
      %v2824 = vshrl.u32 %v2823, 7
      %v2825 = vsub.s32 7, %v2824
      %v2826 = vrot.slane %v2620, %v2825
      %v2827 = vlaneseq
      %v2828 = vshrl.u32 %v2827, 7
      %v2829 = vsub.s32 0, %v2828
      %v2830 = vrot.slane %v2623, %v2829
      %v2831 = vlaneseq
      %v2832 = vshrl.u32 %v2831, 7
      %v2833 = vsub.s32 1, %v2832
      %v2834 = vrot.slane %v2623, %v2833
      %v2835 = vlaneseq
      %v2836 = vshrl.u32 %v2835, 7
      %v2837 = vsub.s32 2, %v2836
      %v2838 = vrot.slane %v2623, %v2837
      %v2839 = vlaneseq
      %v2840 = vshrl.u32 %v2839, 7
      %v2841 = vsub.s32 3, %v2840
      %v2842 = vrot.slane %v2623, %v2841
      %v2843 = vlaneseq
      %v2844 = vshrl.u32 %v2843, 7
      %v2845 = vsub.s32 4, %v2844
      %v2846 = vrot.slane %v2623, %v2845
      %v2847 = vlaneseq
      %v2848 = vshrl.u32 %v2847, 7
      %v2849 = vsub.s32 5, %v2848
      %v2850 = vrot.slane %v2623, %v2849
      %v2851 = vlaneseq
      %v2852 = vshrl.u32 %v2851, 7
      %v2853 = vsub.s32 6, %v2852
      %v2854 = vrot.slane %v2623, %v2853
      %v2855 = vlaneseq
      %v2856 = vshrl.u32 %v2855, 7
      %v2857 = vsub.s32 7, %v2856
      %v2858 = vrot.slane %v2623, %v2857
      %v2859 = vlaneseq
      %v2860 = vshrl.u32 %v2859, 7
      %v2861 = vsub.s32 0, %v2860
      %v2862 = vrot.slane %v2626, %v2861
      %v2863 = vlaneseq
      %v2864 = vshrl.u32 %v2863, 7
      %v2865 = vsub.s32 1, %v2864
      %v2866 = vrot.slane %v2626, %v2865
      %v2867 = vlaneseq
      %v2868 = vshrl.u32 %v2867, 7
      %v2869 = vsub.s32 2, %v2868
      %v2870 = vrot.slane %v2626, %v2869
      %v2871 = vlaneseq
      %v2872 = vshrl.u32 %v2871, 7
      %v2873 = vsub.s32 3, %v2872
      %v2874 = vrot.slane %v2626, %v2873
      %v2875 = vlaneseq
      %v2876 = vshrl.u32 %v2875, 7
      %v2877 = vsub.s32 4, %v2876
      %v2878 = vrot.slane %v2626, %v2877
      %v2879 = vlaneseq
      %v2880 = vshrl.u32 %v2879, 7
      %v2881 = vsub.s32 5, %v2880
      %v2882 = vrot.slane %v2626, %v2881
      %v2883 = vlaneseq
      %v2884 = vshrl.u32 %v2883, 7
      %v2885 = vsub.s32 6, %v2884
      %v2886 = vrot.slane %v2626, %v2885
      %v2887 = vlaneseq
      %v2888 = vshrl.u32 %v2887, 7
      %v2889 = vsub.s32 7, %v2888
      %v2890 = vrot.slane %v2626, %v2889
      %v2955 = vsub.f32 %v2147, %v2638
      %v2956 = vsub.f32 %v2148, %v2642
      %v2957 = vsub.f32 %v2149, %v2646
      %v2958 = vsub.f32 %v2150, %v2650
      %v2959 = vsub.f32 %v2151, %v2654
      %v2960 = vsub.f32 %v2152, %v2658
      %v2961 = vsub.f32 %v2153, %v2662
      %v2962 = vsub.f32 %v2154, %v2666
      %v2963 = vsub.f32 %v2155, %v2670
      %v2964 = vsub.f32 %v2156, %v2674
      %v2965 = vsub.f32 %v2157, %v2678
      %v2966 = vsub.f32 %v2158, %v2682
      %v2967 = vsub.f32 %v2159, %v2686
      %v2968 = vsub.f32 %v2160, %v2690
      %v2969 = vsub.f32 %v2161, %v2694
      %v2970 = vsub.f32 %v2162, %v2698
      %v2971 = vsub.f32 %v2163, %v2702
      %v2972 = vsub.f32 %v2164, %v2706
      %v2973 = vsub.f32 %v2165, %v2710
      %v2974 = vsub.f32 %v2166, %v2714
      %v2975 = vsub.f32 %v2167, %v2718
      %v2976 = vsub.f32 %v2168, %v2722
      %v2977 = vsub.f32 %v2169, %v2726
      %v2978 = vsub.f32 %v2170, %v2730
      %v2979 = vsub.f32 %v2171, %v2734
      %v2980 = vsub.f32 %v2172, %v2738
      %v2981 = vsub.f32 %v2173, %v2742
      %v2982 = vsub.f32 %v2174, %v2746
      %v2983 = vsub.f32 %v2175, %v2750
      %v2984 = vsub.f32 %v2176, %v2754
      %v2985 = vsub.f32 %v2177, %v2758
      %v2986 = vsub.f32 %v2178, %v2762
      %v2987 = vsub.f32 %v2179, %v2766
      %v2988 = vsub.f32 %v2180, %v2770
      %v2989 = vsub.f32 %v2181, %v2774
      %v2990 = vsub.f32 %v2182, %v2778
      %v2991 = vsub.f32 %v2183, %v2782
      %v2992 = vsub.f32 %v2184, %v2786
      %v2993 = vsub.f32 %v2185, %v2790
      %v2994 = vsub.f32 %v2186, %v2794
      %v2995 = vsub.f32 %v2187, %v2798
      %v2996 = vsub.f32 %v2188, %v2802
      %v2997 = vsub.f32 %v2189, %v2806
      %v2998 = vsub.f32 %v2190, %v2810
      %v2999 = vsub.f32 %v2191, %v2814
      %v3000 = vsub.f32 %v2192, %v2818
      %v3001 = vsub.f32 %v2193, %v2822
      %v3002 = vsub.f32 %v2194, %v2826
      %v3003 = vsub.f32 %v2195, %v2830
      %v3004 = vsub.f32 %v2196, %v2834
      %v3005 = vsub.f32 %v2197, %v2838
      %v3006 = vsub.f32 %v2198, %v2842
      %v3007 = vsub.f32 %v2199, %v2846
      %v3008 = vsub.f32 %v2200, %v2850
      %v3009 = vsub.f32 %v2201, %v2854
      %v3010 = vsub.f32 %v2202, %v2858
      %v3011 = vsub.f32 %v2203, %v2862
      %v3012 = vsub.f32 %v2204, %v2866
      %v3013 = vsub.f32 %v2205, %v2870
      %v3014 = vsub.f32 %v2206, %v2874
      %v3015 = vsub.f32 %v2207, %v2878
      %v3016 = vsub.f32 %v2208, %v2882
      %v3017 = vsub.f32 %v2209, %v2886
      %v3018 = vsub.f32 %v2210, %v2890
      %v3019 = vmul.f32 %v2955, 1.442695
      %v3020 = vpow.pop %v3019
      %v3021 = vmul.f32 %v2956, 1.442695
      %v3022 = vpow.pop %v3021
      %v3023 = vmul.f32 %v2957, 1.442695
      %v3024 = vpow.pop %v3023
      %v3025 = vmul.f32 %v2958, 1.442695
      %v3026 = vpow.pop %v3025
      %v3027 = vmul.f32 %v2959, 1.442695
      %v3028 = vpow.pop %v3027
      %v3029 = vmul.f32 %v2960, 1.442695
      %v3030 = vpow.pop %v3029
      %v3031 = vmul.f32 %v2961, 1.442695
      %v3032 = vpow.pop %v3031
      %v3033 = vmul.f32 %v2962, 1.442695
      %v3034 = vpow.pop %v3033
      %v3035 = vmul.f32 %v2963, 1.442695
      %v3036 = vpow.pop %v3035
      %v3037 = vmul.f32 %v2964, 1.442695
      %v3038 = vpow.pop %v3037
      %v3039 = vmul.f32 %v2965, 1.442695
      %v3040 = vpow.pop %v3039
      %v3041 = vmul.f32 %v2966, 1.442695
      %v3042 = vpow.pop %v3041
      %v3043 = vmul.f32 %v2967, 1.442695
      %v3044 = vpow.pop %v3043
      %v3045 = vmul.f32 %v2968, 1.442695
      %v3046 = vpow.pop %v3045
      %v3047 = vmul.f32 %v2969, 1.442695
      %v3048 = vpow.pop %v3047
      %v3049 = vmul.f32 %v2970, 1.442695
      %v3050 = vpow.pop %v3049
      %v3051 = vmul.f32 %v2971, 1.442695
      %v3052 = vpow.pop %v3051
      %v3053 = vmul.f32 %v2972, 1.442695
      %v3054 = vpow.pop %v3053
      %v3055 = vmul.f32 %v2973, 1.442695
      %v3056 = vpow.pop %v3055
      %v3057 = vmul.f32 %v2974, 1.442695
      %v3058 = vpow.pop %v3057
      %v3059 = vmul.f32 %v2975, 1.442695
      %v3060 = vpow.pop %v3059
      %v3061 = vmul.f32 %v2976, 1.442695
      %v3062 = vpow.pop %v3061
      %v3063 = vmul.f32 %v2977, 1.442695
      %v3064 = vpow.pop %v3063
      %v3065 = vmul.f32 %v2978, 1.442695
      %v3066 = vpow.pop %v3065
      %v3067 = vmul.f32 %v2979, 1.442695
      %v3068 = vpow.pop %v3067
      %v3069 = vmul.f32 %v2980, 1.442695
      %v3070 = vpow.pop %v3069
      %v3071 = vmul.f32 %v2981, 1.442695
      %v3072 = vpow.pop %v3071
      %v3073 = vmul.f32 %v2982, 1.442695
      %v3074 = vpow.pop %v3073
      %v3075 = vmul.f32 %v2983, 1.442695
      %v3076 = vpow.pop %v3075
      %v3077 = vmul.f32 %v2984, 1.442695
      %v3078 = vpow.pop %v3077
      %v3079 = vmul.f32 %v2985, 1.442695
      %v3080 = vpow.pop %v3079
      %v3081 = vmul.f32 %v2986, 1.442695
      %v3082 = vpow.pop %v3081
      %v3083 = vmul.f32 %v2987, 1.442695
      %v3084 = vpow.pop %v3083
      %v3085 = vmul.f32 %v2988, 1.442695
      %v3086 = vpow.pop %v3085
      %v3087 = vmul.f32 %v2989, 1.442695
      %v3088 = vpow.pop %v3087
      %v3089 = vmul.f32 %v2990, 1.442695
      %v3090 = vpow.pop %v3089
      %v3091 = vmul.f32 %v2991, 1.442695
      %v3092 = vpow.pop %v3091
      %v3093 = vmul.f32 %v2992, 1.442695
      %v3094 = vpow.pop %v3093
      %v3095 = vmul.f32 %v2993, 1.442695
      %v3096 = vpow.pop %v3095
      %v3097 = vmul.f32 %v2994, 1.442695
      %v3098 = vpow.pop %v3097
      %v3099 = vmul.f32 %v2995, 1.442695
      %v3100 = vpow.pop %v3099
      %v3101 = vmul.f32 %v2996, 1.442695
      %v3102 = vpow.pop %v3101
      %v3103 = vmul.f32 %v2997, 1.442695
      %v3104 = vpow.pop %v3103
      %v3105 = vmul.f32 %v2998, 1.442695
      %v3106 = vpow.pop %v3105
      %v3107 = vmul.f32 %v2999, 1.442695
      %v3108 = vpow.pop %v3107
      %v3109 = vmul.f32 %v3000, 1.442695
      %v3110 = vpow.pop %v3109
      %v3111 = vmul.f32 %v3001, 1.442695
      %v3112 = vpow.pop %v3111
      %v3113 = vmul.f32 %v3002, 1.442695
      %v3114 = vpow.pop %v3113
      %v3115 = vmul.f32 %v3003, 1.442695
      %v3116 = vpow.pop %v3115
      %v3117 = vmul.f32 %v3004, 1.442695
      %v3118 = vpow.pop %v3117
      %v3119 = vmul.f32 %v3005, 1.442695
      %v3120 = vpow.pop %v3119
      %v3121 = vmul.f32 %v3006, 1.442695
      %v3122 = vpow.pop %v3121
      %v3123 = vmul.f32 %v3007, 1.442695
      %v3124 = vpow.pop %v3123
      %v3125 = vmul.f32 %v3008, 1.442695
      %v3126 = vpow.pop %v3125
      %v3127 = vmul.f32 %v3009, 1.442695
      %v3128 = vpow.pop %v3127
      %v3129 = vmul.f32 %v3010, 1.442695
      %v3130 = vpow.pop %v3129
      %v3131 = vmul.f32 %v3011, 1.442695
      %v3132 = vpow.pop %v3131
      %v3133 = vmul.f32 %v3012, 1.442695
      %v3134 = vpow.pop %v3133
      %v3135 = vmul.f32 %v3013, 1.442695
      %v3136 = vpow.pop %v3135
      %v3137 = vmul.f32 %v3014, 1.442695
      %v3138 = vpow.pop %v3137
      %v3139 = vmul.f32 %v3015, 1.442695
      %v3140 = vpow.pop %v3139
      %v3141 = vmul.f32 %v3016, 1.442695
      %v3142 = vpow.pop %v3141
      %v3143 = vmul.f32 %v3017, 1.442695
      %v3144 = vpow.pop %v3143
      %v3145 = vmul.f32 %v3018, 1.442695
      %v3146 = vpow.pop %v3145
      %3211 = vset.pattern.permute.xlu0 0
      %3212 = vperm.xlu0 %3211, %v3020
      %v3213 = vpop.permute.xlu0 %3212
      %3214 = vset.pattern.permute.xlu0 0
      %3215 = vperm.xlu0 %3214, %v3022
      %v3216 = vpop.permute.xlu0 %3215
      %3217 = vset.pattern.permute.xlu0 0
      %3218 = vperm.xlu0 %3217, %v3024
      %v3219 = vpop.permute.xlu0 %3218
      %3220 = vset.pattern.permute.xlu0 0
      %3221 = vperm.xlu0 %3220, %v3026
      %v3222 = vpop.permute.xlu0 %3221
      %3223 = vset.pattern.permute.xlu0 0
      %3224 = vperm.xlu0 %3223, %v3028
      %v3225 = vpop.permute.xlu0 %3224
      %3226 = vset.pattern.permute.xlu0 0
      %3227 = vperm.xlu0 %3226, %v3030
      %v3228 = vpop.permute.xlu0 %3227
      %3229 = vset.pattern.permute.xlu0 0
      %3230 = vperm.xlu0 %3229, %v3032
      %v3231 = vpop.permute.xlu0 %3230
      %3232 = vset.pattern.permute.xlu0 0
      %3233 = vperm.xlu0 %3232, %v3034
      %v3234 = vpop.permute.xlu0 %3233
      %3235 = vset.pattern.permute.xlu0 0
      %3236 = vperm.xlu0 %3235, %v3036
      %v3237 = vpop.permute.xlu0 %3236
      %3238 = vset.pattern.permute.xlu0 0
      %3239 = vperm.xlu0 %3238, %v3038
      %v3240 = vpop.permute.xlu0 %3239
      %3241 = vset.pattern.permute.xlu0 0
      %3242 = vperm.xlu0 %3241, %v3040
      %v3243 = vpop.permute.xlu0 %3242
      %3244 = vset.pattern.permute.xlu0 0
      %3245 = vperm.xlu0 %3244, %v3042
      %v3246 = vpop.permute.xlu0 %3245
      %3247 = vset.pattern.permute.xlu0 0
      %3248 = vperm.xlu0 %3247, %v3044
      %v3249 = vpop.permute.xlu0 %3248
      %3250 = vset.pattern.permute.xlu0 0
      %3251 = vperm.xlu0 %3250, %v3046
      %v3252 = vpop.permute.xlu0 %3251
      %3253 = vset.pattern.permute.xlu0 0
      %3254 = vperm.xlu0 %3253, %v3048
      %v3255 = vpop.permute.xlu0 %3254
      %3256 = vset.pattern.permute.xlu0 0
      %3257 = vperm.xlu0 %3256, %v3050
      %v3258 = vpop.permute.xlu0 %3257
      %3259 = vset.pattern.permute.xlu0 0
      %3260 = vperm.xlu0 %3259, %v3052
      %v3261 = vpop.permute.xlu0 %3260
      %3262 = vset.pattern.permute.xlu0 0
      %3263 = vperm.xlu0 %3262, %v3054
      %v3264 = vpop.permute.xlu0 %3263
      %3265 = vset.pattern.permute.xlu0 0
      %3266 = vperm.xlu0 %3265, %v3056
      %v3267 = vpop.permute.xlu0 %3266
      %3268 = vset.pattern.permute.xlu0 0
      %3269 = vperm.xlu0 %3268, %v3058
      %v3270 = vpop.permute.xlu0 %3269
      %3271 = vset.pattern.permute.xlu0 0
      %3272 = vperm.xlu0 %3271, %v3060
      %v3273 = vpop.permute.xlu0 %3272
      %3274 = vset.pattern.permute.xlu0 0
      %3275 = vperm.xlu0 %3274, %v3062
      %v3276 = vpop.permute.xlu0 %3275
      %3277 = vset.pattern.permute.xlu0 0
      %3278 = vperm.xlu0 %3277, %v3064
      %v3279 = vpop.permute.xlu0 %3278
      %3280 = vset.pattern.permute.xlu0 0
      %3281 = vperm.xlu0 %3280, %v3066
      %v3282 = vpop.permute.xlu0 %3281
      %3283 = vset.pattern.permute.xlu0 0
      %3284 = vperm.xlu0 %3283, %v3068
      %v3285 = vpop.permute.xlu0 %3284
      %3286 = vset.pattern.permute.xlu0 0
      %3287 = vperm.xlu0 %3286, %v3070
      %v3288 = vpop.permute.xlu0 %3287
      %3289 = vset.pattern.permute.xlu0 0
      %3290 = vperm.xlu0 %3289, %v3072
      %v3291 = vpop.permute.xlu0 %3290
      %3292 = vset.pattern.permute.xlu0 0
      %3293 = vperm.xlu0 %3292, %v3074
      %v3294 = vpop.permute.xlu0 %3293
      %3295 = vset.pattern.permute.xlu0 0
      %3296 = vperm.xlu0 %3295, %v3076
      %v3297 = vpop.permute.xlu0 %3296
      %3298 = vset.pattern.permute.xlu0 0
      %3299 = vperm.xlu0 %3298, %v3078
      %v3300 = vpop.permute.xlu0 %3299
      %3301 = vset.pattern.permute.xlu0 0
      %3302 = vperm.xlu0 %3301, %v3080
      %v3303 = vpop.permute.xlu0 %3302
      %3304 = vset.pattern.permute.xlu0 0
      %3305 = vperm.xlu0 %3304, %v3082
      %v3306 = vpop.permute.xlu0 %3305
      %3307 = vset.pattern.permute.xlu0 0
      %3308 = vperm.xlu0 %3307, %v3084
      %v3309 = vpop.permute.xlu0 %3308
      %3310 = vset.pattern.permute.xlu0 0
      %3311 = vperm.xlu0 %3310, %v3086
      %v3312 = vpop.permute.xlu0 %3311
      %3313 = vset.pattern.permute.xlu0 0
      %3314 = vperm.xlu0 %3313, %v3088
      %v3315 = vpop.permute.xlu0 %3314
      %3316 = vset.pattern.permute.xlu0 0
      %3317 = vperm.xlu0 %3316, %v3090
      %v3318 = vpop.permute.xlu0 %3317
      %3319 = vset.pattern.permute.xlu0 0
      %3320 = vperm.xlu0 %3319, %v3092
      %v3321 = vpop.permute.xlu0 %3320
      %3322 = vset.pattern.permute.xlu0 0
      %3323 = vperm.xlu0 %3322, %v3094
      %v3324 = vpop.permute.xlu0 %3323
      %3325 = vset.pattern.permute.xlu0 0
      %3326 = vperm.xlu0 %3325, %v3096
      %v3327 = vpop.permute.xlu0 %3326
      %3328 = vset.pattern.permute.xlu0 0
      %3329 = vperm.xlu0 %3328, %v3098
      %v3330 = vpop.permute.xlu0 %3329
      %3331 = vset.pattern.permute.xlu0 0
      %3332 = vperm.xlu0 %3331, %v3100
      %v3333 = vpop.permute.xlu0 %3332
      %3334 = vset.pattern.permute.xlu0 0
      %3335 = vperm.xlu0 %3334, %v3102
      %v3336 = vpop.permute.xlu0 %3335
      %3337 = vset.pattern.permute.xlu0 0
      %3338 = vperm.xlu0 %3337, %v3104
      %v3339 = vpop.permute.xlu0 %3338
      %3340 = vset.pattern.permute.xlu0 0
      %3341 = vperm.xlu0 %3340, %v3106
      %v3342 = vpop.permute.xlu0 %3341
      %3343 = vset.pattern.permute.xlu0 0
      %3344 = vperm.xlu0 %3343, %v3108
      %v3345 = vpop.permute.xlu0 %3344
      %3346 = vset.pattern.permute.xlu0 0
      %3347 = vperm.xlu0 %3346, %v3110
      %v3348 = vpop.permute.xlu0 %3347
      %3349 = vset.pattern.permute.xlu0 0
      %3350 = vperm.xlu0 %3349, %v3112
      %v3351 = vpop.permute.xlu0 %3350
      %3352 = vset.pattern.permute.xlu0 0
      %3353 = vperm.xlu0 %3352, %v3114
      %v3354 = vpop.permute.xlu0 %3353
      %3355 = vset.pattern.permute.xlu0 0
      %3356 = vperm.xlu0 %3355, %v3116
      %v3357 = vpop.permute.xlu0 %3356
      %3358 = vset.pattern.permute.xlu0 0
      %3359 = vperm.xlu0 %3358, %v3118
      %v3360 = vpop.permute.xlu0 %3359
      %3361 = vset.pattern.permute.xlu0 0
      %3362 = vperm.xlu0 %3361, %v3120
      %v3363 = vpop.permute.xlu0 %3362
      %3364 = vset.pattern.permute.xlu0 0
      %3365 = vperm.xlu0 %3364, %v3122
      %v3366 = vpop.permute.xlu0 %3365
      %3367 = vset.pattern.permute.xlu0 0
      %3368 = vperm.xlu0 %3367, %v3124
      %v3369 = vpop.permute.xlu0 %3368
      %3370 = vset.pattern.permute.xlu0 0
      %3371 = vperm.xlu0 %3370, %v3126
      %v3372 = vpop.permute.xlu0 %3371
      %3373 = vset.pattern.permute.xlu0 0
      %3374 = vperm.xlu0 %3373, %v3128
      %v3375 = vpop.permute.xlu0 %3374
      %3376 = vset.pattern.permute.xlu0 0
      %3377 = vperm.xlu0 %3376, %v3130
      %v3378 = vpop.permute.xlu0 %3377
      %3379 = vset.pattern.permute.xlu0 0
      %3380 = vperm.xlu0 %3379, %v3132
      %v3381 = vpop.permute.xlu0 %3380
      %3382 = vset.pattern.permute.xlu0 0
      %3383 = vperm.xlu0 %3382, %v3134
      %v3384 = vpop.permute.xlu0 %3383
      %3385 = vset.pattern.permute.xlu0 0
      %3386 = vperm.xlu0 %3385, %v3136
      %v3387 = vpop.permute.xlu0 %3386
      %3388 = vset.pattern.permute.xlu0 0
      %3389 = vperm.xlu0 %3388, %v3138
      %v3390 = vpop.permute.xlu0 %3389
      %3391 = vset.pattern.permute.xlu0 0
      %3392 = vperm.xlu0 %3391, %v3140
      %v3393 = vpop.permute.xlu0 %3392
      %3394 = vset.pattern.permute.xlu0 0
      %3395 = vperm.xlu0 %3394, %v3142
      %v3396 = vpop.permute.xlu0 %3395
      %3397 = vset.pattern.permute.xlu0 0
      %3398 = vperm.xlu0 %3397, %v3144
      %v3399 = vpop.permute.xlu0 %3398
      %3400 = vset.pattern.permute.xlu0 0
      %3401 = vperm.xlu0 %3400, %v3146
      %v3402 = vpop.permute.xlu0 %3401
      %v3403 = vlaneseq
      %v3404 = vshrl.u32 %v3403, 7
      %v3405 = vsub.s32 %v708, %v3404
      %v3406 = vrot.slane %v3213, %v3405
      %v3407 = vlaneseq
      %v3408 = vshrl.u32 %v3407, 7
      %v3409 = vsub.s32 %v708, %v3408
      %v3410 = vrot.slane %v3216, %v3409
      %v3411 = vlaneseq
      %v3412 = vshrl.u32 %v3411, 7
      %v3413 = vsub.s32 %v708, %v3412
      %v3414 = vrot.slane %v3219, %v3413
      %v3415 = vlaneseq
      %v3416 = vshrl.u32 %v3415, 7
      %v3417 = vsub.s32 %v708, %v3416
      %v3418 = vrot.slane %v3222, %v3417
      %v3419 = vlaneseq
      %v3420 = vshrl.u32 %v3419, 7
      %v3421 = vsub.s32 %v708, %v3420
      %v3422 = vrot.slane %v3225, %v3421
      %v3423 = vlaneseq
      %v3424 = vshrl.u32 %v3423, 7
      %v3425 = vsub.s32 %v708, %v3424
      %v3426 = vrot.slane %v3228, %v3425
      %v3427 = vlaneseq
      %v3428 = vshrl.u32 %v3427, 7
      %v3429 = vsub.s32 %v708, %v3428
      %v3430 = vrot.slane %v3231, %v3429
      %v3431 = vlaneseq
      %v3432 = vshrl.u32 %v3431, 7
      %v3433 = vsub.s32 %v708, %v3432
      %v3434 = vrot.slane %v3234, %v3433
      %v3435 = vlaneseq
      %v3436 = vshrl.u32 %v3435, 7
      %v3437 = vsub.s32 %v708, %v3436
      %v3438 = vrot.slane %v3237, %v3437
      %v3439 = vlaneseq
      %v3440 = vshrl.u32 %v3439, 7
      %v3441 = vsub.s32 %v708, %v3440
      %v3442 = vrot.slane %v3240, %v3441
      %v3443 = vlaneseq
      %v3444 = vshrl.u32 %v3443, 7
      %v3445 = vsub.s32 %v708, %v3444
      %v3446 = vrot.slane %v3243, %v3445
      %v3447 = vlaneseq
      %v3448 = vshrl.u32 %v3447, 7
      %v3449 = vsub.s32 %v708, %v3448
      %v3450 = vrot.slane %v3246, %v3449
      %v3451 = vlaneseq
      %v3452 = vshrl.u32 %v3451, 7
      %v3453 = vsub.s32 %v708, %v3452
      %v3454 = vrot.slane %v3249, %v3453
      %v3455 = vlaneseq
      %v3456 = vshrl.u32 %v3455, 7
      %v3457 = vsub.s32 %v708, %v3456
      %v3458 = vrot.slane %v3252, %v3457
      %v3459 = vlaneseq
      %v3460 = vshrl.u32 %v3459, 7
      %v3461 = vsub.s32 %v708, %v3460
      %v3462 = vrot.slane %v3255, %v3461
      %v3463 = vlaneseq
      %v3464 = vshrl.u32 %v3463, 7
      %v3465 = vsub.s32 %v708, %v3464
      %v3466 = vrot.slane %v3258, %v3465
      %v3467 = vlaneseq
      %v3468 = vshrl.u32 %v3467, 7
      %v3469 = vsub.s32 %v708, %v3468
      %v3470 = vrot.slane %v3261, %v3469
      %v3471 = vlaneseq
      %v3472 = vshrl.u32 %v3471, 7
      %v3473 = vsub.s32 %v708, %v3472
      %v3474 = vrot.slane %v3264, %v3473
      %v3475 = vlaneseq
      %v3476 = vshrl.u32 %v3475, 7
      %v3477 = vsub.s32 %v708, %v3476
      %v3478 = vrot.slane %v3267, %v3477
      %v3479 = vlaneseq
      %v3480 = vshrl.u32 %v3479, 7
      %v3481 = vsub.s32 %v708, %v3480
      %v3482 = vrot.slane %v3270, %v3481
      %v3483 = vlaneseq
      %v3484 = vshrl.u32 %v3483, 7
      %v3485 = vsub.s32 %v708, %v3484
      %v3486 = vrot.slane %v3273, %v3485
      %v3487 = vlaneseq
      %v3488 = vshrl.u32 %v3487, 7
      %v3489 = vsub.s32 %v708, %v3488
      %v3490 = vrot.slane %v3276, %v3489
      %v3491 = vlaneseq
      %v3492 = vshrl.u32 %v3491, 7
      %v3493 = vsub.s32 %v708, %v3492
      %v3494 = vrot.slane %v3279, %v3493
      %v3495 = vlaneseq
      %v3496 = vshrl.u32 %v3495, 7
      %v3497 = vsub.s32 %v708, %v3496
      %v3498 = vrot.slane %v3282, %v3497
      %v3499 = vlaneseq
      %v3500 = vshrl.u32 %v3499, 7
      %v3501 = vsub.s32 %v708, %v3500
      %v3502 = vrot.slane %v3285, %v3501
      %v3503 = vlaneseq
      %v3504 = vshrl.u32 %v3503, 7
      %v3505 = vsub.s32 %v708, %v3504
      %v3506 = vrot.slane %v3288, %v3505
      %v3507 = vlaneseq
      %v3508 = vshrl.u32 %v3507, 7
      %v3509 = vsub.s32 %v708, %v3508
      %v3510 = vrot.slane %v3291, %v3509
      %v3511 = vlaneseq
      %v3512 = vshrl.u32 %v3511, 7
      %v3513 = vsub.s32 %v708, %v3512
      %v3514 = vrot.slane %v3294, %v3513
      %v3515 = vlaneseq
      %v3516 = vshrl.u32 %v3515, 7
      %v3517 = vsub.s32 %v708, %v3516
      %v3518 = vrot.slane %v3297, %v3517
      %v3519 = vlaneseq
      %v3520 = vshrl.u32 %v3519, 7
      %v3521 = vsub.s32 %v708, %v3520
      %v3522 = vrot.slane %v3300, %v3521
      %v3523 = vlaneseq
      %v3524 = vshrl.u32 %v3523, 7
      %v3525 = vsub.s32 %v708, %v3524
      %v3526 = vrot.slane %v3303, %v3525
      %v3527 = vlaneseq
      %v3528 = vshrl.u32 %v3527, 7
      %v3529 = vsub.s32 %v708, %v3528
      %v3530 = vrot.slane %v3306, %v3529
      %v3531 = vlaneseq
      %v3532 = vshrl.u32 %v3531, 7
      %v3533 = vsub.s32 %v708, %v3532
      %v3534 = vrot.slane %v3309, %v3533
      %v3535 = vlaneseq
      %v3536 = vshrl.u32 %v3535, 7
      %v3537 = vsub.s32 %v708, %v3536
      %v3538 = vrot.slane %v3312, %v3537
      %v3539 = vlaneseq
      %v3540 = vshrl.u32 %v3539, 7
      %v3541 = vsub.s32 %v708, %v3540
      %v3542 = vrot.slane %v3315, %v3541
      %v3543 = vlaneseq
      %v3544 = vshrl.u32 %v3543, 7
      %v3545 = vsub.s32 %v708, %v3544
      %v3546 = vrot.slane %v3318, %v3545
      %v3547 = vlaneseq
      %v3548 = vshrl.u32 %v3547, 7
      %v3549 = vsub.s32 %v708, %v3548
      %v3550 = vrot.slane %v3321, %v3549
      %v3551 = vlaneseq
      %v3552 = vshrl.u32 %v3551, 7
      %v3553 = vsub.s32 %v708, %v3552
      %v3554 = vrot.slane %v3324, %v3553
      %v3555 = vlaneseq
      %v3556 = vshrl.u32 %v3555, 7
      %v3557 = vsub.s32 %v708, %v3556
      %v3558 = vrot.slane %v3327, %v3557
      %v3559 = vlaneseq
      %v3560 = vshrl.u32 %v3559, 7
      %v3561 = vsub.s32 %v708, %v3560
      %v3562 = vrot.slane %v3330, %v3561
      %v3563 = vlaneseq
      %v3564 = vshrl.u32 %v3563, 7
      %v3565 = vsub.s32 %v708, %v3564
      %v3566 = vrot.slane %v3333, %v3565
      %v3567 = vlaneseq
      %v3568 = vshrl.u32 %v3567, 7
      %v3569 = vsub.s32 %v708, %v3568
      %v3570 = vrot.slane %v3336, %v3569
      %v3571 = vlaneseq
      %v3572 = vshrl.u32 %v3571, 7
      %v3573 = vsub.s32 %v708, %v3572
      %v3574 = vrot.slane %v3339, %v3573
      %v3575 = vlaneseq
      %v3576 = vshrl.u32 %v3575, 7
      %v3577 = vsub.s32 %v708, %v3576
      %v3578 = vrot.slane %v3342, %v3577
      %v3579 = vlaneseq
      %v3580 = vshrl.u32 %v3579, 7
      %v3581 = vsub.s32 %v708, %v3580
      %v3582 = vrot.slane %v3345, %v3581
      %v3583 = vlaneseq
      %v3584 = vshrl.u32 %v3583, 7
      %v3585 = vsub.s32 %v708, %v3584
      %v3586 = vrot.slane %v3348, %v3585
      %v3587 = vlaneseq
      %v3588 = vshrl.u32 %v3587, 7
      %v3589 = vsub.s32 %v708, %v3588
      %v3590 = vrot.slane %v3351, %v3589
      %v3591 = vlaneseq
      %v3592 = vshrl.u32 %v3591, 7
      %v3593 = vsub.s32 %v708, %v3592
      %v3594 = vrot.slane %v3354, %v3593
      %v3595 = vlaneseq
      %v3596 = vshrl.u32 %v3595, 7
      %v3597 = vsub.s32 %v708, %v3596
      %v3598 = vrot.slane %v3357, %v3597
      %v3599 = vlaneseq
      %v3600 = vshrl.u32 %v3599, 7
      %v3601 = vsub.s32 %v708, %v3600
      %v3602 = vrot.slane %v3360, %v3601
      %v3603 = vlaneseq
      %v3604 = vshrl.u32 %v3603, 7
      %v3605 = vsub.s32 %v708, %v3604
      %v3606 = vrot.slane %v3363, %v3605
      %v3607 = vlaneseq
      %v3608 = vshrl.u32 %v3607, 7
      %v3609 = vsub.s32 %v708, %v3608
      %v3610 = vrot.slane %v3366, %v3609
      %v3611 = vlaneseq
      %v3612 = vshrl.u32 %v3611, 7
      %v3613 = vsub.s32 %v708, %v3612
      %v3614 = vrot.slane %v3369, %v3613
      %v3615 = vlaneseq
      %v3616 = vshrl.u32 %v3615, 7
      %v3617 = vsub.s32 %v708, %v3616
      %v3618 = vrot.slane %v3372, %v3617
      %v3619 = vlaneseq
      %v3620 = vshrl.u32 %v3619, 7
      %v3621 = vsub.s32 %v708, %v3620
      %v3622 = vrot.slane %v3375, %v3621
      %v3623 = vlaneseq
      %v3624 = vshrl.u32 %v3623, 7
      %v3625 = vsub.s32 %v708, %v3624
      %v3626 = vrot.slane %v3378, %v3625
      %v3627 = vlaneseq
      %v3628 = vshrl.u32 %v3627, 7
      %v3629 = vsub.s32 %v708, %v3628
      %v3630 = vrot.slane %v3381, %v3629
      %v3631 = vlaneseq
      %v3632 = vshrl.u32 %v3631, 7
      %v3633 = vsub.s32 %v708, %v3632
      %v3634 = vrot.slane %v3384, %v3633
      %v3635 = vlaneseq
      %v3636 = vshrl.u32 %v3635, 7
      %v3637 = vsub.s32 %v708, %v3636
      %v3638 = vrot.slane %v3387, %v3637
      %v3639 = vlaneseq
      %v3640 = vshrl.u32 %v3639, 7
      %v3641 = vsub.s32 %v708, %v3640
      %v3642 = vrot.slane %v3390, %v3641
      %v3643 = vlaneseq
      %v3644 = vshrl.u32 %v3643, 7
      %v3645 = vsub.s32 %v708, %v3644
      %v3646 = vrot.slane %v3393, %v3645
      %v3647 = vlaneseq
      %v3648 = vshrl.u32 %v3647, 7
      %v3649 = vsub.s32 %v708, %v3648
      %v3650 = vrot.slane %v3396, %v3649
      %v3651 = vlaneseq
      %v3652 = vshrl.u32 %v3651, 7
      %v3653 = vsub.s32 %v708, %v3652
      %v3654 = vrot.slane %v3399, %v3653
      %v3655 = vlaneseq
      %v3656 = vshrl.u32 %v3655, 7
      %v3657 = vsub.s32 %v708, %v3656
      %v3658 = vrot.slane %v3402, %v3657
      %v3659 = vsel %vm2531, %v3410, %v3406
      %v3660 = vsel %vm2533, %v3414, %v3659
      %v3661 = vsel %vm2535, %v3418, %v3660
      %v3662 = vsel %vm2537, %v3422, %v3661
      %v3663 = vsel %vm2539, %v3426, %v3662
      %v3664 = vsel %vm2541, %v3430, %v3663
      %v3665 = vsel %vm2543, %v3434, %v3664
      %v3666 = vsel %vm2531, %v3442, %v3438
      %v3667 = vsel %vm2533, %v3446, %v3666
      %v3668 = vsel %vm2535, %v3450, %v3667
      %v3669 = vsel %vm2537, %v3454, %v3668
      %v3670 = vsel %vm2539, %v3458, %v3669
      %v3671 = vsel %vm2541, %v3462, %v3670
      %v3672 = vsel %vm2543, %v3466, %v3671
      %v3673 = vsel %vm2531, %v3474, %v3470
      %v3674 = vsel %vm2533, %v3478, %v3673
      %v3675 = vsel %vm2535, %v3482, %v3674
      %v3676 = vsel %vm2537, %v3486, %v3675
      %v3677 = vsel %vm2539, %v3490, %v3676
      %v3678 = vsel %vm2541, %v3494, %v3677
      %v3679 = vsel %vm2543, %v3498, %v3678
      %v3680 = vsel %vm2531, %v3506, %v3502
      %v3681 = vsel %vm2533, %v3510, %v3680
      %v3682 = vsel %vm2535, %v3514, %v3681
      %v3683 = vsel %vm2537, %v3518, %v3682
      %v3684 = vsel %vm2539, %v3522, %v3683
      %v3685 = vsel %vm2541, %v3526, %v3684
      %v3686 = vsel %vm2543, %v3530, %v3685
      %v3687 = vsel %vm2531, %v3538, %v3534
      %v3688 = vsel %vm2533, %v3542, %v3687
      %v3689 = vsel %vm2535, %v3546, %v3688
      %v3690 = vsel %vm2537, %v3550, %v3689
      %v3691 = vsel %vm2539, %v3554, %v3690
      %v3692 = vsel %vm2541, %v3558, %v3691
      %v3693 = vsel %vm2543, %v3562, %v3692
      %v3694 = vsel %vm2531, %v3570, %v3566
      %v3695 = vsel %vm2533, %v3574, %v3694
      %v3696 = vsel %vm2535, %v3578, %v3695
      %v3697 = vsel %vm2537, %v3582, %v3696
      %v3698 = vsel %vm2539, %v3586, %v3697
      %v3699 = vsel %vm2541, %v3590, %v3698
      %v3700 = vsel %vm2543, %v3594, %v3699
      %v3701 = vsel %vm2531, %v3602, %v3598
      %v3702 = vsel %vm2533, %v3606, %v3701
      %v3703 = vsel %vm2535, %v3610, %v3702
      %v3704 = vsel %vm2537, %v3614, %v3703
      %v3705 = vsel %vm2539, %v3618, %v3704
      %v3706 = vsel %vm2541, %v3622, %v3705
      %v3707 = vsel %vm2543, %v3626, %v3706
      %v3708 = vsel %vm2531, %v3634, %v3630
      %v3709 = vsel %vm2533, %v3638, %v3708
      %v3710 = vsel %vm2535, %v3642, %v3709
      %v3711 = vsel %vm2537, %v3646, %v3710
      %v3712 = vsel %vm2539, %v3650, %v3711
      %v3713 = vsel %vm2541, %v3654, %v3712
      %v3714 = vsel %vm2543, %v3658, %v3713
      %v3723 = vsel %vm2602, %v3665, 0.0
      %3724 = vadd.xlane.f32.xlu0 %v3723
      %v3725 = vpop.xlane.xlu0 %3724
      %v3726 = vsel %vm2602, %v3672, 0.0
      %3727 = vadd.xlane.f32.xlu0 %v3726
      %v3728 = vpop.xlane.xlu0 %3727
      %v3729 = vsel %vm2602, %v3679, 0.0
      %3730 = vadd.xlane.f32.xlu0 %v3729
      %v3731 = vpop.xlane.xlu0 %3730
      %v3732 = vsel %vm2602, %v3686, 0.0
      %3733 = vadd.xlane.f32.xlu0 %v3732
      %v3734 = vpop.xlane.xlu0 %3733
      %v3735 = vsel %vm2602, %v3693, 0.0
      %3736 = vadd.xlane.f32.xlu0 %v3735
      %v3737 = vpop.xlane.xlu0 %3736
      %v3738 = vsel %vm2602, %v3700, 0.0
      %3739 = vadd.xlane.f32.xlu0 %v3738
      %v3740 = vpop.xlane.xlu0 %3739
      %v3741 = vsel %vm2602, %v3707, 0.0
      %3742 = vadd.xlane.f32.xlu0 %v3741
      %v3743 = vpop.xlane.xlu0 %3742
      %v3744 = vsel %vm2602, %v3714, 0.0
      %3745 = vadd.xlane.f32.xlu0 %v3744
      %v3746 = vpop.xlane.xlu0 %3745
      %v3747 = vrcp.pop %v3725
      %v3748 = vrcp.pop %v3728
      %v3749 = vrcp.pop %v3731
      %v3750 = vrcp.pop %v3734
      %v3751 = vrcp.pop %v3737
      %v3752 = vrcp.pop %v3740
      %v3753 = vrcp.pop %v3743
      %v3754 = vrcp.pop %v3746
      %v3763 = vlaneseq
      %v3764 = vshrl.u32 %v3763, 7
      %v3765 = vsub.s32 0, %v3764
      %v3766 = vrot.slane %v3747, %v3765
      %v3767 = vlaneseq
      %v3768 = vshrl.u32 %v3767, 7
      %v3769 = vsub.s32 1, %v3768
      %v3770 = vrot.slane %v3747, %v3769
      %v3771 = vlaneseq
      %v3772 = vshrl.u32 %v3771, 7
      %v3773 = vsub.s32 2, %v3772
      %v3774 = vrot.slane %v3747, %v3773
      %v3775 = vlaneseq
      %v3776 = vshrl.u32 %v3775, 7
      %v3777 = vsub.s32 3, %v3776
      %v3778 = vrot.slane %v3747, %v3777
      %v3779 = vlaneseq
      %v3780 = vshrl.u32 %v3779, 7
      %v3781 = vsub.s32 4, %v3780
      %v3782 = vrot.slane %v3747, %v3781
      %v3783 = vlaneseq
      %v3784 = vshrl.u32 %v3783, 7
      %v3785 = vsub.s32 5, %v3784
      %v3786 = vrot.slane %v3747, %v3785
      %v3787 = vlaneseq
      %v3788 = vshrl.u32 %v3787, 7
      %v3789 = vsub.s32 6, %v3788
      %v3790 = vrot.slane %v3747, %v3789
      %v3791 = vlaneseq
      %v3792 = vshrl.u32 %v3791, 7
      %v3793 = vsub.s32 7, %v3792
      %v3794 = vrot.slane %v3747, %v3793
      %v3795 = vlaneseq
      %v3796 = vshrl.u32 %v3795, 7
      %v3797 = vsub.s32 0, %v3796
      %v3798 = vrot.slane %v3748, %v3797
      %v3799 = vlaneseq
      %v3800 = vshrl.u32 %v3799, 7
      %v3801 = vsub.s32 1, %v3800
      %v3802 = vrot.slane %v3748, %v3801
      %v3803 = vlaneseq
      %v3804 = vshrl.u32 %v3803, 7
      %v3805 = vsub.s32 2, %v3804
      %v3806 = vrot.slane %v3748, %v3805
      %v3807 = vlaneseq
      %v3808 = vshrl.u32 %v3807, 7
      %v3809 = vsub.s32 3, %v3808
      %v3810 = vrot.slane %v3748, %v3809
      %v3811 = vlaneseq
      %v3812 = vshrl.u32 %v3811, 7
      %v3813 = vsub.s32 4, %v3812
      %v3814 = vrot.slane %v3748, %v3813
      %v3815 = vlaneseq
      %v3816 = vshrl.u32 %v3815, 7
      %v3817 = vsub.s32 5, %v3816
      %v3818 = vrot.slane %v3748, %v3817
      %v3819 = vlaneseq
      %v3820 = vshrl.u32 %v3819, 7
      %v3821 = vsub.s32 6, %v3820
      %v3822 = vrot.slane %v3748, %v3821
      %v3823 = vlaneseq
      %v3824 = vshrl.u32 %v3823, 7
      %v3825 = vsub.s32 7, %v3824
      %v3826 = vrot.slane %v3748, %v3825
      %v3827 = vlaneseq
      %v3828 = vshrl.u32 %v3827, 7
      %v3829 = vsub.s32 0, %v3828
      %v3830 = vrot.slane %v3749, %v3829
      %v3831 = vlaneseq
      %v3832 = vshrl.u32 %v3831, 7
      %v3833 = vsub.s32 1, %v3832
      %v3834 = vrot.slane %v3749, %v3833
      %v3835 = vlaneseq
      %v3836 = vshrl.u32 %v3835, 7
      %v3837 = vsub.s32 2, %v3836
      %v3838 = vrot.slane %v3749, %v3837
      %v3839 = vlaneseq
      %v3840 = vshrl.u32 %v3839, 7
      %v3841 = vsub.s32 3, %v3840
      %v3842 = vrot.slane %v3749, %v3841
      %v3843 = vlaneseq
      %v3844 = vshrl.u32 %v3843, 7
      %v3845 = vsub.s32 4, %v3844
      %v3846 = vrot.slane %v3749, %v3845
      %v3847 = vlaneseq
      %v3848 = vshrl.u32 %v3847, 7
      %v3849 = vsub.s32 5, %v3848
      %v3850 = vrot.slane %v3749, %v3849
      %v3851 = vlaneseq
      %v3852 = vshrl.u32 %v3851, 7
      %v3853 = vsub.s32 6, %v3852
      %v3854 = vrot.slane %v3749, %v3853
      %v3855 = vlaneseq
      %v3856 = vshrl.u32 %v3855, 7
      %v3857 = vsub.s32 7, %v3856
      %v3858 = vrot.slane %v3749, %v3857
      %v3859 = vlaneseq
      %v3860 = vshrl.u32 %v3859, 7
      %v3861 = vsub.s32 0, %v3860
      %v3862 = vrot.slane %v3750, %v3861
      %v3863 = vlaneseq
      %v3864 = vshrl.u32 %v3863, 7
      %v3865 = vsub.s32 1, %v3864
      %v3866 = vrot.slane %v3750, %v3865
      %v3867 = vlaneseq
      %v3868 = vshrl.u32 %v3867, 7
      %v3869 = vsub.s32 2, %v3868
      %v3870 = vrot.slane %v3750, %v3869
      %v3871 = vlaneseq
      %v3872 = vshrl.u32 %v3871, 7
      %v3873 = vsub.s32 3, %v3872
      %v3874 = vrot.slane %v3750, %v3873
      %v3875 = vlaneseq
      %v3876 = vshrl.u32 %v3875, 7
      %v3877 = vsub.s32 4, %v3876
      %v3878 = vrot.slane %v3750, %v3877
      %v3879 = vlaneseq
      %v3880 = vshrl.u32 %v3879, 7
      %v3881 = vsub.s32 5, %v3880
      %v3882 = vrot.slane %v3750, %v3881
      %v3883 = vlaneseq
      %v3884 = vshrl.u32 %v3883, 7
      %v3885 = vsub.s32 6, %v3884
      %v3886 = vrot.slane %v3750, %v3885
      %v3887 = vlaneseq
      %v3888 = vshrl.u32 %v3887, 7
      %v3889 = vsub.s32 7, %v3888
      %v3890 = vrot.slane %v3750, %v3889
      %v3891 = vlaneseq
      %v3892 = vshrl.u32 %v3891, 7
      %v3893 = vsub.s32 0, %v3892
      %v3894 = vrot.slane %v3751, %v3893
      %v3895 = vlaneseq
      %v3896 = vshrl.u32 %v3895, 7
      %v3897 = vsub.s32 1, %v3896
      %v3898 = vrot.slane %v3751, %v3897
      %v3899 = vlaneseq
      %v3900 = vshrl.u32 %v3899, 7
      %v3901 = vsub.s32 2, %v3900
      %v3902 = vrot.slane %v3751, %v3901
      %v3903 = vlaneseq
      %v3904 = vshrl.u32 %v3903, 7
      %v3905 = vsub.s32 3, %v3904
      %v3906 = vrot.slane %v3751, %v3905
      %v3907 = vlaneseq
      %v3908 = vshrl.u32 %v3907, 7
      %v3909 = vsub.s32 4, %v3908
      %v3910 = vrot.slane %v3751, %v3909
      %v3911 = vlaneseq
      %v3912 = vshrl.u32 %v3911, 7
      %v3913 = vsub.s32 5, %v3912
      %v3914 = vrot.slane %v3751, %v3913
      %v3915 = vlaneseq
      %v3916 = vshrl.u32 %v3915, 7
      %v3917 = vsub.s32 6, %v3916
      %v3918 = vrot.slane %v3751, %v3917
      %v3919 = vlaneseq
      %v3920 = vshrl.u32 %v3919, 7
      %v3921 = vsub.s32 7, %v3920
      %v3922 = vrot.slane %v3751, %v3921
      %v3923 = vlaneseq
      %v3924 = vshrl.u32 %v3923, 7
      %v3925 = vsub.s32 0, %v3924
      %v3926 = vrot.slane %v3752, %v3925
      %v3927 = vlaneseq
      %v3928 = vshrl.u32 %v3927, 7
      %v3929 = vsub.s32 1, %v3928
      %v3930 = vrot.slane %v3752, %v3929
      %v3931 = vlaneseq
      %v3932 = vshrl.u32 %v3931, 7
      %v3933 = vsub.s32 2, %v3932
      %v3934 = vrot.slane %v3752, %v3933
      %v3935 = vlaneseq
      %v3936 = vshrl.u32 %v3935, 7
      %v3937 = vsub.s32 3, %v3936
      %v3938 = vrot.slane %v3752, %v3937
      %v3939 = vlaneseq
      %v3940 = vshrl.u32 %v3939, 7
      %v3941 = vsub.s32 4, %v3940
      %v3942 = vrot.slane %v3752, %v3941
      %v3943 = vlaneseq
      %v3944 = vshrl.u32 %v3943, 7
      %v3945 = vsub.s32 5, %v3944
      %v3946 = vrot.slane %v3752, %v3945
      %v3947 = vlaneseq
      %v3948 = vshrl.u32 %v3947, 7
      %v3949 = vsub.s32 6, %v3948
      %v3950 = vrot.slane %v3752, %v3949
      %v3951 = vlaneseq
      %v3952 = vshrl.u32 %v3951, 7
      %v3953 = vsub.s32 7, %v3952
      %v3954 = vrot.slane %v3752, %v3953
      %v3955 = vlaneseq
      %v3956 = vshrl.u32 %v3955, 7
      %v3957 = vsub.s32 0, %v3956
      %v3958 = vrot.slane %v3753, %v3957
      %v3959 = vlaneseq
      %v3960 = vshrl.u32 %v3959, 7
      %v3961 = vsub.s32 1, %v3960
      %v3962 = vrot.slane %v3753, %v3961
      %v3963 = vlaneseq
      %v3964 = vshrl.u32 %v3963, 7
      %v3965 = vsub.s32 2, %v3964
      %v3966 = vrot.slane %v3753, %v3965
      %v3967 = vlaneseq
      %v3968 = vshrl.u32 %v3967, 7
      %v3969 = vsub.s32 3, %v3968
      %v3970 = vrot.slane %v3753, %v3969
      %v3971 = vlaneseq
      %v3972 = vshrl.u32 %v3971, 7
      %v3973 = vsub.s32 4, %v3972
      %v3974 = vrot.slane %v3753, %v3973
      %v3975 = vlaneseq
      %v3976 = vshrl.u32 %v3975, 7
      %v3977 = vsub.s32 5, %v3976
      %v3978 = vrot.slane %v3753, %v3977
      %v3979 = vlaneseq
      %v3980 = vshrl.u32 %v3979, 7
      %v3981 = vsub.s32 6, %v3980
      %v3982 = vrot.slane %v3753, %v3981
      %v3983 = vlaneseq
      %v3984 = vshrl.u32 %v3983, 7
      %v3985 = vsub.s32 7, %v3984
      %v3986 = vrot.slane %v3753, %v3985
      %v3987 = vlaneseq
      %v3988 = vshrl.u32 %v3987, 7
      %v3989 = vsub.s32 0, %v3988
      %v3990 = vrot.slane %v3754, %v3989
      %v3991 = vlaneseq
      %v3992 = vshrl.u32 %v3991, 7
      %v3993 = vsub.s32 1, %v3992
      %v3994 = vrot.slane %v3754, %v3993
      %v3995 = vlaneseq
      %v3996 = vshrl.u32 %v3995, 7
      %v3997 = vsub.s32 2, %v3996
      %v3998 = vrot.slane %v3754, %v3997
      %v3999 = vlaneseq
      %v4000 = vshrl.u32 %v3999, 7
      %v4001 = vsub.s32 3, %v4000
      %v4002 = vrot.slane %v3754, %v4001
      %v4003 = vlaneseq
      %v4004 = vshrl.u32 %v4003, 7
      %v4005 = vsub.s32 4, %v4004
      %v4006 = vrot.slane %v3754, %v4005
      %v4007 = vlaneseq
      %v4008 = vshrl.u32 %v4007, 7
      %v4009 = vsub.s32 5, %v4008
      %v4010 = vrot.slane %v3754, %v4009
      %v4011 = vlaneseq
      %v4012 = vshrl.u32 %v4011, 7
      %v4013 = vsub.s32 6, %v4012
      %v4014 = vrot.slane %v3754, %v4013
      %v4015 = vlaneseq
      %v4016 = vshrl.u32 %v4015, 7
      %v4017 = vsub.s32 7, %v4016
      %v4018 = vrot.slane %v3754, %v4017
      %v4083 = vmul.f32 %v3020, %v3766
      %v4084 = vmul.f32 %v3022, %v3770
      %v4085 = vmul.f32 %v3024, %v3774
      %v4086 = vmul.f32 %v3026, %v3778
      %v4087 = vmul.f32 %v3028, %v3782
      %v4088 = vmul.f32 %v3030, %v3786
      %v4089 = vmul.f32 %v3032, %v3790
      %v4090 = vmul.f32 %v3034, %v3794
      %v4091 = vmul.f32 %v3036, %v3798
      %v4092 = vmul.f32 %v3038, %v3802
      %v4093 = vmul.f32 %v3040, %v3806
      %v4094 = vmul.f32 %v3042, %v3810
      %v4095 = vmul.f32 %v3044, %v3814
      %v4096 = vmul.f32 %v3046, %v3818
      %v4097 = vmul.f32 %v3048, %v3822
      %v4098 = vmul.f32 %v3050, %v3826
      %v4099 = vmul.f32 %v3052, %v3830
      %v4100 = vmul.f32 %v3054, %v3834
      %v4101 = vmul.f32 %v3056, %v3838
      %v4102 = vmul.f32 %v3058, %v3842
      %v4103 = vmul.f32 %v3060, %v3846
      %v4104 = vmul.f32 %v3062, %v3850
      %v4105 = vmul.f32 %v3064, %v3854
      %v4106 = vmul.f32 %v3066, %v3858
      %v4107 = vmul.f32 %v3068, %v3862
      %v4108 = vmul.f32 %v3070, %v3866
      %v4109 = vmul.f32 %v3072, %v3870
      %v4110 = vmul.f32 %v3074, %v3874
      %v4111 = vmul.f32 %v3076, %v3878
      %v4112 = vmul.f32 %v3078, %v3882
      %v4113 = vmul.f32 %v3080, %v3886
      %v4114 = vmul.f32 %v3082, %v3890
      %v4115 = vmul.f32 %v3084, %v3894
      %v4116 = vmul.f32 %v3086, %v3898
      %v4117 = vmul.f32 %v3088, %v3902
      %v4118 = vmul.f32 %v3090, %v3906
      %v4119 = vmul.f32 %v3092, %v3910
      %v4120 = vmul.f32 %v3094, %v3914
      %v4121 = vmul.f32 %v3096, %v3918
      %v4122 = vmul.f32 %v3098, %v3922
      %v4123 = vmul.f32 %v3100, %v3926
      %v4124 = vmul.f32 %v3102, %v3930
      %v4125 = vmul.f32 %v3104, %v3934
      %v4126 = vmul.f32 %v3106, %v3938
      %v4127 = vmul.f32 %v3108, %v3942
      %v4128 = vmul.f32 %v3110, %v3946
      %v4129 = vmul.f32 %v3112, %v3950
      %v4130 = vmul.f32 %v3114, %v3954
      %v4131 = vmul.f32 %v3116, %v3958
      %v4132 = vmul.f32 %v3118, %v3962
      %v4133 = vmul.f32 %v3120, %v3966
      %v4134 = vmul.f32 %v3122, %v3970
      %v4135 = vmul.f32 %v3124, %v3974
      %v4136 = vmul.f32 %v3126, %v3978
      %v4137 = vmul.f32 %v3128, %v3982
      %v4138 = vmul.f32 %v3130, %v3986
      %v4139 = vmul.f32 %v3132, %v3990
      %v4140 = vmul.f32 %v3134, %v3994
      %v4141 = vmul.f32 %v3136, %v3998
      %v4142 = vmul.f32 %v3138, %v4002
      %v4143 = vmul.f32 %v3140, %v4006
      %v4144 = vmul.f32 %v3142, %v4010
      %v4145 = vmul.f32 %v3144, %v4014
      %v4146 = vmul.f32 %v3146, %v4018
      %4148 = vset.pattern.permute.xlu0 0
      %4149 = vperm.xlu0 %4148, %v4083
      %v4150 = vpop.permute.xlu0 %4149
      %4153 = vset.pattern.permute.xlu0 0
      %4154 = vperm.xlu0 %4153, %v4084
      %v4155 = vpop.permute.xlu0 %4154
      %4158 = vset.pattern.permute.xlu0 0
      %4159 = vperm.xlu0 %4158, %v4085
      %v4160 = vpop.permute.xlu0 %4159
      %4163 = vset.pattern.permute.xlu0 0
      %4164 = vperm.xlu0 %4163, %v4086
      %v4165 = vpop.permute.xlu0 %4164
      %4168 = vset.pattern.permute.xlu0 0
      %4169 = vperm.xlu0 %4168, %v4087
      %v4170 = vpop.permute.xlu0 %4169
      %4173 = vset.pattern.permute.xlu0 0
      %4174 = vperm.xlu0 %4173, %v4088
      %v4175 = vpop.permute.xlu0 %4174
      %4178 = vset.pattern.permute.xlu0 0
      %4179 = vperm.xlu0 %4178, %v4089
      %v4180 = vpop.permute.xlu0 %4179
      %4183 = vset.pattern.permute.xlu0 0
      %4184 = vperm.xlu0 %4183, %v4090
      %v4185 = vpop.permute.xlu0 %4184
      %4188 = vset.pattern.permute.xlu0 0
      %4189 = vperm.xlu0 %4188, %v4091
      %v4190 = vpop.permute.xlu0 %4189
      %4193 = vset.pattern.permute.xlu0 0
      %4194 = vperm.xlu0 %4193, %v4092
      %v4195 = vpop.permute.xlu0 %4194
      %4198 = vset.pattern.permute.xlu0 0
      %4199 = vperm.xlu0 %4198, %v4093
      %v4200 = vpop.permute.xlu0 %4199
      %4203 = vset.pattern.permute.xlu0 0
      %4204 = vperm.xlu0 %4203, %v4094
      %v4205 = vpop.permute.xlu0 %4204
      %4208 = vset.pattern.permute.xlu0 0
      %4209 = vperm.xlu0 %4208, %v4095
      %v4210 = vpop.permute.xlu0 %4209
      %4213 = vset.pattern.permute.xlu0 0
      %4214 = vperm.xlu0 %4213, %v4096
      %v4215 = vpop.permute.xlu0 %4214
      %4218 = vset.pattern.permute.xlu0 0
      %4219 = vperm.xlu0 %4218, %v4097
      %v4220 = vpop.permute.xlu0 %4219
      %4223 = vset.pattern.permute.xlu0 0
      %4224 = vperm.xlu0 %4223, %v4098
      %v4225 = vpop.permute.xlu0 %4224
      %4228 = vset.pattern.permute.xlu0 0
      %4229 = vperm.xlu0 %4228, %v4099
      %v4230 = vpop.permute.xlu0 %4229
      %4233 = vset.pattern.permute.xlu0 0
      %4234 = vperm.xlu0 %4233, %v4100
      %v4235 = vpop.permute.xlu0 %4234
      %4238 = vset.pattern.permute.xlu0 0
      %4239 = vperm.xlu0 %4238, %v4101
      %v4240 = vpop.permute.xlu0 %4239
      %4243 = vset.pattern.permute.xlu0 0
      %4244 = vperm.xlu0 %4243, %v4102
      %v4245 = vpop.permute.xlu0 %4244
      %4248 = vset.pattern.permute.xlu0 0
      %4249 = vperm.xlu0 %4248, %v4103
      %v4250 = vpop.permute.xlu0 %4249
      %4253 = vset.pattern.permute.xlu0 0
      %4254 = vperm.xlu0 %4253, %v4104
      %v4255 = vpop.permute.xlu0 %4254
      %4258 = vset.pattern.permute.xlu0 0
      %4259 = vperm.xlu0 %4258, %v4105
      %v4260 = vpop.permute.xlu0 %4259
      %4263 = vset.pattern.permute.xlu0 0
      %4264 = vperm.xlu0 %4263, %v4106
      %v4265 = vpop.permute.xlu0 %4264
      %4268 = vset.pattern.permute.xlu0 0
      %4269 = vperm.xlu0 %4268, %v4107
      %v4270 = vpop.permute.xlu0 %4269
      %4273 = vset.pattern.permute.xlu0 0
      %4274 = vperm.xlu0 %4273, %v4108
      %v4275 = vpop.permute.xlu0 %4274
      %4278 = vset.pattern.permute.xlu0 0
      %4279 = vperm.xlu0 %4278, %v4109
      %v4280 = vpop.permute.xlu0 %4279
      %4283 = vset.pattern.permute.xlu0 0
      %4284 = vperm.xlu0 %4283, %v4110
      %v4285 = vpop.permute.xlu0 %4284
      %4288 = vset.pattern.permute.xlu0 0
      %4289 = vperm.xlu0 %4288, %v4111
      %v4290 = vpop.permute.xlu0 %4289
      %4293 = vset.pattern.permute.xlu0 0
      %4294 = vperm.xlu0 %4293, %v4112
      %v4295 = vpop.permute.xlu0 %4294
      %4298 = vset.pattern.permute.xlu0 0
      %4299 = vperm.xlu0 %4298, %v4113
      %v4300 = vpop.permute.xlu0 %4299
      %4303 = vset.pattern.permute.xlu0 0
      %4304 = vperm.xlu0 %4303, %v4114
      %v4305 = vpop.permute.xlu0 %4304
      %4308 = vset.pattern.permute.xlu0 0
      %4309 = vperm.xlu0 %4308, %v4115
      %v4310 = vpop.permute.xlu0 %4309
      %4313 = vset.pattern.permute.xlu0 0
      %4314 = vperm.xlu0 %4313, %v4116
      %v4315 = vpop.permute.xlu0 %4314
      %4318 = vset.pattern.permute.xlu0 0
      %4319 = vperm.xlu0 %4318, %v4117
      %v4320 = vpop.permute.xlu0 %4319
      %4323 = vset.pattern.permute.xlu0 0
      %4324 = vperm.xlu0 %4323, %v4118
      %v4325 = vpop.permute.xlu0 %4324
      %4328 = vset.pattern.permute.xlu0 0
      %4329 = vperm.xlu0 %4328, %v4119
      %v4330 = vpop.permute.xlu0 %4329
      %4333 = vset.pattern.permute.xlu0 0
      %4334 = vperm.xlu0 %4333, %v4120
      %v4335 = vpop.permute.xlu0 %4334
      %4338 = vset.pattern.permute.xlu0 0
      %4339 = vperm.xlu0 %4338, %v4121
      %v4340 = vpop.permute.xlu0 %4339
      %4343 = vset.pattern.permute.xlu0 0
      %4344 = vperm.xlu0 %4343, %v4122
      %v4345 = vpop.permute.xlu0 %4344
      %4348 = vset.pattern.permute.xlu0 0
      %4349 = vperm.xlu0 %4348, %v4123
      %v4350 = vpop.permute.xlu0 %4349
      %4353 = vset.pattern.permute.xlu0 0
      %4354 = vperm.xlu0 %4353, %v4124
      %v4355 = vpop.permute.xlu0 %4354
      %4358 = vset.pattern.permute.xlu0 0
      %4359 = vperm.xlu0 %4358, %v4125
      %v4360 = vpop.permute.xlu0 %4359
      %4363 = vset.pattern.permute.xlu0 0
      %4364 = vperm.xlu0 %4363, %v4126
      %v4365 = vpop.permute.xlu0 %4364
      %4368 = vset.pattern.permute.xlu0 0
      %4369 = vperm.xlu0 %4368, %v4127
      %v4370 = vpop.permute.xlu0 %4369
      %4373 = vset.pattern.permute.xlu0 0
      %4374 = vperm.xlu0 %4373, %v4128
      %v4375 = vpop.permute.xlu0 %4374
      %4378 = vset.pattern.permute.xlu0 0
      %4379 = vperm.xlu0 %4378, %v4129
      %v4380 = vpop.permute.xlu0 %4379
      %4383 = vset.pattern.permute.xlu0 0
      %4384 = vperm.xlu0 %4383, %v4130
      %v4385 = vpop.permute.xlu0 %4384
      %4388 = vset.pattern.permute.xlu0 0
      %4389 = vperm.xlu0 %4388, %v4131
      %v4390 = vpop.permute.xlu0 %4389
      %4393 = vset.pattern.permute.xlu0 0
      %4394 = vperm.xlu0 %4393, %v4132
      %v4395 = vpop.permute.xlu0 %4394
      %4398 = vset.pattern.permute.xlu0 0
      %4399 = vperm.xlu0 %4398, %v4133
      %v4400 = vpop.permute.xlu0 %4399
      %4403 = vset.pattern.permute.xlu0 0
      %4404 = vperm.xlu0 %4403, %v4134
      %v4405 = vpop.permute.xlu0 %4404
      %4408 = vset.pattern.permute.xlu0 0
      %4409 = vperm.xlu0 %4408, %v4135
      %v4410 = vpop.permute.xlu0 %4409
      %4413 = vset.pattern.permute.xlu0 0
      %4414 = vperm.xlu0 %4413, %v4136
      %v4415 = vpop.permute.xlu0 %4414
      %4418 = vset.pattern.permute.xlu0 0
      %4419 = vperm.xlu0 %4418, %v4137
      %v4420 = vpop.permute.xlu0 %4419
      %4423 = vset.pattern.permute.xlu0 0
      %4424 = vperm.xlu0 %4423, %v4138
      %v4425 = vpop.permute.xlu0 %4424
      %4428 = vset.pattern.permute.xlu0 0
      %4429 = vperm.xlu0 %4428, %v4139
      %v4430 = vpop.permute.xlu0 %4429
      %4433 = vset.pattern.permute.xlu0 0
      %4434 = vperm.xlu0 %4433, %v4140
      %v4435 = vpop.permute.xlu0 %4434
      %4438 = vset.pattern.permute.xlu0 0
      %4439 = vperm.xlu0 %4438, %v4141
      %v4440 = vpop.permute.xlu0 %4439
      %4443 = vset.pattern.permute.xlu0 0
      %4444 = vperm.xlu0 %4443, %v4142
      %v4445 = vpop.permute.xlu0 %4444
      %4448 = vset.pattern.permute.xlu0 0
      %4449 = vperm.xlu0 %4448, %v4143
      %v4450 = vpop.permute.xlu0 %4449
      %4453 = vset.pattern.permute.xlu0 0
      %4454 = vperm.xlu0 %4453, %v4144
      %v4455 = vpop.permute.xlu0 %4454
      %4458 = vset.pattern.permute.xlu0 0
      %4459 = vperm.xlu0 %4458, %v4145
      %v4460 = vpop.permute.xlu0 %4459
      %4463 = vset.pattern.permute.xlu0 0
      %4464 = vperm.xlu0 %4463, %v4146
      %v4465 = vpop.permute.xlu0 %4464
      %v4467 = vmul.f32 %v4150, %v1109
      %v4468 = vmul.f32 %v4155, %v1109
      %v4469 = vmul.f32 %v4160, %v1109
      %v4470 = vmul.f32 %v4165, %v1109
      %v4471 = vmul.f32 %v4170, %v1109
      %v4472 = vmul.f32 %v4175, %v1109
      %v4473 = vmul.f32 %v4180, %v1109
      %v4474 = vmul.f32 %v4185, %v1109
      %v4475 = vmul.f32 %v4190, %v1114
      %v4476 = vmul.f32 %v4195, %v1114
      %v4477 = vmul.f32 %v4200, %v1114
      %v4478 = vmul.f32 %v4205, %v1114
      %v4479 = vmul.f32 %v4210, %v1114
      %v4480 = vmul.f32 %v4215, %v1114
      %v4481 = vmul.f32 %v4220, %v1114
      %v4482 = vmul.f32 %v4225, %v1114
      %v4483 = vmul.f32 %v4230, %v1119
      %v4484 = vmul.f32 %v4235, %v1119
      %v4485 = vmul.f32 %v4240, %v1119
      %v4486 = vmul.f32 %v4245, %v1119
      %v4487 = vmul.f32 %v4250, %v1119
      %v4488 = vmul.f32 %v4255, %v1119
      %v4489 = vmul.f32 %v4260, %v1119
      %v4490 = vmul.f32 %v4265, %v1119
      %v4491 = vmul.f32 %v4270, %v1124
      %v4492 = vmul.f32 %v4275, %v1124
      %v4493 = vmul.f32 %v4280, %v1124
      %v4494 = vmul.f32 %v4285, %v1124
      %v4495 = vmul.f32 %v4290, %v1124
      %v4496 = vmul.f32 %v4295, %v1124
      %v4497 = vmul.f32 %v4300, %v1124
      %v4498 = vmul.f32 %v4305, %v1124
      %v4499 = vmul.f32 %v4310, %v1129
      %v4500 = vmul.f32 %v4315, %v1129
      %v4501 = vmul.f32 %v4320, %v1129
      %v4502 = vmul.f32 %v4325, %v1129
      %v4503 = vmul.f32 %v4330, %v1129
      %v4504 = vmul.f32 %v4335, %v1129
      %v4505 = vmul.f32 %v4340, %v1129
      %v4506 = vmul.f32 %v4345, %v1129
      %v4507 = vmul.f32 %v4350, %v1134
      %v4508 = vmul.f32 %v4355, %v1134
      %v4509 = vmul.f32 %v4360, %v1134
      %v4510 = vmul.f32 %v4365, %v1134
      %v4511 = vmul.f32 %v4370, %v1134
      %v4512 = vmul.f32 %v4375, %v1134
      %v4513 = vmul.f32 %v4380, %v1134
      %v4514 = vmul.f32 %v4385, %v1134
      %v4515 = vmul.f32 %v4390, %v1139
      %v4516 = vmul.f32 %v4395, %v1139
      %v4517 = vmul.f32 %v4400, %v1139
      %v4518 = vmul.f32 %v4405, %v1139
      %v4519 = vmul.f32 %v4410, %v1139
      %v4520 = vmul.f32 %v4415, %v1139
      %v4521 = vmul.f32 %v4420, %v1139
      %v4522 = vmul.f32 %v4425, %v1139
      %v4523 = vmul.f32 %v4430, %v1144
      %v4524 = vmul.f32 %v4435, %v1144
      %v4525 = vmul.f32 %v4440, %v1144
      %v4526 = vmul.f32 %v4445, %v1144
      %v4527 = vmul.f32 %v4450, %v1144
      %v4528 = vmul.f32 %v4455, %v1144
      %v4529 = vmul.f32 %v4460, %v1144
      %v4530 = vmul.f32 %v4465, %v1144
      %vm4531 = vcmask 392448
      %v4532 = vsel %vm4531, %v4467, 0.0
      %v4533 = vrot.slane %v4532, 4
      %v4534 = vadd.f32 %v4532, %v4533
      %v4535 = vrot.slane %v4534, 2
      %v4536 = vadd.f32 %v4534, %v4535
      %v4537 = vrot.slane %v4536, 1
      %v4538 = vadd.f32 %v4536, %v4537
      %v4539 = vsel %vm4531, %v4468, 0.0
      %v4540 = vrot.slane %v4539, 4
      %v4541 = vadd.f32 %v4539, %v4540
      %v4542 = vrot.slane %v4541, 2
      %v4543 = vadd.f32 %v4541, %v4542
      %v4544 = vrot.slane %v4543, 1
      %v4545 = vadd.f32 %v4543, %v4544
      %v4546 = vsel %vm4531, %v4469, 0.0
      %v4547 = vrot.slane %v4546, 4
      %v4548 = vadd.f32 %v4546, %v4547
      %v4549 = vrot.slane %v4548, 2
      %v4550 = vadd.f32 %v4548, %v4549
      %v4551 = vrot.slane %v4550, 1
      %v4552 = vadd.f32 %v4550, %v4551
      %v4553 = vsel %vm4531, %v4470, 0.0
      %v4554 = vrot.slane %v4553, 4
      %v4555 = vadd.f32 %v4553, %v4554
      %v4556 = vrot.slane %v4555, 2
      %v4557 = vadd.f32 %v4555, %v4556
      %v4558 = vrot.slane %v4557, 1
      %v4559 = vadd.f32 %v4557, %v4558
      %v4560 = vsel %vm4531, %v4471, 0.0
      %v4561 = vrot.slane %v4560, 4
      %v4562 = vadd.f32 %v4560, %v4561
      %v4563 = vrot.slane %v4562, 2
      %v4564 = vadd.f32 %v4562, %v4563
      %v4565 = vrot.slane %v4564, 1
      %v4566 = vadd.f32 %v4564, %v4565
      %v4567 = vsel %vm4531, %v4472, 0.0
      %v4568 = vrot.slane %v4567, 4
      %v4569 = vadd.f32 %v4567, %v4568
      %v4570 = vrot.slane %v4569, 2
      %v4571 = vadd.f32 %v4569, %v4570
      %v4572 = vrot.slane %v4571, 1
      %v4573 = vadd.f32 %v4571, %v4572
      %v4574 = vsel %vm4531, %v4473, 0.0
      %v4575 = vrot.slane %v4574, 4
      %v4576 = vadd.f32 %v4574, %v4575
      %v4577 = vrot.slane %v4576, 2
      %v4578 = vadd.f32 %v4576, %v4577
      %v4579 = vrot.slane %v4578, 1
      %v4580 = vadd.f32 %v4578, %v4579
      %v4581 = vsel %vm4531, %v4474, 0.0
      %v4582 = vrot.slane %v4581, 4
      %v4583 = vadd.f32 %v4581, %v4582
      %v4584 = vrot.slane %v4583, 2
      %v4585 = vadd.f32 %v4583, %v4584
      %v4586 = vrot.slane %v4585, 1
      %v4587 = vadd.f32 %v4585, %v4586
      %v4588 = vsel %vm4531, %v4475, 0.0
      %v4589 = vrot.slane %v4588, 4
      %v4590 = vadd.f32 %v4588, %v4589
      %v4591 = vrot.slane %v4590, 2
      %v4592 = vadd.f32 %v4590, %v4591
      %v4593 = vrot.slane %v4592, 1
      %v4594 = vadd.f32 %v4592, %v4593
      %v4595 = vsel %vm4531, %v4476, 0.0
      %v4596 = vrot.slane %v4595, 4
      %v4597 = vadd.f32 %v4595, %v4596
      %v4598 = vrot.slane %v4597, 2
      %v4599 = vadd.f32 %v4597, %v4598
      %v4600 = vrot.slane %v4599, 1
      %v4601 = vadd.f32 %v4599, %v4600
      %v4602 = vsel %vm4531, %v4477, 0.0
      %v4603 = vrot.slane %v4602, 4
      %v4604 = vadd.f32 %v4602, %v4603
      %v4605 = vrot.slane %v4604, 2
      %v4606 = vadd.f32 %v4604, %v4605
      %v4607 = vrot.slane %v4606, 1
      %v4608 = vadd.f32 %v4606, %v4607
      %v4609 = vsel %vm4531, %v4478, 0.0
      %v4610 = vrot.slane %v4609, 4
      %v4611 = vadd.f32 %v4609, %v4610
      %v4612 = vrot.slane %v4611, 2
      %v4613 = vadd.f32 %v4611, %v4612
      %v4614 = vrot.slane %v4613, 1
      %v4615 = vadd.f32 %v4613, %v4614
      %v4616 = vsel %vm4531, %v4479, 0.0
      %v4617 = vrot.slane %v4616, 4
      %v4618 = vadd.f32 %v4616, %v4617
      %v4619 = vrot.slane %v4618, 2
      %v4620 = vadd.f32 %v4618, %v4619
      %v4621 = vrot.slane %v4620, 1
      %v4622 = vadd.f32 %v4620, %v4621
      %v4623 = vsel %vm4531, %v4480, 0.0
      %v4624 = vrot.slane %v4623, 4
      %v4625 = vadd.f32 %v4623, %v4624
      %v4626 = vrot.slane %v4625, 2
      %v4627 = vadd.f32 %v4625, %v4626
      %v4628 = vrot.slane %v4627, 1
      %v4629 = vadd.f32 %v4627, %v4628
      %v4630 = vsel %vm4531, %v4481, 0.0
      %v4631 = vrot.slane %v4630, 4
      %v4632 = vadd.f32 %v4630, %v4631
      %v4633 = vrot.slane %v4632, 2
      %v4634 = vadd.f32 %v4632, %v4633
      %v4635 = vrot.slane %v4634, 1
      %v4636 = vadd.f32 %v4634, %v4635
      %v4637 = vsel %vm4531, %v4482, 0.0
      %v4638 = vrot.slane %v4637, 4
      %v4639 = vadd.f32 %v4637, %v4638
      %v4640 = vrot.slane %v4639, 2
      %v4641 = vadd.f32 %v4639, %v4640
      %v4642 = vrot.slane %v4641, 1
      %v4643 = vadd.f32 %v4641, %v4642
      %v4644 = vsel %vm4531, %v4483, 0.0
      %v4645 = vrot.slane %v4644, 4
      %v4646 = vadd.f32 %v4644, %v4645
      %v4647 = vrot.slane %v4646, 2
      %v4648 = vadd.f32 %v4646, %v4647
      %v4649 = vrot.slane %v4648, 1
      %v4650 = vadd.f32 %v4648, %v4649
      %v4651 = vsel %vm4531, %v4484, 0.0
      %v4652 = vrot.slane %v4651, 4
      %v4653 = vadd.f32 %v4651, %v4652
      %v4654 = vrot.slane %v4653, 2
      %v4655 = vadd.f32 %v4653, %v4654
      %v4656 = vrot.slane %v4655, 1
      %v4657 = vadd.f32 %v4655, %v4656
      %v4658 = vsel %vm4531, %v4485, 0.0
      %v4659 = vrot.slane %v4658, 4
      %v4660 = vadd.f32 %v4658, %v4659
      %v4661 = vrot.slane %v4660, 2
      %v4662 = vadd.f32 %v4660, %v4661
      %v4663 = vrot.slane %v4662, 1
      %v4664 = vadd.f32 %v4662, %v4663
      %v4665 = vsel %vm4531, %v4486, 0.0
      %v4666 = vrot.slane %v4665, 4
      %v4667 = vadd.f32 %v4665, %v4666
      %v4668 = vrot.slane %v4667, 2
      %v4669 = vadd.f32 %v4667, %v4668
      %v4670 = vrot.slane %v4669, 1
      %v4671 = vadd.f32 %v4669, %v4670
      %v4672 = vsel %vm4531, %v4487, 0.0
      %v4673 = vrot.slane %v4672, 4
      %v4674 = vadd.f32 %v4672, %v4673
      %v4675 = vrot.slane %v4674, 2
      %v4676 = vadd.f32 %v4674, %v4675
      %v4677 = vrot.slane %v4676, 1
      %v4678 = vadd.f32 %v4676, %v4677
      %v4679 = vsel %vm4531, %v4488, 0.0
      %v4680 = vrot.slane %v4679, 4
      %v4681 = vadd.f32 %v4679, %v4680
      %v4682 = vrot.slane %v4681, 2
      %v4683 = vadd.f32 %v4681, %v4682
      %v4684 = vrot.slane %v4683, 1
      %v4685 = vadd.f32 %v4683, %v4684
      %v4686 = vsel %vm4531, %v4489, 0.0
      %v4687 = vrot.slane %v4686, 4
      %v4688 = vadd.f32 %v4686, %v4687
      %v4689 = vrot.slane %v4688, 2
      %v4690 = vadd.f32 %v4688, %v4689
      %v4691 = vrot.slane %v4690, 1
      %v4692 = vadd.f32 %v4690, %v4691
      %v4693 = vsel %vm4531, %v4490, 0.0
      %v4694 = vrot.slane %v4693, 4
      %v4695 = vadd.f32 %v4693, %v4694
      %v4696 = vrot.slane %v4695, 2
      %v4697 = vadd.f32 %v4695, %v4696
      %v4698 = vrot.slane %v4697, 1
      %v4699 = vadd.f32 %v4697, %v4698
      %v4700 = vsel %vm4531, %v4491, 0.0
      %v4701 = vrot.slane %v4700, 4
      %v4702 = vadd.f32 %v4700, %v4701
      %v4703 = vrot.slane %v4702, 2
      %v4704 = vadd.f32 %v4702, %v4703
      %v4705 = vrot.slane %v4704, 1
      %v4706 = vadd.f32 %v4704, %v4705
      %v4707 = vsel %vm4531, %v4492, 0.0
      %v4708 = vrot.slane %v4707, 4
      %v4709 = vadd.f32 %v4707, %v4708
      %v4710 = vrot.slane %v4709, 2
      %v4711 = vadd.f32 %v4709, %v4710
      %v4712 = vrot.slane %v4711, 1
      %v4713 = vadd.f32 %v4711, %v4712
      %v4714 = vsel %vm4531, %v4493, 0.0
      %v4715 = vrot.slane %v4714, 4
      %v4716 = vadd.f32 %v4714, %v4715
      %v4717 = vrot.slane %v4716, 2
      %v4718 = vadd.f32 %v4716, %v4717
      %v4719 = vrot.slane %v4718, 1
      %v4720 = vadd.f32 %v4718, %v4719
      %v4721 = vsel %vm4531, %v4494, 0.0
      %v4722 = vrot.slane %v4721, 4
      %v4723 = vadd.f32 %v4721, %v4722
      %v4724 = vrot.slane %v4723, 2
      %v4725 = vadd.f32 %v4723, %v4724
      %v4726 = vrot.slane %v4725, 1
      %v4727 = vadd.f32 %v4725, %v4726
      %v4728 = vsel %vm4531, %v4495, 0.0
      %v4729 = vrot.slane %v4728, 4
      %v4730 = vadd.f32 %v4728, %v4729
      %v4731 = vrot.slane %v4730, 2
      %v4732 = vadd.f32 %v4730, %v4731
      %v4733 = vrot.slane %v4732, 1
      %v4734 = vadd.f32 %v4732, %v4733
      %v4735 = vsel %vm4531, %v4496, 0.0
      %v4736 = vrot.slane %v4735, 4
      %v4737 = vadd.f32 %v4735, %v4736
      %v4738 = vrot.slane %v4737, 2
      %v4739 = vadd.f32 %v4737, %v4738
      %v4740 = vrot.slane %v4739, 1
      %v4741 = vadd.f32 %v4739, %v4740
      %v4742 = vsel %vm4531, %v4497, 0.0
      %v4743 = vrot.slane %v4742, 4
      %v4744 = vadd.f32 %v4742, %v4743
      %v4745 = vrot.slane %v4744, 2
      %v4746 = vadd.f32 %v4744, %v4745
      %v4747 = vrot.slane %v4746, 1
      %v4748 = vadd.f32 %v4746, %v4747
      %v4749 = vsel %vm4531, %v4498, 0.0
      %v4750 = vrot.slane %v4749, 4
      %v4751 = vadd.f32 %v4749, %v4750
      %v4752 = vrot.slane %v4751, 2
      %v4753 = vadd.f32 %v4751, %v4752
      %v4754 = vrot.slane %v4753, 1
      %v4755 = vadd.f32 %v4753, %v4754
      %v4756 = vsel %vm4531, %v4499, 0.0
      %v4757 = vrot.slane %v4756, 4
      %v4758 = vadd.f32 %v4756, %v4757
      %v4759 = vrot.slane %v4758, 2
      %v4760 = vadd.f32 %v4758, %v4759
      %v4761 = vrot.slane %v4760, 1
      %v4762 = vadd.f32 %v4760, %v4761
      %v4763 = vsel %vm4531, %v4500, 0.0
      %v4764 = vrot.slane %v4763, 4
      %v4765 = vadd.f32 %v4763, %v4764
      %v4766 = vrot.slane %v4765, 2
      %v4767 = vadd.f32 %v4765, %v4766
      %v4768 = vrot.slane %v4767, 1
      %v4769 = vadd.f32 %v4767, %v4768
      %v4770 = vsel %vm4531, %v4501, 0.0
      %v4771 = vrot.slane %v4770, 4
      %v4772 = vadd.f32 %v4770, %v4771
      %v4773 = vrot.slane %v4772, 2
      %v4774 = vadd.f32 %v4772, %v4773
      %v4775 = vrot.slane %v4774, 1
      %v4776 = vadd.f32 %v4774, %v4775
      %v4777 = vsel %vm4531, %v4502, 0.0
      %v4778 = vrot.slane %v4777, 4
      %v4779 = vadd.f32 %v4777, %v4778
      %v4780 = vrot.slane %v4779, 2
      %v4781 = vadd.f32 %v4779, %v4780
      %v4782 = vrot.slane %v4781, 1
      %v4783 = vadd.f32 %v4781, %v4782
      %v4784 = vsel %vm4531, %v4503, 0.0
      %v4785 = vrot.slane %v4784, 4
      %v4786 = vadd.f32 %v4784, %v4785
      %v4787 = vrot.slane %v4786, 2
      %v4788 = vadd.f32 %v4786, %v4787
      %v4789 = vrot.slane %v4788, 1
      %v4790 = vadd.f32 %v4788, %v4789
      %v4791 = vsel %vm4531, %v4504, 0.0
      %v4792 = vrot.slane %v4791, 4
      %v4793 = vadd.f32 %v4791, %v4792
      %v4794 = vrot.slane %v4793, 2
      %v4795 = vadd.f32 %v4793, %v4794
      %v4796 = vrot.slane %v4795, 1
      %v4797 = vadd.f32 %v4795, %v4796
      %v4798 = vsel %vm4531, %v4505, 0.0
      %v4799 = vrot.slane %v4798, 4
      %v4800 = vadd.f32 %v4798, %v4799
      %v4801 = vrot.slane %v4800, 2
      %v4802 = vadd.f32 %v4800, %v4801
      %v4803 = vrot.slane %v4802, 1
      %v4804 = vadd.f32 %v4802, %v4803
      %v4805 = vsel %vm4531, %v4506, 0.0
      %v4806 = vrot.slane %v4805, 4
      %v4807 = vadd.f32 %v4805, %v4806
      %v4808 = vrot.slane %v4807, 2
      %v4809 = vadd.f32 %v4807, %v4808
      %v4810 = vrot.slane %v4809, 1
      %v4811 = vadd.f32 %v4809, %v4810
      %v4812 = vsel %vm4531, %v4507, 0.0
      %v4813 = vrot.slane %v4812, 4
      %v4814 = vadd.f32 %v4812, %v4813
      %v4815 = vrot.slane %v4814, 2
      %v4816 = vadd.f32 %v4814, %v4815
      %v4817 = vrot.slane %v4816, 1
      %v4818 = vadd.f32 %v4816, %v4817
      %v4819 = vsel %vm4531, %v4508, 0.0
      %v4820 = vrot.slane %v4819, 4
      %v4821 = vadd.f32 %v4819, %v4820
      %v4822 = vrot.slane %v4821, 2
      %v4823 = vadd.f32 %v4821, %v4822
      %v4824 = vrot.slane %v4823, 1
      %v4825 = vadd.f32 %v4823, %v4824
      %v4826 = vsel %vm4531, %v4509, 0.0
      %v4827 = vrot.slane %v4826, 4
      %v4828 = vadd.f32 %v4826, %v4827
      %v4829 = vrot.slane %v4828, 2
      %v4830 = vadd.f32 %v4828, %v4829
      %v4831 = vrot.slane %v4830, 1
      %v4832 = vadd.f32 %v4830, %v4831
      %v4833 = vsel %vm4531, %v4510, 0.0
      %v4834 = vrot.slane %v4833, 4
      %v4835 = vadd.f32 %v4833, %v4834
      %v4836 = vrot.slane %v4835, 2
      %v4837 = vadd.f32 %v4835, %v4836
      %v4838 = vrot.slane %v4837, 1
      %v4839 = vadd.f32 %v4837, %v4838
      %v4840 = vsel %vm4531, %v4511, 0.0
      %v4841 = vrot.slane %v4840, 4
      %v4842 = vadd.f32 %v4840, %v4841
      %v4843 = vrot.slane %v4842, 2
      %v4844 = vadd.f32 %v4842, %v4843
      %v4845 = vrot.slane %v4844, 1
      %v4846 = vadd.f32 %v4844, %v4845
      %v4847 = vsel %vm4531, %v4512, 0.0
      %v4848 = vrot.slane %v4847, 4
      %v4849 = vadd.f32 %v4847, %v4848
      %v4850 = vrot.slane %v4849, 2
      %v4851 = vadd.f32 %v4849, %v4850
      %v4852 = vrot.slane %v4851, 1
      %v4853 = vadd.f32 %v4851, %v4852
      %v4854 = vsel %vm4531, %v4513, 0.0
      %v4855 = vrot.slane %v4854, 4
      %v4856 = vadd.f32 %v4854, %v4855
      %v4857 = vrot.slane %v4856, 2
      %v4858 = vadd.f32 %v4856, %v4857
      %v4859 = vrot.slane %v4858, 1
      %v4860 = vadd.f32 %v4858, %v4859
      %v4861 = vsel %vm4531, %v4514, 0.0
      %v4862 = vrot.slane %v4861, 4
      %v4863 = vadd.f32 %v4861, %v4862
      %v4864 = vrot.slane %v4863, 2
      %v4865 = vadd.f32 %v4863, %v4864
      %v4866 = vrot.slane %v4865, 1
      %v4867 = vadd.f32 %v4865, %v4866
      %v4868 = vsel %vm4531, %v4515, 0.0
      %v4869 = vrot.slane %v4868, 4
      %v4870 = vadd.f32 %v4868, %v4869
      %v4871 = vrot.slane %v4870, 2
      %v4872 = vadd.f32 %v4870, %v4871
      %v4873 = vrot.slane %v4872, 1
      %v4874 = vadd.f32 %v4872, %v4873
      %v4875 = vsel %vm4531, %v4516, 0.0
      %v4876 = vrot.slane %v4875, 4
      %v4877 = vadd.f32 %v4875, %v4876
      %v4878 = vrot.slane %v4877, 2
      %v4879 = vadd.f32 %v4877, %v4878
      %v4880 = vrot.slane %v4879, 1
      %v4881 = vadd.f32 %v4879, %v4880
      %v4882 = vsel %vm4531, %v4517, 0.0
      %v4883 = vrot.slane %v4882, 4
      %v4884 = vadd.f32 %v4882, %v4883
      %v4885 = vrot.slane %v4884, 2
      %v4886 = vadd.f32 %v4884, %v4885
      %v4887 = vrot.slane %v4886, 1
      %v4888 = vadd.f32 %v4886, %v4887
      %v4889 = vsel %vm4531, %v4518, 0.0
      %v4890 = vrot.slane %v4889, 4
      %v4891 = vadd.f32 %v4889, %v4890
      %v4892 = vrot.slane %v4891, 2
      %v4893 = vadd.f32 %v4891, %v4892
      %v4894 = vrot.slane %v4893, 1
      %v4895 = vadd.f32 %v4893, %v4894
      %v4896 = vsel %vm4531, %v4519, 0.0
      %v4897 = vrot.slane %v4896, 4
      %v4898 = vadd.f32 %v4896, %v4897
      %v4899 = vrot.slane %v4898, 2
      %v4900 = vadd.f32 %v4898, %v4899
      %v4901 = vrot.slane %v4900, 1
      %v4902 = vadd.f32 %v4900, %v4901
      %v4903 = vsel %vm4531, %v4520, 0.0
      %v4904 = vrot.slane %v4903, 4
      %v4905 = vadd.f32 %v4903, %v4904
      %v4906 = vrot.slane %v4905, 2
      %v4907 = vadd.f32 %v4905, %v4906
      %v4908 = vrot.slane %v4907, 1
      %v4909 = vadd.f32 %v4907, %v4908
      %v4910 = vsel %vm4531, %v4521, 0.0
      %v4911 = vrot.slane %v4910, 4
      %v4912 = vadd.f32 %v4910, %v4911
      %v4913 = vrot.slane %v4912, 2
      %v4914 = vadd.f32 %v4912, %v4913
      %v4915 = vrot.slane %v4914, 1
      %v4916 = vadd.f32 %v4914, %v4915
      %v4917 = vsel %vm4531, %v4522, 0.0
      %v4918 = vrot.slane %v4917, 4
      %v4919 = vadd.f32 %v4917, %v4918
      %v4920 = vrot.slane %v4919, 2
      %v4921 = vadd.f32 %v4919, %v4920
      %v4922 = vrot.slane %v4921, 1
      %v4923 = vadd.f32 %v4921, %v4922
      %v4924 = vsel %vm4531, %v4523, 0.0
      %v4925 = vrot.slane %v4924, 4
      %v4926 = vadd.f32 %v4924, %v4925
      %v4927 = vrot.slane %v4926, 2
      %v4928 = vadd.f32 %v4926, %v4927
      %v4929 = vrot.slane %v4928, 1
      %v4930 = vadd.f32 %v4928, %v4929
      %v4931 = vsel %vm4531, %v4524, 0.0
      %v4932 = vrot.slane %v4931, 4
      %v4933 = vadd.f32 %v4931, %v4932
      %v4934 = vrot.slane %v4933, 2
      %v4935 = vadd.f32 %v4933, %v4934
      %v4936 = vrot.slane %v4935, 1
      %v4937 = vadd.f32 %v4935, %v4936
      %v4938 = vsel %vm4531, %v4525, 0.0
      %v4939 = vrot.slane %v4938, 4
      %v4940 = vadd.f32 %v4938, %v4939
      %v4941 = vrot.slane %v4940, 2
      %v4942 = vadd.f32 %v4940, %v4941
      %v4943 = vrot.slane %v4942, 1
      %v4944 = vadd.f32 %v4942, %v4943
      %v4945 = vsel %vm4531, %v4526, 0.0
      %v4946 = vrot.slane %v4945, 4
      %v4947 = vadd.f32 %v4945, %v4946
      %v4948 = vrot.slane %v4947, 2
      %v4949 = vadd.f32 %v4947, %v4948
      %v4950 = vrot.slane %v4949, 1
      %v4951 = vadd.f32 %v4949, %v4950
      %v4952 = vsel %vm4531, %v4527, 0.0
      %v4953 = vrot.slane %v4952, 4
      %v4954 = vadd.f32 %v4952, %v4953
      %v4955 = vrot.slane %v4954, 2
      %v4956 = vadd.f32 %v4954, %v4955
      %v4957 = vrot.slane %v4956, 1
      %v4958 = vadd.f32 %v4956, %v4957
      %v4959 = vsel %vm4531, %v4528, 0.0
      %v4960 = vrot.slane %v4959, 4
      %v4961 = vadd.f32 %v4959, %v4960
      %v4962 = vrot.slane %v4961, 2
      %v4963 = vadd.f32 %v4961, %v4962
      %v4964 = vrot.slane %v4963, 1
      %v4965 = vadd.f32 %v4963, %v4964
      %v4966 = vsel %vm4531, %v4529, 0.0
      %v4967 = vrot.slane %v4966, 4
      %v4968 = vadd.f32 %v4966, %v4967
      %v4969 = vrot.slane %v4968, 2
      %v4970 = vadd.f32 %v4968, %v4969
      %v4971 = vrot.slane %v4970, 1
      %v4972 = vadd.f32 %v4970, %v4971
      %v4973 = vsel %vm4531, %v4530, 0.0
      %v4974 = vrot.slane %v4973, 4
      %v4975 = vadd.f32 %v4973, %v4974
      %v4976 = vrot.slane %v4975, 2
      %v4977 = vadd.f32 %v4975, %v4976
      %v4978 = vrot.slane %v4977, 1
      %v4979 = vadd.f32 %v4977, %v4978
      %v4980 = vld [vmem:[%s7] sm:$0xff]
      %v4981 = vld [vmem:[%s7 + $0x8] sm:$0xff]
      %v4982 = vld [vmem:[%s8] sm:$0x1]
      %v4984 = vlaneseq
      %v4985 = vshrl.u32 %v4984, 7
      %v4986 = vsub.s32 0, %v4985
      %v4987 = vrot.slane %v4982, %v4986
      %v5053 = vsel %vm2531, %v4545, %v4538
      %v5054 = vsel %vm2533, %v4552, %v5053
      %v5055 = vsel %vm2535, %v4559, %v5054
      %v5056 = vsel %vm2537, %v4566, %v5055
      %v5057 = vsel %vm2539, %v4573, %v5056
      %v5058 = vsel %vm2541, %v4580, %v5057
      %v5059 = vsel %vm2543, %v4587, %v5058
      %v5060 = vsel %vm2531, %v4601, %v4594
      %v5061 = vsel %vm2533, %v4608, %v5060
      %v5062 = vsel %vm2535, %v4615, %v5061
      %v5063 = vsel %vm2537, %v4622, %v5062
      %v5064 = vsel %vm2539, %v4629, %v5063
      %v5065 = vsel %vm2541, %v4636, %v5064
      %v5066 = vsel %vm2543, %v4643, %v5065
      %v5067 = vsel %vm2531, %v4657, %v4650
      %v5068 = vsel %vm2533, %v4664, %v5067
      %v5069 = vsel %vm2535, %v4671, %v5068
      %v5070 = vsel %vm2537, %v4678, %v5069
      %v5071 = vsel %vm2539, %v4685, %v5070
      %v5072 = vsel %vm2541, %v4692, %v5071
      %v5073 = vsel %vm2543, %v4699, %v5072
      %v5074 = vsel %vm2531, %v4713, %v4706
      %v5075 = vsel %vm2533, %v4720, %v5074
      %v5076 = vsel %vm2535, %v4727, %v5075
      %v5077 = vsel %vm2537, %v4734, %v5076
      %v5078 = vsel %vm2539, %v4741, %v5077
      %v5079 = vsel %vm2541, %v4748, %v5078
      %v5080 = vsel %vm2543, %v4755, %v5079
      %v5081 = vsel %vm2531, %v4769, %v4762
      %v5082 = vsel %vm2533, %v4776, %v5081
      %v5083 = vsel %vm2535, %v4783, %v5082
      %v5084 = vsel %vm2537, %v4790, %v5083
      %v5085 = vsel %vm2539, %v4797, %v5084
      %v5086 = vsel %vm2541, %v4804, %v5085
      %v5087 = vsel %vm2543, %v4811, %v5086
      %v5088 = vsel %vm2531, %v4825, %v4818
      %v5089 = vsel %vm2533, %v4832, %v5088
      %v5090 = vsel %vm2535, %v4839, %v5089
      %v5091 = vsel %vm2537, %v4846, %v5090
      %v5092 = vsel %vm2539, %v4853, %v5091
      %v5093 = vsel %vm2541, %v4860, %v5092
      %v5094 = vsel %vm2543, %v4867, %v5093
      %v5095 = vsel %vm2531, %v4881, %v4874
      %v5096 = vsel %vm2533, %v4888, %v5095
      %v5097 = vsel %vm2535, %v4895, %v5096
      %v5098 = vsel %vm2537, %v4902, %v5097
      %v5099 = vsel %vm2539, %v4909, %v5098
      %v5100 = vsel %vm2541, %v4916, %v5099
      %v5101 = vsel %vm2543, %v4923, %v5100
      %v5102 = vsel %vm2531, %v4937, %v4930
      %v5103 = vsel %vm2533, %v4944, %v5102
      %v5104 = vsel %vm2535, %v4951, %v5103
      %v5105 = vsel %vm2537, %v4958, %v5104
      %v5106 = vsel %vm2539, %v4965, %v5105
      %v5107 = vsel %vm2541, %v4972, %v5106
      %v5108 = vsel %vm2543, %v4979, %v5107
      %5109 = vrot.lane.b32.xlu0 %v5059, 96
      %v5110 = vpop.permute.xlu0 %5109
      %5111 = vrot.lane.b32.xlu0 %v5066, 96
      %v5112 = vpop.permute.xlu0 %5111
      %5113 = vrot.lane.b32.xlu0 %v5073, 96
      %v5114 = vpop.permute.xlu0 %5113
      %5115 = vrot.lane.b32.xlu0 %v5080, 96
      %v5116 = vpop.permute.xlu0 %5115
      %5117 = vrot.lane.b32.xlu0 %v5087, 96
      %v5118 = vpop.permute.xlu0 %5117
      %5119 = vrot.lane.b32.xlu0 %v5094, 96
      %v5120 = vpop.permute.xlu0 %5119
      %5121 = vrot.lane.b32.xlu0 %v5101, 96
      %v5122 = vpop.permute.xlu0 %5121
      %5123 = vrot.lane.b32.xlu0 %v5108, 96
      %v5124 = vpop.permute.xlu0 %5123
      %v5125 = vsel %vm1017, %v5110, 0
      %v5127 = vsel %vm1017, %v5112, 0
      %v5129 = vsel %vm1017, %v5114, 0
      %v5131 = vsel %vm1017, %v5116, 0
      %v5133 = vsel %vm1017, %v5118, 0
      %v5135 = vsel %vm1017, %v5120, 0
      %v5137 = vsel %vm1017, %v5122, 0
      %v5139 = vsel %vm1017, %v5124, 0
      %5141 = vmatprep.subr.mxu0 0.0
      %5142 = vmatpush1.msra.mxu0 %v4980
      %5143 = vmatprep.subr.mxu0 0.0
      %5144 = vmatpush1.msra.mxu0 %v4981
      %5145 = vmatprep.subr.mxu0 0.0
      %5146 = vmatpush1.msra.mxu0 0.0
      %5147 = vmatprep.subr.mxu0 0.0
      %5148 = vmatpush1.msra.mxu0 0.0
      %5149 = vmatprep.subr.mxu0 0.0
      %5150 = vmatpush1.msra.mxu0 0.0
      %5151 = vmatprep.subr.mxu0 0.0
      %5152 = vmatpush1.msra.mxu0 0.0
      %5153 = vmatprep.subr.mxu0 0.0
      %5154 = vmatpush1.msra.mxu0 0.0
      %5155 = vmatprep.subr.mxu0 0.0
      %5156 = vmatpush1.msra.mxu0 0.0
      %5157 = vmatprep.subr.mxu0 0.0
      %5158 = vmatpush1.msra.mxu0 0.0
      %5159 = vmatprep.subr.mxu0 0.0
      %5160 = vmatpush1.msra.mxu0 0.0
      %5161 = vmatprep.subr.mxu0 0.0
      %5162 = vmatpush1.msra.mxu0 0.0
      %5163 = vmatprep.subr.mxu0 0.0
      %5164 = vmatpush1.msra.mxu0 0.0
      %5165 = vmatprep.subr.mxu0 0.0
      %5166 = vmatpush1.msra.mxu0 0.0
      %5167 = vmatprep.subr.mxu0 0.0
      %5168 = vmatpush1.msra.mxu0 0.0
      %5169 = vmatprep.subr.mxu0 0.0
      %5170 = vmatpush1.msra.mxu0 0.0
      %5171 = vmatprep.subr.mxu0 0.0
      %5172 = vmatpush1.msra.mxu0 0.0
      %5173 = vmatprep.subr.mxu0 0.0
      %5174 = vmatpush1.msra.mxu0 0.0
      %5175 = vmatprep.subr.mxu0 0.0
      %5176 = vmatpush1.msra.mxu0 0.0
      %5177 = vmatprep.subr.mxu0 0.0
      %5178 = vmatpush1.msra.mxu0 0.0
      %5179 = vmatprep.subr.mxu0 0.0
      %5180 = vmatpush1.msra.mxu0 0.0
      %5181 = vmatprep.subr.mxu0 0.0
      %5182 = vmatpush1.msra.mxu0 0.0
      %5183 = vmatprep.subr.mxu0 0.0
      %5184 = vmatpush1.msra.mxu0 0.0
      %5185 = vmatprep.subr.mxu0 0.0
      %5186 = vmatpush1.msra.mxu0 0.0
      %5187 = vmatprep.subr.mxu0 0.0
      %5188 = vmatpush1.msra.mxu0 0.0
      %5189 = vmatprep.subr.mxu0 0.0
      %5190 = vmatpush1.msra.mxu0 0.0
      %5191 = vmatprep.subr.mxu0 0.0
      %5192 = vmatpush1.msra.mxu0 0.0
      %5193 = vmatprep.subr.mxu0 0.0
      %5194 = vmatpush1.msra.mxu0 0.0
      %5195 = vmatprep.subr.mxu0 0.0
      %5196 = vmatpush1.msra.mxu0 0.0
      %5197 = vmatprep.subr.mxu0 0.0
      %5198 = vmatpush1.msra.mxu0 0.0
      %5199 = vmatprep.subr.mxu0 0.0
      %5200 = vmatpush1.msra.mxu0 0.0
      %5201 = vmatprep.subr.mxu0 0.0
      %5202 = vmatpush1.msra.mxu0 0.0
      %5203 = vmatprep.subr.mxu0 0.0
      %5204 = vmatpush1.msra.mxu0 0.0
      %5205 = vmatprep.mubr.f32.mxu0 0.0
      %5206 = vmatmul.mubr.f32.gmra.mrb[0].mxu0 %v5125
      %v5207 = vpop.f32.mrb[0].mxu0
      %v5208 = vadd.f32 %v4987, %v5207
      %v5209 = vpop.f32.mrb[0].mxu0
      %5210 = vmatprep.mubr.f32.mxu0 0.0
      %5211 = vmatmul.mubr.f32.gmra.mrb[0].mxu0 %v5127
      %v5212 = vpop.f32.mrb[0].mxu0
      %v5213 = vadd.f32 %v4987, %v5212
      %v5214 = vpop.f32.mrb[0].mxu0
      %5215 = vmatprep.mubr.f32.mxu0 0.0
      %5216 = vmatmul.mubr.f32.gmra.mrb[0].mxu0 %v5129
      %v5217 = vpop.f32.mrb[0].mxu0
      %v5218 = vadd.f32 %v4987, %v5217
      %v5219 = vpop.f32.mrb[0].mxu0
      %5220 = vmatprep.mubr.f32.mxu0 0.0
      %5221 = vmatmul.mubr.f32.gmra.mrb[0].mxu0 %v5131
      %v5222 = vpop.f32.mrb[0].mxu0
      %v5223 = vadd.f32 %v4987, %v5222
      %v5224 = vpop.f32.mrb[0].mxu0
      %5225 = vmatprep.mubr.f32.mxu0 0.0
      %5226 = vmatmul.mubr.f32.gmra.mrb[0].mxu0 %v5133
      %v5227 = vpop.f32.mrb[0].mxu0
      %v5228 = vadd.f32 %v4987, %v5227
      %v5229 = vpop.f32.mrb[0].mxu0
      %5230 = vmatprep.mubr.f32.mxu0 0.0
      %5231 = vmatmul.mubr.f32.gmra.mrb[0].mxu0 %v5135
      %v5232 = vpop.f32.mrb[0].mxu0
      %v5233 = vadd.f32 %v4987, %v5232
      %v5234 = vpop.f32.mrb[0].mxu0
      %5235 = vmatprep.mubr.f32.mxu0 0.0
      %5236 = vmatmul.mubr.f32.gmra.mrb[0].mxu0 %v5137
      %v5237 = vpop.f32.mrb[0].mxu0
      %v5238 = vadd.f32 %v4987, %v5237
      %v5239 = vpop.f32.mrb[0].mxu0
      %5240 = vmatprep.mubr.f32.mxu0 0.0
      %5241 = vmatmul.mubr.f32.gmra.mrb[0].mxu0 %v5139
      %v5242 = vpop.f32.mrb[0].mxu0
      %v5243 = vadd.f32 %v4987, %v5242
      %v5244 = vpop.f32.mrb[0].mxu0
      %5245 = vdwg.mxu0
      %v5246 = vadd.f32 %v1000, %v5208
      %v5247 = vadd.f32 %v1001, %v5213
      %v5248 = vadd.f32 %v1002, %v5218
      %v5249 = vadd.f32 %v1003, %v5223
      %v5250 = vadd.f32 %v1004, %v5228
      %v5251 = vadd.f32 %v1005, %v5233
      %v5252 = vadd.f32 %v1006, %v5238
      %v5253 = vadd.f32 %v1007, %v5243
      %v5254 = vld [vmem:[%s9] sm:$0x1]
      %v5255 = vld [vmem:[%s10] sm:$0x1]
      %v5256 = vsel %vm1017, %v5246, 0.0
      %5257 = vadd.xlane.f32.xlu0 %v5256
      %v5258 = vpop.xlane.xlu0 %5257
      %v5259 = vsel %vm1017, %v5247, 0.0
      %5260 = vadd.xlane.f32.xlu0 %v5259
      %v5261 = vpop.xlane.xlu0 %5260
      %v5262 = vsel %vm1017, %v5248, 0.0
      %5263 = vadd.xlane.f32.xlu0 %v5262
      %v5264 = vpop.xlane.xlu0 %5263
      %v5265 = vsel %vm1017, %v5249, 0.0
      %5266 = vadd.xlane.f32.xlu0 %v5265
      %v5267 = vpop.xlane.xlu0 %5266
      %v5268 = vsel %vm1017, %v5250, 0.0
      %5269 = vadd.xlane.f32.xlu0 %v5268
      %v5270 = vpop.xlane.xlu0 %5269
      %v5271 = vsel %vm1017, %v5251, 0.0
      %5272 = vadd.xlane.f32.xlu0 %v5271
      %v5273 = vpop.xlane.xlu0 %5272
      %v5274 = vsel %vm1017, %v5252, 0.0
      %5275 = vadd.xlane.f32.xlu0 %v5274
      %v5276 = vpop.xlane.xlu0 %5275
      %v5277 = vsel %vm1017, %v5253, 0.0
      %5278 = vadd.xlane.f32.xlu0 %v5277
      %v5279 = vpop.xlane.xlu0 %5278
      %v5280 = vrcp.pop 16.0
      %v5281 = vmul.f32 %v5258, %v5280
      %v5282 = vmul.f32 %v5261, %v5280
      %v5283 = vmul.f32 %v5264, %v5280
      %v5284 = vmul.f32 %v5267, %v5280
      %v5285 = vmul.f32 %v5270, %v5280
      %v5286 = vmul.f32 %v5273, %v5280
      %v5287 = vmul.f32 %v5276, %v5280
      %v5288 = vmul.f32 %v5279, %v5280
      %v5289 = vsub.f32 %v5246, %v5281
      %v5290 = vsub.f32 %v5247, %v5282
      %v5291 = vsub.f32 %v5248, %v5283
      %v5292 = vsub.f32 %v5249, %v5284
      %v5293 = vsub.f32 %v5250, %v5285
      %v5294 = vsub.f32 %v5251, %v5286
      %v5295 = vsub.f32 %v5252, %v5287
      %v5296 = vsub.f32 %v5253, %v5288
      %v5297 = vmul.f32 %v5289, %v5289
      %v5298 = vmul.f32 %v5290, %v5290
      %v5299 = vmul.f32 %v5291, %v5291
      %v5300 = vmul.f32 %v5292, %v5292
      %v5301 = vmul.f32 %v5293, %v5293
      %v5302 = vmul.f32 %v5294, %v5294
      %v5303 = vmul.f32 %v5295, %v5295
      %v5304 = vmul.f32 %v5296, %v5296
      %v5305 = vsel %vm1017, %v5297, 0.0
      %5306 = vadd.xlane.f32.xlu0 %v5305
      %v5307 = vpop.xlane.xlu0 %5306
      %v5308 = vsel %vm1017, %v5298, 0.0
      %5309 = vadd.xlane.f32.xlu0 %v5308
      %v5310 = vpop.xlane.xlu0 %5309
      %v5311 = vsel %vm1017, %v5299, 0.0
      %5312 = vadd.xlane.f32.xlu0 %v5311
      %v5313 = vpop.xlane.xlu0 %5312
      %v5314 = vsel %vm1017, %v5300, 0.0
      %5315 = vadd.xlane.f32.xlu0 %v5314
      %v5316 = vpop.xlane.xlu0 %5315
      %v5317 = vsel %vm1017, %v5301, 0.0
      %5318 = vadd.xlane.f32.xlu0 %v5317
      %v5319 = vpop.xlane.xlu0 %5318
      %v5320 = vsel %vm1017, %v5302, 0.0
      %5321 = vadd.xlane.f32.xlu0 %v5320
      %v5322 = vpop.xlane.xlu0 %5321
      %v5323 = vsel %vm1017, %v5303, 0.0
      %5324 = vadd.xlane.f32.xlu0 %v5323
      %v5325 = vpop.xlane.xlu0 %5324
      %v5326 = vsel %vm1017, %v5304, 0.0
      %5327 = vadd.xlane.f32.xlu0 %v5326
      %v5328 = vpop.xlane.xlu0 %5327
      %v5329 = vmul.f32 %v5307, %v5280
      %v5330 = vmul.f32 %v5310, %v5280
      %v5331 = vmul.f32 %v5313, %v5280
      %v5332 = vmul.f32 %v5316, %v5280
      %v5333 = vmul.f32 %v5319, %v5280
      %v5334 = vmul.f32 %v5322, %v5280
      %v5335 = vmul.f32 %v5325, %v5280
      %v5336 = vmul.f32 %v5328, %v5280
      %v5337 = vadd.f32 %v5329, 1e-05
      %v5338 = vadd.f32 %v5330, 1e-05
      %v5339 = vadd.f32 %v5331, 1e-05
      %v5340 = vadd.f32 %v5332, 1e-05
      %v5341 = vadd.f32 %v5333, 1e-05
      %v5342 = vadd.f32 %v5334, 1e-05
      %v5343 = vadd.f32 %v5335, 1e-05
      %v5344 = vadd.f32 %v5336, 1e-05
      %v5345 = vrsqrt.pop %v5337
      %v5346 = vrsqrt.pop %v5338
      %v5347 = vrsqrt.pop %v5339
      %v5348 = vrsqrt.pop %v5340
      %v5349 = vrsqrt.pop %v5341
      %v5350 = vrsqrt.pop %v5342
      %v5351 = vrsqrt.pop %v5343
      %v5352 = vrsqrt.pop %v5344
      %v5353 = vmul.f32 %v5289, %v5345
      %v5354 = vmul.f32 %v5290, %v5346
      %v5355 = vmul.f32 %v5291, %v5347
      %v5356 = vmul.f32 %v5292, %v5348
      %v5357 = vmul.f32 %v5293, %v5349
      %v5358 = vmul.f32 %v5294, %v5350
      %v5359 = vmul.f32 %v5295, %v5351
      %v5360 = vmul.f32 %v5296, %v5352
      %v5362 = vlaneseq
      %v5363 = vshrl.u32 %v5362, 7
      %v5364 = vsub.s32 0, %v5363
      %v5365 = vrot.slane %v5254, %v5364
      %v5367 = vmul.f32 %v5353, %v5365
      %v5368 = vmul.f32 %v5354, %v5365
      %v5369 = vmul.f32 %v5355, %v5365
      %v5370 = vmul.f32 %v5356, %v5365
      %v5371 = vmul.f32 %v5357, %v5365
      %v5372 = vmul.f32 %v5358, %v5365
      %v5373 = vmul.f32 %v5359, %v5365
      %v5374 = vmul.f32 %v5360, %v5365
      %v5376 = vlaneseq
      %v5377 = vshrl.u32 %v5376, 7
      %v5378 = vsub.s32 0, %v5377
      %v5379 = vrot.slane %v5255, %v5378
      %v5381 = vadd.f32 %v5367, %v5379
      %v5382 = vadd.f32 %v5368, %v5379
      %v5383 = vadd.f32 %v5369, %v5379
      %v5384 = vadd.f32 %v5370, %v5379
      %v5385 = vadd.f32 %v5371, %v5379
      %v5386 = vadd.f32 %v5372, %v5379
      %v5387 = vadd.f32 %v5373, %v5379
      %v5388 = vadd.f32 %v5374, %v5379
      %v5389 = vld [vmem:[%s13] sm:$0xff]
      %v5390 = vld [vmem:[%s13 + $0x8] sm:$0xff]
      %v5391 = vld [vmem:[%s14] sm:$0x1]
      %v5393 = vlaneseq
      %v5394 = vshrl.u32 %v5393, 7
      %v5395 = vsub.s32 0, %v5394
      %v5396 = vrot.slane %v5391, %v5395
      %v5399 = vsel %vm1017, %v5381, 0
      %v5402 = vsel %vm1017, %v5382, 0
      %v5405 = vsel %vm1017, %v5383, 0
      %v5408 = vsel %vm1017, %v5384, 0
      %v5411 = vsel %vm1017, %v5385, 0
      %v5414 = vsel %vm1017, %v5386, 0
      %v5417 = vsel %vm1017, %v5387, 0
      %v5420 = vsel %vm1017, %v5388, 0
      %5422 = vmatprep.subr.mxu0 0.0
      %5423 = vmatpush1.msra.mxu0 %v5389
      %5424 = vmatprep.subr.mxu0 0.0
      %5425 = vmatpush1.msra.mxu0 %v5390
      %5426 = vmatprep.subr.mxu0 0.0
      %5427 = vmatpush1.msra.mxu0 0.0
      %5428 = vmatprep.subr.mxu0 0.0
      %5429 = vmatpush1.msra.mxu0 0.0
      %5430 = vmatprep.subr.mxu0 0.0
      %5431 = vmatpush1.msra.mxu0 0.0
      %5432 = vmatprep.subr.mxu0 0.0
      %5433 = vmatpush1.msra.mxu0 0.0
      %5434 = vmatprep.subr.mxu0 0.0
      %5435 = vmatpush1.msra.mxu0 0.0
      %5436 = vmatprep.subr.mxu0 0.0
      %5437 = vmatpush1.msra.mxu0 0.0
      %5438 = vmatprep.subr.mxu0 0.0
      %5439 = vmatpush1.msra.mxu0 0.0
      %5440 = vmatprep.subr.mxu0 0.0
      %5441 = vmatpush1.msra.mxu0 0.0
      %5442 = vmatprep.subr.mxu0 0.0
      %5443 = vmatpush1.msra.mxu0 0.0
      %5444 = vmatprep.subr.mxu0 0.0
      %5445 = vmatpush1.msra.mxu0 0.0
      %5446 = vmatprep.subr.mxu0 0.0
      %5447 = vmatpush1.msra.mxu0 0.0
      %5448 = vmatprep.subr.mxu0 0.0
      %5449 = vmatpush1.msra.mxu0 0.0
      %5450 = vmatprep.subr.mxu0 0.0
      %5451 = vmatpush1.msra.mxu0 0.0
      %5452 = vmatprep.subr.mxu0 0.0
      %5453 = vmatpush1.msra.mxu0 0.0
      %5454 = vmatprep.subr.mxu0 0.0
      %5455 = vmatpush1.msra.mxu0 0.0
      %5456 = vmatprep.subr.mxu0 0.0
      %5457 = vmatpush1.msra.mxu0 0.0
      %5458 = vmatprep.subr.mxu0 0.0
      %5459 = vmatpush1.msra.mxu0 0.0
      %5460 = vmatprep.subr.mxu0 0.0
      %5461 = vmatpush1.msra.mxu0 0.0
      %5462 = vmatprep.subr.mxu0 0.0
      %5463 = vmatpush1.msra.mxu0 0.0
      %5464 = vmatprep.subr.mxu0 0.0
      %5465 = vmatpush1.msra.mxu0 0.0
      %5466 = vmatprep.subr.mxu0 0.0
      %5467 = vmatpush1.msra.mxu0 0.0
      %5468 = vmatprep.subr.mxu0 0.0
      %5469 = vmatpush1.msra.mxu0 0.0
      %5470 = vmatprep.subr.mxu0 0.0
      %5471 = vmatpush1.msra.mxu0 0.0
      %5472 = vmatprep.subr.mxu0 0.0
      %5473 = vmatpush1.msra.mxu0 0.0
      %5474 = vmatprep.subr.mxu0 0.0
      %5475 = vmatpush1.msra.mxu0 0.0
      %5476 = vmatprep.subr.mxu0 0.0
      %5477 = vmatpush1.msra.mxu0 0.0
      %5478 = vmatprep.subr.mxu0 0.0
      %5479 = vmatpush1.msra.mxu0 0.0
      %5480 = vmatprep.subr.mxu0 0.0
      %5481 = vmatpush1.msra.mxu0 0.0
      %5482 = vmatprep.subr.mxu0 0.0
      %5483 = vmatpush1.msra.mxu0 0.0
      %5484 = vmatprep.subr.mxu0 0.0
      %5485 = vmatpush1.msra.mxu0 0.0
      %5486 = vmatprep.mubr.f32.mxu0 0.0
      %5487 = vmatmul.mubr.f32.gmra.mrb[0].mxu0 %v5399
      %v5488 = vpop.f32.mrb[0].mxu0
      %v5489 = vadd.f32 %v5396, %v5488
      %v5490 = vpop.f32.mrb[0].mxu0
      %5491 = vmatprep.mubr.f32.mxu0 0.0
      %5492 = vmatmul.mubr.f32.gmra.mrb[0].mxu0 %v5402
      %v5493 = vpop.f32.mrb[0].mxu0
      %v5494 = vadd.f32 %v5396, %v5493
      %v5495 = vpop.f32.mrb[0].mxu0
      %5496 = vmatprep.mubr.f32.mxu0 0.0
      %5497 = vmatmul.mubr.f32.gmra.mrb[0].mxu0 %v5405
      %v5498 = vpop.f32.mrb[0].mxu0
      %v5499 = vadd.f32 %v5396, %v5498
      %v5500 = vpop.f32.mrb[0].mxu0
      %5501 = vmatprep.mubr.f32.mxu0 0.0
      %5502 = vmatmul.mubr.f32.gmra.mrb[0].mxu0 %v5408
      %v5503 = vpop.f32.mrb[0].mxu0
      %v5504 = vadd.f32 %v5396, %v5503
      %v5505 = vpop.f32.mrb[0].mxu0
      %5506 = vmatprep.mubr.f32.mxu0 0.0
      %5507 = vmatmul.mubr.f32.gmra.mrb[0].mxu0 %v5411
      %v5508 = vpop.f32.mrb[0].mxu0
      %v5509 = vadd.f32 %v5396, %v5508
      %v5510 = vpop.f32.mrb[0].mxu0
      %5511 = vmatprep.mubr.f32.mxu0 0.0
      %5512 = vmatmul.mubr.f32.gmra.mrb[0].mxu0 %v5414
      %v5513 = vpop.f32.mrb[0].mxu0
      %v5514 = vadd.f32 %v5396, %v5513
      %v5515 = vpop.f32.mrb[0].mxu0
      %5516 = vmatprep.mubr.f32.mxu0 0.0
      %5517 = vmatmul.mubr.f32.gmra.mrb[0].mxu0 %v5417
      %v5518 = vpop.f32.mrb[0].mxu0
      %v5519 = vadd.f32 %v5396, %v5518
      %v5520 = vpop.f32.mrb[0].mxu0
      %5521 = vmatprep.mubr.f32.mxu0 0.0
      %5522 = vmatmul.mubr.f32.gmra.mrb[0].mxu0 %v5420
      %v5523 = vpop.f32.mrb[0].mxu0
      %v5524 = vadd.f32 %v5396, %v5523
      %v5525 = vpop.f32.mrb[0].mxu0
      %5526 = vdwg.mxu0
      %v5527 = vmax.f32 %v5489, 0.0
      %v5528 = vmax.f32 %v5494, 0.0
      %v5529 = vmax.f32 %v5499, 0.0
      %v5530 = vmax.f32 %v5504, 0.0
      %v5531 = vmax.f32 %v5509, 0.0
      %v5532 = vmax.f32 %v5514, 0.0
      %v5533 = vmax.f32 %v5519, 0.0
      %v5534 = vmax.f32 %v5524, 0.0
      %v5535 = vld [vmem:[%s15] sm:$0xff]
      %v5536 = vld [vmem:[%s15 + $0x8] sm:$0xff]
      %v5537 = vld [vmem:[%s15 + $0x10] sm:$0xff]
      %v5538 = vld [vmem:[%s15 + $0x18] sm:$0xff]
      %v5539 = vld [vmem:[%s16] sm:$0x1]
      %v5541 = vlaneseq
      %v5542 = vshrl.u32 %v5541, 7
      %v5543 = vsub.s32 0, %v5542
      %v5544 = vrot.slane %v5539, %v5543
      %vm5546 = vcmask 261120
      %v5548 = vsel %vm5546, %v5527, 0
      %v5551 = vsel %vm5546, %v5528, 0
      %v5554 = vsel %vm5546, %v5529, 0
      %v5557 = vsel %vm5546, %v5530, 0
      %v5560 = vsel %vm5546, %v5531, 0
      %v5563 = vsel %vm5546, %v5532, 0
      %v5566 = vsel %vm5546, %v5533, 0
      %v5569 = vsel %vm5546, %v5534, 0
      %5571 = vmatprep.subr.mxu0 0.0
      %5572 = vmatpush1.msra.mxu0 %v5535
      %5573 = vmatprep.subr.mxu0 0.0
      %5574 = vmatpush1.msra.mxu0 %v5536
      %5575 = vmatprep.subr.mxu0 0.0
      %5576 = vmatpush1.msra.mxu0 %v5537
      %5577 = vmatprep.subr.mxu0 0.0
      %5578 = vmatpush1.msra.mxu0 %v5538
      %5579 = vmatprep.subr.mxu0 0.0
      %5580 = vmatpush1.msra.mxu0 0.0
      %5581 = vmatprep.subr.mxu0 0.0
      %5582 = vmatpush1.msra.mxu0 0.0
      %5583 = vmatprep.subr.mxu0 0.0
      %5584 = vmatpush1.msra.mxu0 0.0
      %5585 = vmatprep.subr.mxu0 0.0
      %5586 = vmatpush1.msra.mxu0 0.0
      %5587 = vmatprep.subr.mxu0 0.0
      %5588 = vmatpush1.msra.mxu0 0.0
      %5589 = vmatprep.subr.mxu0 0.0
      %5590 = vmatpush1.msra.mxu0 0.0
      %5591 = vmatprep.subr.mxu0 0.0
      %5592 = vmatpush1.msra.mxu0 0.0
      %5593 = vmatprep.subr.mxu0 0.0
      %5594 = vmatpush1.msra.mxu0 0.0
      %5595 = vmatprep.subr.mxu0 0.0
      %5596 = vmatpush1.msra.mxu0 0.0
      %5597 = vmatprep.subr.mxu0 0.0
      %5598 = vmatpush1.msra.mxu0 0.0
      %5599 = vmatprep.subr.mxu0 0.0
      %5600 = vmatpush1.msra.mxu0 0.0
      %5601 = vmatprep.subr.mxu0 0.0
      %5602 = vmatpush1.msra.mxu0 0.0
      %5603 = vmatprep.subr.mxu0 0.0
      %5604 = vmatpush1.msra.mxu0 0.0
      %5605 = vmatprep.subr.mxu0 0.0
      %5606 = vmatpush1.msra.mxu0 0.0
      %5607 = vmatprep.subr.mxu0 0.0
      %5608 = vmatpush1.msra.mxu0 0.0
      %5609 = vmatprep.subr.mxu0 0.0
      %5610 = vmatpush1.msra.mxu0 0.0
      %5611 = vmatprep.subr.mxu0 0.0
      %5612 = vmatpush1.msra.mxu0 0.0
      %5613 = vmatprep.subr.mxu0 0.0
      %5614 = vmatpush1.msra.mxu0 0.0
      %5615 = vmatprep.subr.mxu0 0.0
      %5616 = vmatpush1.msra.mxu0 0.0
      %5617 = vmatprep.subr.mxu0 0.0
      %5618 = vmatpush1.msra.mxu0 0.0
      %5619 = vmatprep.subr.mxu0 0.0
      %5620 = vmatpush1.msra.mxu0 0.0
      %5621 = vmatprep.subr.mxu0 0.0
      %5622 = vmatpush1.msra.mxu0 0.0
      %5623 = vmatprep.subr.mxu0 0.0
      %5624 = vmatpush1.msra.mxu0 0.0
      %5625 = vmatprep.subr.mxu0 0.0
      %5626 = vmatpush1.msra.mxu0 0.0
      %5627 = vmatprep.subr.mxu0 0.0
      %5628 = vmatpush1.msra.mxu0 0.0
      %5629 = vmatprep.subr.mxu0 0.0
      %5630 = vmatpush1.msra.mxu0 0.0
      %5631 = vmatprep.subr.mxu0 0.0
      %5632 = vmatpush1.msra.mxu0 0.0
      %5633 = vmatprep.subr.mxu0 0.0
      %5634 = vmatpush1.msra.mxu0 0.0
      %5635 = vmatprep.mubr.f32.mxu0 0.0
      %5636 = vmatmul.mubr.f32.gmra.mrb[0].mxu0 %v5548
      %v5637 = vpop.f32.mrb[0].mxu0
      %v5638 = vadd.f32 %v5544, %v5637
      %v5639 = vpop.f32.mrb[0].mxu0
      %5640 = vmatprep.mubr.f32.mxu0 0.0
      %5641 = vmatmul.mubr.f32.gmra.mrb[0].mxu0 %v5551
      %v5642 = vpop.f32.mrb[0].mxu0
      %v5643 = vadd.f32 %v5544, %v5642
      %v5644 = vpop.f32.mrb[0].mxu0
      %5645 = vmatprep.mubr.f32.mxu0 0.0
      %5646 = vmatmul.mubr.f32.gmra.mrb[0].mxu0 %v5554
      %v5647 = vpop.f32.mrb[0].mxu0
      %v5648 = vadd.f32 %v5544, %v5647
      %v5649 = vpop.f32.mrb[0].mxu0
      %5650 = vmatprep.mubr.f32.mxu0 0.0
      %5651 = vmatmul.mubr.f32.gmra.mrb[0].mxu0 %v5557
      %v5652 = vpop.f32.mrb[0].mxu0
      %v5653 = vadd.f32 %v5544, %v5652
      %v5654 = vpop.f32.mrb[0].mxu0
      %5655 = vmatprep.mubr.f32.mxu0 0.0
      %5656 = vmatmul.mubr.f32.gmra.mrb[0].mxu0 %v5560
      %v5657 = vpop.f32.mrb[0].mxu0
      %v5658 = vadd.f32 %v5544, %v5657
      %v5659 = vpop.f32.mrb[0].mxu0
      %5660 = vmatprep.mubr.f32.mxu0 0.0
      %5661 = vmatmul.mubr.f32.gmra.mrb[0].mxu0 %v5563
      %v5662 = vpop.f32.mrb[0].mxu0
      %v5663 = vadd.f32 %v5544, %v5662
      %v5664 = vpop.f32.mrb[0].mxu0
      %5665 = vmatprep.mubr.f32.mxu0 0.0
      %5666 = vmatmul.mubr.f32.gmra.mrb[0].mxu0 %v5566
      %v5667 = vpop.f32.mrb[0].mxu0
      %v5668 = vadd.f32 %v5544, %v5667
      %v5669 = vpop.f32.mrb[0].mxu0
      %5670 = vmatprep.mubr.f32.mxu0 0.0
      %5671 = vmatmul.mubr.f32.gmra.mrb[0].mxu0 %v5569
      %v5672 = vpop.f32.mrb[0].mxu0
      %v5673 = vadd.f32 %v5544, %v5672
      %v5674 = vpop.f32.mrb[0].mxu0
      %5675 = vdwg.mxu0
      %v5676 = vadd.f32 %v5381, %v5638
      %v5677 = vadd.f32 %v5382, %v5643
      %v5678 = vadd.f32 %v5383, %v5648
      %v5679 = vadd.f32 %v5384, %v5653
      %v5680 = vadd.f32 %v5385, %v5658
      %v5681 = vadd.f32 %v5386, %v5663
      %v5682 = vadd.f32 %v5387, %v5668
      %v5683 = vadd.f32 %v5388, %v5673
      %v5684 = vld [vmem:[%s11] sm:$0x1]
      %v5685 = vld [vmem:[%s12] sm:$0x1]
      %v5686 = vsel %vm1017, %v5676, 0.0
      %5687 = vadd.xlane.f32.xlu0 %v5686
      %v5688 = vpop.xlane.xlu0 %5687
      %v5689 = vsel %vm1017, %v5677, 0.0
      %5690 = vadd.xlane.f32.xlu0 %v5689
      %v5691 = vpop.xlane.xlu0 %5690
      %v5692 = vsel %vm1017, %v5678, 0.0
      %5693 = vadd.xlane.f32.xlu0 %v5692
      %v5694 = vpop.xlane.xlu0 %5693
      %v5695 = vsel %vm1017, %v5679, 0.0
      %5696 = vadd.xlane.f32.xlu0 %v5695
      %v5697 = vpop.xlane.xlu0 %5696
      %v5698 = vsel %vm1017, %v5680, 0.0
      %5699 = vadd.xlane.f32.xlu0 %v5698
      %v5700 = vpop.xlane.xlu0 %5699
      %v5701 = vsel %vm1017, %v5681, 0.0
      %5702 = vadd.xlane.f32.xlu0 %v5701
      %v5703 = vpop.xlane.xlu0 %5702
      %v5704 = vsel %vm1017, %v5682, 0.0
      %5705 = vadd.xlane.f32.xlu0 %v5704
      %v5706 = vpop.xlane.xlu0 %5705
      %v5707 = vsel %vm1017, %v5683, 0.0
      %5708 = vadd.xlane.f32.xlu0 %v5707
      %v5709 = vpop.xlane.xlu0 %5708
      %v5710 = vmul.f32 %v5688, %v5280
      %v5711 = vmul.f32 %v5691, %v5280
      %v5712 = vmul.f32 %v5694, %v5280
      %v5713 = vmul.f32 %v5697, %v5280
      %v5714 = vmul.f32 %v5700, %v5280
      %v5715 = vmul.f32 %v5703, %v5280
      %v5716 = vmul.f32 %v5706, %v5280
      %v5717 = vmul.f32 %v5709, %v5280
      %v5718 = vsub.f32 %v5676, %v5710
      %v5719 = vsub.f32 %v5677, %v5711
      %v5720 = vsub.f32 %v5678, %v5712
      %v5721 = vsub.f32 %v5679, %v5713
      %v5722 = vsub.f32 %v5680, %v5714
      %v5723 = vsub.f32 %v5681, %v5715
      %v5724 = vsub.f32 %v5682, %v5716
      %v5725 = vsub.f32 %v5683, %v5717
      %v5726 = vmul.f32 %v5718, %v5718
      %v5727 = vmul.f32 %v5719, %v5719
      %v5728 = vmul.f32 %v5720, %v5720
      %v5729 = vmul.f32 %v5721, %v5721
      %v5730 = vmul.f32 %v5722, %v5722
      %v5731 = vmul.f32 %v5723, %v5723
      %v5732 = vmul.f32 %v5724, %v5724
      %v5733 = vmul.f32 %v5725, %v5725
      %v5734 = vsel %vm1017, %v5726, 0.0
      %5735 = vadd.xlane.f32.xlu0 %v5734
      %v5736 = vpop.xlane.xlu0 %5735
      %v5737 = vsel %vm1017, %v5727, 0.0
      %5738 = vadd.xlane.f32.xlu0 %v5737
      %v5739 = vpop.xlane.xlu0 %5738
      %v5740 = vsel %vm1017, %v5728, 0.0
      %5741 = vadd.xlane.f32.xlu0 %v5740
      %v5742 = vpop.xlane.xlu0 %5741
      %v5743 = vsel %vm1017, %v5729, 0.0
      %5744 = vadd.xlane.f32.xlu0 %v5743
      %v5745 = vpop.xlane.xlu0 %5744
      %v5746 = vsel %vm1017, %v5730, 0.0
      %5747 = vadd.xlane.f32.xlu0 %v5746
      %v5748 = vpop.xlane.xlu0 %5747
      %v5749 = vsel %vm1017, %v5731, 0.0
      %5750 = vadd.xlane.f32.xlu0 %v5749
      %v5751 = vpop.xlane.xlu0 %5750
      %v5752 = vsel %vm1017, %v5732, 0.0
      %5753 = vadd.xlane.f32.xlu0 %v5752
      %v5754 = vpop.xlane.xlu0 %5753
      %v5755 = vsel %vm1017, %v5733, 0.0
      %5756 = vadd.xlane.f32.xlu0 %v5755
      %v5757 = vpop.xlane.xlu0 %5756
      %v5758 = vmul.f32 %v5736, %v5280
      %v5759 = vmul.f32 %v5739, %v5280
      %v5760 = vmul.f32 %v5742, %v5280
      %v5761 = vmul.f32 %v5745, %v5280
      %v5762 = vmul.f32 %v5748, %v5280
      %v5763 = vmul.f32 %v5751, %v5280
      %v5764 = vmul.f32 %v5754, %v5280
      %v5765 = vmul.f32 %v5757, %v5280
      %v5766 = vadd.f32 %v5758, 1e-05
      %v5767 = vadd.f32 %v5759, 1e-05
      %v5768 = vadd.f32 %v5760, 1e-05
      %v5769 = vadd.f32 %v5761, 1e-05
      %v5770 = vadd.f32 %v5762, 1e-05
      %v5771 = vadd.f32 %v5763, 1e-05
      %v5772 = vadd.f32 %v5764, 1e-05
      %v5773 = vadd.f32 %v5765, 1e-05
      %v5774 = vrsqrt.pop %v5766
      %v5775 = vrsqrt.pop %v5767
      %v5776 = vrsqrt.pop %v5768
      %v5777 = vrsqrt.pop %v5769
      %v5778 = vrsqrt.pop %v5770
      %v5779 = vrsqrt.pop %v5771
      %v5780 = vrsqrt.pop %v5772
      %v5781 = vrsqrt.pop %v5773
      %v5782 = vmul.f32 %v5718, %v5774
      %v5783 = vmul.f32 %v5719, %v5775
      %v5784 = vmul.f32 %v5720, %v5776
      %v5785 = vmul.f32 %v5721, %v5777
      %v5786 = vmul.f32 %v5722, %v5778
      %v5787 = vmul.f32 %v5723, %v5779
      %v5788 = vmul.f32 %v5724, %v5780
      %v5789 = vmul.f32 %v5725, %v5781
      %v5791 = vlaneseq
      %v5792 = vshrl.u32 %v5791, 7
      %v5793 = vsub.s32 0, %v5792
      %v5794 = vrot.slane %v5684, %v5793
      %v5796 = vmul.f32 %v5782, %v5794
      %v5797 = vmul.f32 %v5783, %v5794
      %v5798 = vmul.f32 %v5784, %v5794
      %v5799 = vmul.f32 %v5785, %v5794
      %v5800 = vmul.f32 %v5786, %v5794
      %v5801 = vmul.f32 %v5787, %v5794
      %v5802 = vmul.f32 %v5788, %v5794
      %v5803 = vmul.f32 %v5789, %v5794
      %v5805 = vlaneseq
      %v5806 = vshrl.u32 %v5805, 7
      %v5807 = vsub.s32 0, %v5806
      %v5808 = vrot.slane %v5685, %v5807
      %v5810 = vadd.f32 %v5796, %v5808
      %v5811 = vadd.f32 %v5797, %v5808
      %v5812 = vadd.f32 %v5798, %v5808
      %v5813 = vadd.f32 %v5799, %v5808
      %v5814 = vadd.f32 %v5800, %v5808
      %v5815 = vadd.f32 %v5801, %v5808
      %v5816 = vadd.f32 %v5802, %v5808
      %v5817 = vadd.f32 %v5803, %v5808
      %v5818 = vsel %vm1017, %v5810, 0.0
      %v5819 = vrot.slane %v5818, 4
      %v5820 = vadd.f32 %v5818, %v5819
      %v5821 = vrot.slane %v5820, 2
      %v5822 = vadd.f32 %v5820, %v5821
      %v5823 = vrot.slane %v5822, 1
      %v5824 = vadd.f32 %v5822, %v5823
      %v5825 = vsel %vm1017, %v5811, 0.0
      %v5826 = vrot.slane %v5825, 4
      %v5827 = vadd.f32 %v5825, %v5826
      %v5828 = vrot.slane %v5827, 2
      %v5829 = vadd.f32 %v5827, %v5828
      %v5830 = vrot.slane %v5829, 1
      %v5831 = vadd.f32 %v5829, %v5830
      %v5832 = vsel %vm1017, %v5812, 0.0
      %v5833 = vrot.slane %v5832, 4
      %v5834 = vadd.f32 %v5832, %v5833
      %v5835 = vrot.slane %v5834, 2
      %v5836 = vadd.f32 %v5834, %v5835
      %v5837 = vrot.slane %v5836, 1
      %v5838 = vadd.f32 %v5836, %v5837
      %v5839 = vsel %vm1017, %v5813, 0.0
      %v5840 = vrot.slane %v5839, 4
      %v5841 = vadd.f32 %v5839, %v5840
      %v5842 = vrot.slane %v5841, 2
      %v5843 = vadd.f32 %v5841, %v5842
      %v5844 = vrot.slane %v5843, 1
      %v5845 = vadd.f32 %v5843, %v5844
      %v5846 = vsel %vm1017, %v5814, 0.0
      %v5847 = vrot.slane %v5846, 4
      %v5848 = vadd.f32 %v5846, %v5847
      %v5849 = vrot.slane %v5848, 2
      %v5850 = vadd.f32 %v5848, %v5849
      %v5851 = vrot.slane %v5850, 1
      %v5852 = vadd.f32 %v5850, %v5851
      %v5853 = vsel %vm1017, %v5815, 0.0
      %v5854 = vrot.slane %v5853, 4
      %v5855 = vadd.f32 %v5853, %v5854
      %v5856 = vrot.slane %v5855, 2
      %v5857 = vadd.f32 %v5855, %v5856
      %v5858 = vrot.slane %v5857, 1
      %v5859 = vadd.f32 %v5857, %v5858
      %v5860 = vsel %vm1017, %v5816, 0.0
      %v5861 = vrot.slane %v5860, 4
      %v5862 = vadd.f32 %v5860, %v5861
      %v5863 = vrot.slane %v5862, 2
      %v5864 = vadd.f32 %v5862, %v5863
      %v5865 = vrot.slane %v5864, 1
      %v5866 = vadd.f32 %v5864, %v5865
      %v5867 = vsel %vm1017, %v5817, 0.0
      %v5868 = vrot.slane %v5867, 4
      %v5869 = vadd.f32 %v5867, %v5868
      %v5870 = vrot.slane %v5869, 2
      %v5871 = vadd.f32 %v5869, %v5870
      %v5872 = vrot.slane %v5871, 1
      %v5873 = vadd.f32 %v5871, %v5872
      %v5874 = vmul.f32 %v5824, 0.125
      %v5875 = vmul.f32 %v5831, 0.125
      %v5876 = vmul.f32 %v5838, 0.125
      %v5877 = vmul.f32 %v5845, 0.125
      %v5878 = vmul.f32 %v5852, 0.125
      %v5879 = vmul.f32 %v5859, 0.125
      %v5880 = vmul.f32 %v5866, 0.125
      %v5881 = vmul.f32 %v5873, 0.125
      %v5882 = vld [vmem:[%s17] sm:$0xff]
      %v5883 = vld [vmem:[%s17 + $0x8] sm:$0xff]
      %v5884 = vld [vmem:[%s18] sm:$0x1]
      %v5886 = vlaneseq
      %v5887 = vshrl.u32 %v5886, 7
      %v5888 = vsub.s32 0, %v5887
      %v5889 = vrot.slane %v5884, %v5888
      %v5899 = vsel %vm2531, %v5875, %v5874
      %v5900 = vsel %vm2533, %v5876, %v5899
      %v5901 = vsel %vm2535, %v5877, %v5900
      %v5902 = vsel %vm2537, %v5878, %v5901
      %v5903 = vsel %vm2539, %v5879, %v5902
      %v5904 = vsel %vm2541, %v5880, %v5903
      %v5905 = vsel %vm2543, %v5881, %v5904
      %v5906 = vsel %vm1017, %v5905, 0
      %5908 = vmatprep.subr.mxu0 0.0
      %5909 = vmatpush1.msra.mxu0 %v5882
      %5910 = vmatprep.subr.mxu0 0.0
      %5911 = vmatpush1.msra.mxu0 %v5883
      %5912 = vmatprep.subr.mxu0 0.0
      %5913 = vmatpush1.msra.mxu0 0.0
      %5914 = vmatprep.subr.mxu0 0.0
      %5915 = vmatpush1.msra.mxu0 0.0
      %5916 = vmatprep.subr.mxu0 0.0
      %5917 = vmatpush1.msra.mxu0 0.0
      %5918 = vmatprep.subr.mxu0 0.0
      %5919 = vmatpush1.msra.mxu0 0.0
      %5920 = vmatprep.subr.mxu0 0.0
      %5921 = vmatpush1.msra.mxu0 0.0
      %5922 = vmatprep.subr.mxu0 0.0
      %5923 = vmatpush1.msra.mxu0 0.0
      %5924 = vmatprep.subr.mxu0 0.0
      %5925 = vmatpush1.msra.mxu0 0.0
      %5926 = vmatprep.subr.mxu0 0.0
      %5927 = vmatpush1.msra.mxu0 0.0
      %5928 = vmatprep.subr.mxu0 0.0
      %5929 = vmatpush1.msra.mxu0 0.0
      %5930 = vmatprep.subr.mxu0 0.0
      %5931 = vmatpush1.msra.mxu0 0.0
      %5932 = vmatprep.subr.mxu0 0.0
      %5933 = vmatpush1.msra.mxu0 0.0
      %5934 = vmatprep.subr.mxu0 0.0
      %5935 = vmatpush1.msra.mxu0 0.0
      %5936 = vmatprep.subr.mxu0 0.0
      %5937 = vmatpush1.msra.mxu0 0.0
      %5938 = vmatprep.subr.mxu0 0.0
      %5939 = vmatpush1.msra.mxu0 0.0
      %5940 = vmatprep.subr.mxu0 0.0
      %5941 = vmatpush1.msra.mxu0 0.0
      %5942 = vmatprep.subr.mxu0 0.0
      %5943 = vmatpush1.msra.mxu0 0.0
      %5944 = vmatprep.subr.mxu0 0.0
      %5945 = vmatpush1.msra.mxu0 0.0
      %5946 = vmatprep.subr.mxu0 0.0
      %5947 = vmatpush1.msra.mxu0 0.0
      %5948 = vmatprep.subr.mxu0 0.0
      %5949 = vmatpush1.msra.mxu0 0.0
      %5950 = vmatprep.subr.mxu0 0.0
      %5951 = vmatpush1.msra.mxu0 0.0
      %5952 = vmatprep.subr.mxu0 0.0
      %5953 = vmatpush1.msra.mxu0 0.0
      %5954 = vmatprep.subr.mxu0 0.0
      %5955 = vmatpush1.msra.mxu0 0.0
      %5956 = vmatprep.subr.mxu0 0.0
      %5957 = vmatpush1.msra.mxu0 0.0
      %5958 = vmatprep.subr.mxu0 0.0
      %5959 = vmatpush1.msra.mxu0 0.0
      %5960 = vmatprep.subr.mxu0 0.0
      %5961 = vmatpush1.msra.mxu0 0.0
      %5962 = vmatprep.subr.mxu0 0.0
      %5963 = vmatpush1.msra.mxu0 0.0
      %5964 = vmatprep.subr.mxu0 0.0
      %5965 = vmatpush1.msra.mxu0 0.0
      %5966 = vmatprep.subr.mxu0 0.0
      %5967 = vmatpush1.msra.mxu0 0.0
      %5968 = vmatprep.subr.mxu0 0.0
      %5969 = vmatpush1.msra.mxu0 0.0
      %5970 = vmatprep.subr.mxu0 0.0
      %5971 = vmatpush1.msra.mxu0 0.0
      %5972 = vmatprep.mubr.f32.mxu0 0.0
      %5973 = vmatmul.mubr.f32.gmra.mrb[0].mxu0 %v5906
      %v5974 = vpop.f32.mrb[0].mxu0
      %v5975 = vadd.f32 %v5889, %v5974
      %v5976 = vpop.f32.mrb[0].mxu0
      %5977 = vdwg.mxu0
      %vm5978 = vcmask 15360
      %5979 = vst.msk [vmem:[%s619] sm:$0xff] %vm5978, %v5975
      %p5980 = scmp.lt.s32.totalorder %s30, 1
      %s5981 = scalar_select %p5980, %s30, 1
      %s5982 = smul.addr %s5981, 8
      %s5983 = scalar_lea.vmem %s19, %s5982
      // Predicated region
      $region97: #{tpu_custom_call.1} parent=95 // pred_check
        %p5984 = pneg %p457
      $region98: #{tpu_custom_call.1} parent=95 // pred_check_branch
        %5986 = sbr.rel (%p5984) target = $region100
      $region99: #{tpu_custom_call.1} parent=95 // pred_region
        _
      $region100: #{tpu_custom_call.1} parent=95 // pred_fallthru
        _
    $region96: #{tpu_custom_call.1} parent=5 // pred_fallthru
      _
    %p5987 = scmp.le.s32.totalorder 2, %s25
    // Predicated region
    $region101: #{tpu_custom_call.1} parent=5 // pred_check
      %p5988 = pneg %p5987
    $region102: #{tpu_custom_call.1} parent=5 // pred_check_branch
      %5990 = sbr.rel (%p5988) target = $region104
    $region103: #{tpu_custom_call.1} parent=5 // pred_region
      %s5991 = ssub.s32 %s25, 2
      // Predicated region
      $region105: #{tpu_custom_call.1} parent=103 // pred_check
        %p5992 = pneg %p463
      $region106: #{tpu_custom_call.1} parent=103 // pred_check_branch
        %5994 = sbr.rel (%p5992) target = $region108
      $region107: #{tpu_custom_call.1} parent=103 // pred_region
        %p5995 = scmp.lt.s32.totalorder %s31, 1
        %s5996 = scalar_select %p5995, %s31, 1
        %s5997 = smul.addr %s5996, 8
        %s5998 = scalar_lea.vmem %s19, %s5997
      $region108: #{tpu_custom_call.1} parent=103 // pred_fallthru
        _
    $region104: #{tpu_custom_call.1} parent=5 // pred_fallthru
      _
  $region6: #{tpu_custom_call.1} parent=0 // loop_footer
    %s29 = sadd.s32 1, %s25
  $region7: #{tpu_custom_call.1} parent=0 // loop_footer_branch
    %24 = sbr.rel target = $region3
  $region8: #{tpu_custom_call.1} parent=0 // loop_exit
    _

</llo_original>
